<compile_context>
chip_gen: v6e
topology: v6e:2x2x1
jax: 0.10.0
libtpu: 0.0.40
codegen_flags: <defaults>
</compile_context>

<pallas_src>
import functools

import jax
import jax.numpy as jnp
from jax.experimental import pallas as pl
from jax.experimental.pallas import tpu as pltpu

# MXU operand dtype for the large, non-recurrent matmuls (f32 accumulation).
MATMUL_DTYPE = jnp.bfloat16


# ----------------------------------------------------------------------------
# VMEM-budget helpers (per-generation chunk sizing).
# ----------------------------------------------------------------------------
def _vmem_capacity_bytes():
    try:
        return int(pltpu.get_tpu_info().vmem_capacity_bytes)
    except Exception:
        return 64 * 1024 * 1024          # conservative (v7x per-core VMEM)


def _vmem_limit_bytes():
    # Leave headroom below physical capacity (64 MiB v7x, 128 MiB v5e/v6e).
    return int(min(int(_vmem_capacity_bytes() * 0.7), 100 * 1024 * 1024))


def _pick_chunk(T, B, nfs, dim, fs):
    """Largest chunk of timesteps whose pipelined blocks + scratch fit VMEM."""
    # Per timestep (B rows): double-buffered prev/cond/out blocks + gi/hs scratch.
    per_t = B * (2 * (nfs * 2 + dim * 4 + fs * dim * 4) + (3 * dim + dim) * 4)
    budget = _vmem_limit_bytes() // 2
    max_rows = max(8, budget // max(per_t, 1))
    if T * B <= max_rows:
        return T
    for ct in range(min(T, max_rows // B), 0, -1):
        if T % ct == 0 and (ct * B) % 8 == 0:   # keep blocks (8,128)-legal
            return ct
    return T


# ----------------------------------------------------------------------------
# Frame-level tier kernel: input_expand (1x1 conv == matmul) + GRU + learned
# upsampling (ConvTranspose1d, kernel=stride=frame_size == fused matmul).
# Grid: chunks of T (serial recurrence -> "arbitrary"); h carried in scratch.
# All activations are 2-D with batch folded into rows (rows ordered (t, b)).
# ----------------------------------------------------------------------------
def frame_tier_kernel(has_cond, B, *refs):
    if has_cond:
        (prev_ref, cond_ref, h0_ref, wexp_ref, bexp_ref, wih_ref, bih_ref,
         whh_ref, bhhn_ref, wup_ref, bup_ref,
         out_ref, hlast_ref, h_carry, gi_scr, hs_scr) = refs
    else:
        (prev_ref, h0_ref, wgi_ref, bgi_ref,
         whh_ref, bhhn_ref, wup_ref, bup_ref,
         out_ref, hlast_ref, h_carry, gi_scr, hs_scr) = refs

    rows = prev_ref.shape[0]                    # ct * B
    ct = rows // B
    dim = h0_ref.shape[1]

    # First chunk: initialize the carried hidden state from the learned h0.
    @pl.when(pl.program_id(0) == 0)
    def _():
        h_carry[...] = h0_ref[...]

    # ---- Non-recurrent work for the whole chunk: big-M matmuls on the MXU ----
    prev = prev_ref[...]                        # (rows, nfs) bf16
    if has_cond:
        x_all = (jnp.dot(prev, wexp_ref[...],
                         preferred_element_type=jnp.float32)
                 + bexp_ref[...] + cond_ref[...])
        gi_all = (jnp.dot(x_all.astype(MATMUL_DTYPE), wih_ref[...],
                          preferred_element_type=jnp.float32) + bih_ref[...])
    else:
        # Top tier: W_exp @ W_ih folded offline; no conditioning DMA at all.
        gi_all = (jnp.dot(prev, wgi_ref[...],
                          preferred_element_type=jnp.float32) + bgi_ref[...])
    gi_scr[...] = gi_all                        # (rows, 3*dim) dense, no reshape

    whh = whh_ref[...]                                   # (dim, 3*dim) f32
    bhhn = jnp.broadcast_to(bhhn_ref[...], (B, dim))     # hoisted broadcast

    # ---- Serial GRU recurrence: only h @ W_hh remains inside the chain -------
    def step(t, h):
        gi = gi_scr[pl.ds(t * B, B), :]                  # (B, 3*dim)
        ghh = jnp.dot(h, whh, preferred_element_type=jnp.float32)
        r = jax.nn.sigmoid(gi[:, :dim] + ghh[:, :dim])
        z = jax.nn.sigmoid(gi[:, dim:2 * dim] + ghh[:, dim:2 * dim])
        n = jnp.tanh(gi[:, 2 * dim:] + r * (ghh[:, 2 * dim:] + bhhn))
        h_new = (1.0 - z) * n + z * h
        hs_scr[pl.ds(t * B, B), :] = h_new
        return h_new

    h_final = jax.lax.fori_loop(0, ct, step, h_carry[...],
                                unroll=min(8, ct))
    h_carry[...] = h_final
    hlast_ref[...] = h_final    # same block every chunk -> final value persists

    # ---- Upsampling: one matmul, lane-dense (fs*dim) unmasked output store ---
    hs = hs_scr[...].astype(MATMUL_DTYPE)                # (rows, dim), no reshape
    up = (jnp.dot(hs, wup_ref[...], preferred_element_type=jnp.float32)
          + bup_ref[...])
    out_ref[...] = up                                    # (rows, fs*dim)


def frame_tier_forward(prev2d, cond2d, p, B):
    """prev2d: (T*B, nfs) bf16, rows ordered (t, b); cond2d: (T*B, dim) f32 or None.

    Returns upsampled conditioning (T*fs*B, dim) f32 (rows ordered (t*fs+k, b))
    and the final hidden state (B, dim).
    """
    rows, nfs = prev2d.shape
    T = rows // B
    dim = p["h0"].shape[1]
    fs = p["w_up"].shape[1] // dim
    has_cond = cond2d is not None
    h0b = jnp.broadcast_to(p["h0"], (B, dim))

    ct = _pick_chunk(T, B, nfs, dim, fs)
    nchunks = T // ct
    rblk = ct * B

    in_arrays = [prev2d]
    in_specs = [pl.BlockSpec((rblk, nfs), lambda c: (c, 0))]
    if has_cond:
        in_arrays.append(cond2d)
        in_specs.append(pl.BlockSpec((rblk, dim), lambda c: (c, 0)))
    in_arrays.append(h0b)
    in_specs.append(pl.BlockSpec((B, dim), lambda c: (0, 0)))
    w_names = (("w_exp", "b_exp", "w_ih", "b_ih") if has_cond
               else ("w_gi", "b_gi")) + ("w_hh", "b_hh_n", "w_up", "b_up")
    for name in w_names:
        in_arrays.append(p[name])
        in_specs.append(pl.BlockSpec(p[name].shape, lambda c: (0, 0)))

    gru_flops = (2 * rows * dim * (nfs + 3 * dim) if has_cond
                 else 2 * rows * nfs * 3 * dim)
    flops = int(gru_flops + 2 * rows * 3 * dim * dim + 2 * rows * dim * fs * dim)
    transcendentals = int(3 * rows * dim)
    bytes_accessed = int(sum(a.size * a.dtype.itemsize for a in in_arrays)
                         + rows * fs * dim * 4 + B * dim * 4)

    out, h_last = pl.pallas_call(
        functools.partial(frame_tier_kernel, has_cond, B),
        grid=(nchunks,),
        out_shape=(jax.ShapeDtypeStruct((rows, fs * dim), jnp.float32),
                   jax.ShapeDtypeStruct((B, dim), jnp.float32)),
        in_specs=in_specs,
        out_specs=(pl.BlockSpec((rblk, fs * dim), lambda c: (c, 0)),
                   pl.BlockSpec((B, dim), lambda c: (0, 0))),
        scratch_shapes=[
            pltpu.VMEM((B, dim), jnp.float32),           # carried hidden state
            pltpu.VMEM((rblk, 3 * dim), jnp.float32),    # precomputed input gates
            pltpu.VMEM((rblk, dim), jnp.float32),        # per-step hidden states
        ],
        compiler_params=pltpu.CompilerParams(
            dimension_semantics=("arbitrary",),
            vmem_limit_bytes=_vmem_limit_bytes()),
        cost_estimate=pl.CostEstimate(flops=flops,
                                      transcendentals=transcendentals,
                                      bytes_accessed=bytes_accessed),
    )(*in_arrays)

    # ConvTranspose interleave: column block k of row t -> output row t*fs + k.
    up = out.reshape(T, B, fs, dim).transpose(0, 2, 1, 3).reshape(T * fs * B, dim)
    return up, h_last


# ----------------------------------------------------------------------------
# Sample-level MLP kernel: frame conv as a sum of fs shifted-window matmuls
# (no concatenate), + conditioning, relu, 1x1 conv, relu, 1x1 conv,
# log_softmax.  Embedding gather happens in the XLA wrapper.
# ----------------------------------------------------------------------------
def sample_mlp_kernel(B, fs, emb_ref, cond_ref, win_ref, whid_ref, bhid_ref,
                      wout_ref, bout_ref, out_ref):
    SB, _ = cond_ref.shape

    # Conv1d(q_levels -> dim, kernel=fs, bias=False): shifted windows of the
    # time-major (L*B, q) embedding are contiguous row slices.
    x = cond_ref[...]
    for k in range(fs):
        x = x + jnp.dot(emb_ref[pl.ds(k * B, SB), :], win_ref[k],
                        preferred_element_type=jnp.float32)
    x = jnp.maximum(x, 0.0)

    h = jnp.maximum(jnp.dot(x.astype(MATMUL_DTYPE), whid_ref[...],
                            preferred_element_type=jnp.float32)
                    + bhid_ref[...], 0.0)
    o = (jnp.dot(h.astype(MATMUL_DTYPE), wout_ref[...],
                 preferred_element_type=jnp.float32) + bout_ref[...])

    # log_softmax over q_levels (numerically stable, all f32).
    m = jnp.max(o, axis=-1, keepdims=True)
    lse = m + jnp.log(jnp.sum(jnp.exp(o - m), axis=-1, keepdims=True))
    out_ref[...] = o - lse   # note: lane-dense at production q_levels (>=128)


def sample_mlp_forward(samp_tm, cond2d, p, B):
    """samp_tm: (L, B) int32; cond2d: (S*B, dim) f32.  Returns (S*B, q) f32."""
    L, _ = samp_tm.shape
    SB, dim = cond2d.shape
    q = p["emb"].shape[1]
    fs = p["w_in"].shape[0]

    # Embedding lookup as an XLA gather (layout plumbing, not compute); pass it
    # time-major with batch folded into rows, in the MXU dtype.
    emb = jnp.take(p["emb"], samp_tm.reshape(L * B), axis=0).astype(MATMUL_DTYPE)

    flops = int(2 * SB * dim * (fs * q + dim + q))
    bytes_accessed = int(emb.size * 2 + cond2d.size * 4 + SB * q * 4
                         + sum(p[n].size * p[n].dtype.itemsize
                               for n in ("w_in", "w_hid", "b_hid",
                                         "w_out", "b_out")))

    vmem = pl.BlockSpec(memory_space=pltpu.MemorySpace.VMEM)
    return pl.pallas_call(
        functools.partial(sample_mlp_kernel, B, fs),
        out_shape=jax.ShapeDtypeStruct((SB, q), jnp.float32),
        in_specs=[vmem] * 7,
        out_specs=vmem,
        compiler_params=pltpu.CompilerParams(
            vmem_limit_bytes=_vmem_limit_bytes()),
        cost_estimate=pl.CostEstimate(flops=flops,
                                      transcendentals=int(SB * (q + 1)),
                                      bytes_accessed=bytes_accessed),
    )(emb, cond2d, p["w_in"], p["w_hid"], p["b_hid"], p["w_out"], p["b_out"])


# ----------------------------------------------------------------------------
# Predictor.forward (reset=True path): glue in plain JAX, hot paths in Pallas.
# Activations stay time-major, batch-folded 2-D between tiers; one transpose
# back to the PyTorch convention at the API edge.
# ----------------------------------------------------------------------------
def predictor_forward(input_sequences, params, config):
    B, _ = input_sequences.shape
    lookback = config["lookback"]

    # TODO(synk): the real SampleRNN FrameLevelRNN dequantizes prev_samples
    # (2 * linear_dequantize(x, q_levels)) before input_expand; here raw codes
    # are cast once to the MXU dtype in the wrapper (synthetic weights).
    upper_cond = None                           # (T_lower*B, dim), rows (t, b)
    hidden_states = {}
    for tier in reversed(range(len(config["n_frame_samples"]))):
        nfs = config["n_frame_samples"][tier]
        from_index = lookback - nfs
        to_index = -nfs + 1
        prev = input_sequences[:, from_index:to_index]             # (B, T*nfs)
        prev_tm = prev.reshape(B, -1, nfs).transpose(1, 0, 2)       # (T, B, nfs)
        T = prev_tm.shape[0]
        prev2d = prev_tm.reshape(T * B, nfs).astype(MATMUL_DTYPE)   # batch folded
        upper_cond, h = frame_tier_forward(prev2d, upper_cond,
                                           params["tiers"][tier], B)
        hidden_states[tier] = h  # Runner.hidden_states equivalent (reset path)

    fs0 = config["frame_sizes"][0]
    mlp_samples = input_sequences[:, lookback - fs0:]               # (B, L)
    samp_tm = mlp_samples.transpose(1, 0)                           # (L, B)
    out2d = sample_mlp_forward(samp_tm, upper_cond, params["mlp"], B)
    S, q = out2d.shape[0] // B, out2d.shape[1]
    # Single transpose back to the PyTorch (batch, seq, q_levels) convention.
    return out2d.reshape(S, B, q).transpose(1, 0, 2)


# ----------------------------------------------------------------------------
# Deterministic parameter init (synthetic; shapes follow SampleRNN __init__)
# and kernel-layout preparation (gate/tap/bias fusion, bf16 operand casts).
# ----------------------------------------------------------------------------
def init_tier_params(key, nfs, frame_size, dim):
    ks = jax.random.split(key, 5)
    s = 0.1
    return dict(
        w_exp=jax.random.normal(ks[0], (nfs, dim), jnp.float32) * s,
        b_exp=jnp.zeros((1, dim), jnp.float32),
        w_ih=jax.random.normal(ks[1], (3, dim, dim), jnp.float32) * s,  # r,z,n
        b_ih=jnp.zeros((3, 1, dim), jnp.float32),
        w_hh=jax.random.normal(ks[2], (3, dim, dim), jnp.float32) * s,
        b_hh=jnp.zeros((3, 1, dim), jnp.float32),
        w_up=jax.random.normal(ks[3], (frame_size, dim, dim), jnp.float32) * s,
        b_up=jnp.zeros((1, dim), jnp.float32),
        h0=jax.random.normal(ks[4], (1, dim), jnp.float32) * s,
    )


def prepare_tier_params(p, is_top):
    """Fuse GRU gates / upsample taps / biases; cast MXU operands to bf16.

    TODO(synk): layouts are only self-consistent with the synthetic init; the
    transposes must be re-derived before loading real PyTorch checkpoints
    (Conv1d / ConvTranspose1d weight layouts differ).
    """
    fs, dim, _ = p["w_up"].shape
    w_ih = jnp.concatenate([p["w_ih"][g] for g in range(3)], axis=1)   # (d,3d)
    b_ih = jnp.concatenate([p["b_ih"][g] for g in range(3)], axis=1)   # (1,3d)
    b_hh = jnp.concatenate([p["b_hh"][g] for g in range(3)], axis=1)   # (1,3d)
    # Fold the r/z halves of b_hh into the precomputed input-gate bias; only
    # the n-gate hidden bias stays separate (it is scaled by r each step).
    b_gates = b_ih.at[:, :2 * dim].add(b_hh[:, :2 * dim])
    out = dict(
        w_hh=jnp.concatenate([p["w_hh"][g] for g in range(3)], axis=1),  # f32
        b_hh_n=b_hh[:, 2 * dim:],
        w_up=jnp.transpose(p["w_up"], (1, 0, 2)).reshape(dim, fs * dim)
                .astype(MATMUL_DTYPE),                          # (dim, fs*dim)
        b_up=jnp.tile(p["b_up"], (1, fs)),
        h0=p["h0"],
    )
    if is_top:
        # Top tier has no upper conditioning: fold input_expand into the gate
        # matmul so the kernel does one K=nfs matmul and never DMAs a cond.
        out["w_gi"] = jnp.dot(p["w_exp"], w_ih).astype(MATMUL_DTYPE)  # (nfs,3d)
        out["b_gi"] = jnp.dot(p["b_exp"], w_ih) + b_gates
    else:
        out["w_exp"] = p["w_exp"].astype(MATMUL_DTYPE)
        out["b_exp"] = p["b_exp"]
        out["w_ih"] = w_ih.astype(MATMUL_DTYPE)
        out["b_ih"] = b_gates
    return out


def init_mlp_params(key, frame_size, dim, q_levels):
    ks = jax.random.split(key, 4)
    s = 0.1
    return dict(
        emb=jax.random.normal(ks[0], (q_levels, q_levels), jnp.float32) * s,
        w_in=jax.random.normal(ks[1], (frame_size, q_levels, dim),
                               jnp.float32) * s,
        w_hid=jax.random.normal(ks[2], (dim, dim), jnp.float32) * s,
        b_hid=jnp.zeros((1, dim), jnp.float32),
        w_out=jax.random.normal(ks[3], (dim, q_levels), jnp.float32) * s,
        b_out=jnp.zeros((1, q_levels), jnp.float32),
    )


def prepare_mlp_params(p):
    return dict(
        emb=p["emb"],                                    # f32 gather table
        w_in=p["w_in"].astype(MATMUL_DTYPE),             # (fs, q, dim) taps
        w_hid=p["w_hid"].astype(MATMUL_DTYPE),
        b_hid=p["b_hid"],
        w_out=p["w_out"].astype(MATMUL_DTYPE),
        b_out=p["b_out"],
    )


if __name__ == "__main__":
    # Small SampleRNN config: two tiers, frame_sizes=(4,4) -> n_frame_samples=(4,16)
    frame_sizes = (4, 4)
    n_frame_samples = (4, 16)           # cumprod(frame_sizes)
    dim = 32
    q_levels = 16
    lookback = n_frame_samples[-1]      # 16
    batch = 2
    seq_len = 32                        # multiple of lookback
    total_len = lookback + seq_len - 1  # 47 (matches the SampleRNN data loader)

    config = dict(frame_sizes=frame_sizes, n_frame_samples=n_frame_samples,
                  lookback=lookback)

    key = jax.random.PRNGKey(0)
    k_in, k_t0, k_t1, k_mlp = jax.random.split(key, 4)

    raw_params = dict(
        tiers=[
            init_tier_params(k_t0, n_frame_samples[0], frame_sizes[0], dim),
            init_tier_params(k_t1, n_frame_samples[1], frame_sizes[1], dim),
        ],
        mlp=init_mlp_params(k_mlp, frame_sizes[0], dim, q_levels),
    )
    ntiers = len(raw_params["tiers"])
    params = dict(
        tiers=[prepare_tier_params(t, is_top=(i == ntiers - 1))
               for i, t in enumerate(raw_params["tiers"])],
        mlp=prepare_mlp_params(raw_params["mlp"]),
    )

    input_sequences = jax.random.randint(
        k_in, (batch, total_len), 0, q_levels, dtype=jnp.int32)

    fwd = jax.jit(functools.partial(predictor_forward, config=config))
    out = jax.block_until_ready(fwd(input_sequences, params))

    assert out.shape == (batch, seq_len, q_levels), out.shape
    # log_softmax sanity: probabilities sum to 1.
    probs_sum = jnp.sum(jnp.exp(out), axis=-1)
    assert bool(jnp.allclose(probs_sum, 1.0, atol=1e-3)), probs_sum

    print("KERNEL_OK")
</pallas_src>

<mosaic_0001>
module attributes {stable_mosaic.version = 11 : i64} {
  func.func @frame_tier_kernel(%arg0: i32, %arg1: memref<4x16xbf16, #tpu.memory_space<vmem>>, %arg2: memref<2x32xf32, #tpu.memory_space<vmem>>, %arg3: memref<16x96xbf16, #tpu.memory_space<vmem>>, %arg4: memref<1x96xf32, #tpu.memory_space<vmem>>, %arg5: memref<32x96xf32, #tpu.memory_space<vmem>>, %arg6: memref<1x32xf32, #tpu.memory_space<vmem>>, %arg7: memref<32x128xbf16, #tpu.memory_space<vmem>>, %arg8: memref<1x128xf32, #tpu.memory_space<vmem>>, %arg9: memref<4x128xf32, #tpu.memory_space<vmem>>, %arg10: memref<2x32xf32, #tpu.memory_space<vmem>>, %arg11: memref<2x32xf32, #tpu.memory_space<vmem>>, %arg12: memref<4x96xf32, #tpu.memory_space<vmem>>, %arg13: memref<4x32xf32, #tpu.memory_space<vmem>>) attributes {dimension_semantics = [#tpu.dimension_semantics<arbitrary>], iteration_bounds = array<i64: 1>, scalar_prefetch = 0 : i64, scratch_operands = 3 : i64, tpu.core_type = #tpu.core_type<tc>, window_params = [{transform_indices = @transform_0, window_bounds = array<i64: 4, 16>}, {pipeline_mode = #tpu.pipeline_mode<synchronous>, transform_indices = @transform_1, window_bounds = array<i64: 2, 32>}, {pipeline_mode = #tpu.pipeline_mode<synchronous>, transform_indices = @transform_2, window_bounds = array<i64: 16, 96>}, {pipeline_mode = #tpu.pipeline_mode<synchronous>, transform_indices = @transform_3, window_bounds = array<i64: 1, 96>}, {pipeline_mode = #tpu.pipeline_mode<synchronous>, transform_indices = @transform_4, window_bounds = array<i64: 32, 96>}, {pipeline_mode = #tpu.pipeline_mode<synchronous>, transform_indices = @transform_5, window_bounds = array<i64: 1, 32>}, {pipeline_mode = #tpu.pipeline_mode<synchronous>, transform_indices = @transform_6, window_bounds = array<i64: 32, 128>}, {pipeline_mode = #tpu.pipeline_mode<synchronous>, transform_indices = @transform_7, window_bounds = array<i64: 1, 128>}, {transform_indices = @transform_8, window_bounds = array<i64: 4, 128>}, {pipeline_mode = #tpu.pipeline_mode<synchronous>, transform_indices = @transform_9, window_bounds = array<i64: 2, 32>}]} {
    %c0_i32 = arith.constant 0 : i32
    %0 = arith.cmpi eq, %arg0, %c0_i32 : i32
    %1 = arith.extui %0 : i1 to i32
    %c0_i32_0 = arith.constant 0 : i32
    %2 = arith.cmpi ne, %1, %c0_i32_0 : i32
    scf.if %2 {
      %c0_44 = arith.constant 0 : index
      %c0_45 = arith.constant 0 : index
      %93 = vector.load %arg2[%c0_44, %c0_45] : memref<2x32xf32, #tpu.memory_space<vmem>>, vector<2x32xf32>
      %c0_46 = arith.constant 0 : index
      %c0_47 = arith.constant 0 : index
      %94 = vector.load %arg11[%c0_46, %c0_47] : memref<2x32xf32, #tpu.memory_space<vmem>>, vector<2x32xf32>
      tpu.vector_store %arg11[%c0_46, %c0_47], %93 {strides = array<i32>} : memref<2x32xf32, #tpu.memory_space<vmem>>, vector<2x32xf32>,
    } else {
    }
    %c0 = arith.constant 0 : index
    %c0_1 = arith.constant 0 : index
    %3 = vector.load %arg1[%c0, %c0_1] : memref<4x16xbf16, #tpu.memory_space<vmem>>, vector<4x16xbf16>
    %c0_2 = arith.constant 0 : index
    %c0_3 = arith.constant 0 : index
    %4 = vector.load %arg3[%c0_2, %c0_3] : memref<16x96xbf16, #tpu.memory_space<vmem>>, vector<16x96xbf16>
    %cst = arith.constant dense<0.000000e+00> : vector<4x96xf32>
    %5 = tpu.matmul %3, %4, %cst {dimension_numbers = #tpu.dot_dimension_numbers<[1], [0], [0], [1], [0, 0, 1, 1], [], []>} : vector<4x16xbf16>, vector<16x96xbf16>, vector<4x96xf32> -> vector<4x96xf32>
    %c0_4 = arith.constant 0 : index
    %c0_5 = arith.constant 0 : index
    %6 = vector.load %arg4[%c0_4, %c0_5] : memref<1x96xf32, #tpu.memory_space<vmem>>, vector<1x96xf32>
    %7 = vector.broadcast %6 : vector<1x96xf32> to vector<4x96xf32>
    %8 = arith.addf %5, %7 : vector<4x96xf32>
    %c0_6 = arith.constant 0 : index
    %c0_7 = arith.constant 0 : index
    %9 = vector.load %arg12[%c0_6, %c0_7] : memref<4x96xf32, #tpu.memory_space<vmem>>, vector<4x96xf32>
    tpu.vector_store %arg12[%c0_6, %c0_7], %8 {strides = array<i32>} : memref<4x96xf32, #tpu.memory_space<vmem>>, vector<4x96xf32>,
    %c0_8 = arith.constant 0 : index
    %c0_9 = arith.constant 0 : index
    %10 = vector.load %arg5[%c0_8, %c0_9] : memref<32x96xf32, #tpu.memory_space<vmem>>, vector<32x96xf32>
    %c0_10 = arith.constant 0 : index
    %c0_11 = arith.constant 0 : index
    %11 = vector.load %arg6[%c0_10, %c0_11] : memref<1x32xf32, #tpu.memory_space<vmem>>, vector<1x32xf32>
    %12 = vector.shape_cast %11 : vector<1x32xf32> to vector<1x32xf32>
    %13 = vector.broadcast %12 : vector<1x32xf32> to vector<2x32xf32>
    %c0_12 = arith.constant 0 : index
    %c0_13 = arith.constant 0 : index
    %14 = vector.load %arg11[%c0_12, %c0_13] : memref<2x32xf32, #tpu.memory_space<vmem>>, vector<2x32xf32>
    %c0_i32_14 = arith.constant 0 : i32
    %c2_i32 = arith.constant 2 : i32
    %15 = arith.muli %c0_i32_14, %c2_i32 : i32
    %16 = arith.index_cast %15 : i32 to index
    %c0_15 = arith.constant 0 : index
    %17 = vector.load %arg12[%16, %c0_15] : memref<4x96xf32, #tpu.memory_space<vmem>>, vector<2x96xf32>
    %cst_16 = arith.constant dense<0.000000e+00> : vector<2x96xf32>
    %18 = tpu.matmul %14, %10, %cst_16 {dimension_numbers = #tpu.dot_dimension_numbers<[1], [0], [0], [1], [0, 0, 1, 1], [], []>} : vector<2x32xf32>, vector<32x96xf32>, vector<2x96xf32> -> vector<2x96xf32>
    %19 = vector.extract_strided_slice %17 {offsets = [0, 0], sizes = [2, 32], strides = [1, 1]} : vector<2x96xf32> to vector<2x32xf32>
    %20 = vector.extract_strided_slice %18 {offsets = [0, 0], sizes = [2, 32], strides = [1, 1]} : vector<2x96xf32> to vector<2x32xf32>
    %21 = arith.addf %19, %20 : vector<2x32xf32>
    %22 = arith.negf %21 : vector<2x32xf32>
    %23 = math.exp %22 : vector<2x32xf32>
    %cst_17 = arith.constant 1.000000e+00 : f32
    %24 = vector.broadcast %cst_17 : f32 to vector<2x32xf32>
    %25 = arith.addf %24, %23 : vector<2x32xf32>
    %26 = arith.divf %24, %25 : vector<2x32xf32>
    %27 = vector.extract_strided_slice %17 {offsets = [0, 32], sizes = [2, 32], strides = [1, 1]} : vector<2x96xf32> to vector<2x32xf32>
    %28 = vector.extract_strided_slice %18 {offsets = [0, 32], sizes = [2, 32], strides = [1, 1]} : vector<2x96xf32> to vector<2x32xf32>
    %29 = arith.addf %27, %28 : vector<2x32xf32>
    %30 = arith.negf %29 : vector<2x32xf32>
    %31 = math.exp %30 : vector<2x32xf32>
    %cst_18 = arith.constant 1.000000e+00 : f32
    %32 = vector.broadcast %cst_18 : f32 to vector<2x32xf32>
    %33 = arith.addf %32, %31 : vector<2x32xf32>
    %34 = arith.divf %32, %33 : vector<2x32xf32>
    %35 = vector.extract_strided_slice %17 {offsets = [0, 64], sizes = [2, 32], strides = [1, 1]} : vector<2x96xf32> to vector<2x32xf32>
    %36 = vector.extract_strided_slice %18 {offsets = [0, 64], sizes = [2, 32], strides = [1, 1]} : vector<2x96xf32> to vector<2x32xf32>
    %37 = arith.addf %36, %13 : vector<2x32xf32>
    %38 = arith.mulf %26, %37 : vector<2x32xf32>
    %39 = arith.addf %35, %38 : vector<2x32xf32>
    %40 = math.tanh %39 : vector<2x32xf32>
    %cst_19 = arith.constant 1.000000e+00 : f32
    %41 = vector.broadcast %cst_19 : f32 to vector<2x32xf32>
    %42 = arith.subf %41, %34 : vector<2x32xf32>
    %43 = arith.mulf %42, %40 : vector<2x32xf32>
    %44 = arith.mulf %34, %14 : vector<2x32xf32>
    %45 = arith.addf %43, %44 : vector<2x32xf32>
    %c2_i32_20 = arith.constant 2 : i32
    %46 = arith.muli %c0_i32_14, %c2_i32_20 : i32
    %47 = arith.index_cast %46 : i32 to index
    %c0_21 = arith.constant 0 : index
    %48 = vector.load %arg13[%47, %c0_21] : memref<4x32xf32, #tpu.memory_space<vmem>>, vector<2x32xf32>
    tpu.vector_store %arg13[%47, %c0_21], %45 {strides = array<i32>} : memref<4x32xf32, #tpu.memory_space<vmem>>, vector<2x32xf32>,
    %c1_i32 = arith.constant 1 : i32
    %c2_i32_22 = arith.constant 2 : i32
    %49 = arith.muli %c1_i32, %c2_i32_22 : i32
    %50 = arith.index_cast %49 : i32 to index
    %c0_23 = arith.constant 0 : index
    %51 = vector.load %arg12[%50, %c0_23] : memref<4x96xf32, #tpu.memory_space<vmem>>, vector<2x96xf32>
    %cst_24 = arith.constant dense<0.000000e+00> : vector<2x96xf32>
    %52 = tpu.matmul %45, %10, %cst_24 {dimension_numbers = #tpu.dot_dimension_numbers<[1], [0], [0], [1], [0, 0, 1, 1], [], []>} : vector<2x32xf32>, vector<32x96xf32>, vector<2x96xf32> -> vector<2x96xf32>
    %53 = vector.extract_strided_slice %51 {offsets = [0, 0], sizes = [2, 32], strides = [1, 1]} : vector<2x96xf32> to vector<2x32xf32>
    %54 = vector.extract_strided_slice %52 {offsets = [0, 0], sizes = [2, 32], strides = [1, 1]} : vector<2x96xf32> to vector<2x32xf32>
    %55 = arith.addf %53, %54 : vector<2x32xf32>
    %56 = arith.negf %55 : vector<2x32xf32>
    %57 = math.exp %56 : vector<2x32xf32>
    %cst_25 = arith.constant 1.000000e+00 : f32
    %58 = vector.broadcast %cst_25 : f32 to vector<2x32xf32>
    %59 = arith.addf %58, %57 : vector<2x32xf32>
    %60 = arith.divf %58, %59 : vector<2x32xf32>
    %61 = vector.extract_strided_slice %51 {offsets = [0, 32], sizes = [2, 32], strides = [1, 1]} : vector<2x96xf32> to vector<2x32xf32>
    %62 = vector.extract_strided_slice %52 {offsets = [0, 32], sizes = [2, 32], strides = [1, 1]} : vector<2x96xf32> to vector<2x32xf32>
    %63 = arith.addf %61, %62 : vector<2x32xf32>
    %64 = arith.negf %63 : vector<2x32xf32>
    %65 = math.exp %64 : vector<2x32xf32>
    %cst_26 = arith.constant 1.000000e+00 : f32
    %66 = vector.broadcast %cst_26 : f32 to vector<2x32xf32>
    %67 = arith.addf %66, %65 : vector<2x32xf32>
    %68 = arith.divf %66, %67 : vector<2x32xf32>
    %69 = vector.extract_strided_slice %51 {offsets = [0, 64], sizes = [2, 32], strides = [1, 1]} : vector<2x96xf32> to vector<2x32xf32>
    %70 = vector.extract_strided_slice %52 {offsets = [0, 64], sizes = [2, 32], strides = [1, 1]} : vector<2x96xf32> to vector<2x32xf32>
    %71 = arith.addf %70, %13 : vector<2x32xf32>
    %72 = arith.mulf %60, %71 : vector<2x32xf32>
    %73 = arith.addf %69, %72 : vector<2x32xf32>
    %74 = math.tanh %73 : vector<2x32xf32>
    %cst_27 = arith.constant 1.000000e+00 : f32
    %75 = vector.broadcast %cst_27 : f32 to vector<2x32xf32>
    %76 = arith.subf %75, %68 : vector<2x32xf32>
    %77 = arith.mulf %76, %74 : vector<2x32xf32>
    %78 = arith.mulf %68, %45 : vector<2x32xf32>
    %79 = arith.addf %77, %78 : vector<2x32xf32>
    %c2_i32_28 = arith.constant 2 : i32
    %80 = arith.muli %c1_i32, %c2_i32_28 : i32
    %81 = arith.index_cast %80 : i32 to index
    %c0_29 = arith.constant 0 : index
    %82 = vector.load %arg13[%81, %c0_29] : memref<4x32xf32, #tpu.memory_space<vmem>>, vector<2x32xf32>
    tpu.vector_store %arg13[%81, %c0_29], %79 {strides = array<i32>} : memref<4x32xf32, #tpu.memory_space<vmem>>, vector<2x32xf32>,
    %c2_i32_30 = arith.constant 2 : i32
    %c0_31 = arith.constant 0 : index
    %c0_32 = arith.constant 0 : index
    %83 = vector.load %arg11[%c0_31, %c0_32] : memref<2x32xf32, #tpu.memory_space<vmem>>, vector<2x32xf32>
    tpu.vector_store %arg11[%c0_31, %c0_32], %79 {strides = array<i32>} : memref<2x32xf32, #tpu.memory_space<vmem>>, vector<2x32xf32>,
    %c0_33 = arith.constant 0 : index
    %c0_34 = arith.constant 0 : index
    %84 = vector.load %arg10[%c0_33, %c0_34] : memref<2x32xf32, #tpu.memory_space<vmem>>, vector<2x32xf32>
    tpu.vector_store %arg10[%c0_33, %c0_34], %79 {strides = array<i32>} : memref<2x32xf32, #tpu.memory_space<vmem>>, vector<2x32xf32>,
    %c0_35 = arith.constant 0 : index
    %c0_36 = arith.constant 0 : index
    %85 = vector.load %arg13[%c0_35, %c0_36] : memref<4x32xf32, #tpu.memory_space<vmem>>, vector<4x32xf32>
    %86 = arith.truncf %85 : vector<4x32xf32> to vector<4x32xbf16>
    %c0_37 = arith.constant 0 : index
    %c0_38 = arith.constant 0 : index
    %87 = vector.load %arg7[%c0_37, %c0_38] : memref<32x128xbf16, #tpu.memory_space<vmem>>, vector<32x128xbf16>
    %cst_39 = arith.constant dense<0.000000e+00> : vector<4x128xf32>
    %88 = tpu.matmul %86, %87, %cst_39 {dimension_numbers = #tpu.dot_dimension_numbers<[1], [0], [0], [1], [0, 0, 1, 1], [], []>} : vector<4x32xbf16>, vector<32x128xbf16>, vector<4x128xf32> -> vector<4x128xf32>
    %c0_40 = arith.constant 0 : index
    %c0_41 = arith.constant 0 : index
    %89 = vector.load %arg8[%c0_40, %c0_41] : memref<1x128xf32, #tpu.memory_space<vmem>>, vector<1x128xf32>
    %90 = vector.broadcast %89 : vector<1x128xf32> to vector<4x128xf32>
    %91 = arith.addf %88, %90 : vector<4x128xf32>
    %c0_42 = arith.constant 0 : index
    %c0_43 = arith.constant 0 : index
    %92 = vector.load %arg9[%c0_42, %c0_43] : memref<4x128xf32, #tpu.memory_space<vmem>>, vector<4x128xf32>
    tpu.vector_store %arg9[%c0_42, %c0_43], %91 {strides = array<i32>} : memref<4x128xf32, #tpu.memory_space<vmem>>, vector<4x128xf32>,
    return
  }
  func.func @transform_0(%arg0: i32) -> (i32, i32) {
    %c0_i32 = arith.constant 0 : i32
    %c0_i32_0 = arith.constant 0 : i32
    return %arg0, %c0_i32 : i32, i32
  }
  func.func @transform_1(%arg0: i32) -> (i32, i32) {
    %c0_i32 = arith.constant 0 : i32
    %c0_i32_0 = arith.constant 0 : i32
    %c0_i32_1 = arith.constant 0 : i32
    return %c0_i32, %c0_i32_0 : i32, i32
  }
  func.func @transform_2(%arg0: i32) -> (i32, i32) {
    %c0_i32 = arith.constant 0 : i32
    %c0_i32_0 = arith.constant 0 : i32
    %c0_i32_1 = arith.constant 0 : i32
    return %c0_i32, %c0_i32_0 : i32, i32
  }
  func.func @transform_3(%arg0: i32) -> (i32, i32) {
    %c0_i32 = arith.constant 0 : i32
    %c0_i32_0 = arith.constant 0 : i32
    %c0_i32_1 = arith.constant 0 : i32
    return %c0_i32, %c0_i32_0 : i32, i32
  }
  func.func @transform_4(%arg0: i32) -> (i32, i32) {
    %c0_i32 = arith.constant 0 : i32
    %c0_i32_0 = arith.constant 0 : i32
    %c0_i32_1 = arith.constant 0 : i32
    return %c0_i32, %c0_i32_0 : i32, i32
  }
  func.func @transform_5(%arg0: i32) -> (i32, i32) {
    %c0_i32 = arith.constant 0 : i32
    %c0_i32_0 = arith.constant 0 : i32
    %c0_i32_1 = arith.constant 0 : i32
    return %c0_i32, %c0_i32_0 : i32, i32
  }
  func.func @transform_6(%arg0: i32) -> (i32, i32) {
    %c0_i32 = arith.constant 0 : i32
    %c0_i32_0 = arith.constant 0 : i32
    %c0_i32_1 = arith.constant 0 : i32
    return %c0_i32, %c0_i32_0 : i32, i32
  }
  func.func @transform_7(%arg0: i32) -> (i32, i32) {
    %c0_i32 = arith.constant 0 : i32
    %c0_i32_0 = arith.constant 0 : i32
    %c0_i32_1 = arith.constant 0 : i32
    return %c0_i32, %c0_i32_0 : i32, i32
  }
  func.func @transform_8(%arg0: i32) -> (i32, i32) {
    %c0_i32 = arith.constant 0 : i32
    %c0_i32_0 = arith.constant 0 : i32
    return %arg0, %c0_i32 : i32, i32
  }
  func.func @transform_9(%arg0: i32) -> (i32, i32) {
    %c0_i32 = arith.constant 0 : i32
    %c0_i32_0 = arith.constant 0 : i32
    %c0_i32_1 = arith.constant 0 : i32
    return %c0_i32, %c0_i32_0 : i32, i32
  }
}

module attributes {stable_mosaic.version = 11 : i64} {
  func.func @frame_tier_kernel(%arg0: i32, %arg1: memref<16x4xbf16, #tpu.memory_space<vmem>>, %arg2: memref<16x32xf32, #tpu.memory_space<vmem>>, %arg3: memref<2x32xf32, #tpu.memory_space<vmem>>, %arg4: memref<4x32xbf16, #tpu.memory_space<vmem>>, %arg5: memref<1x32xf32, #tpu.memory_space<vmem>>, %arg6: memref<32x96xbf16, #tpu.memory_space<vmem>>, %arg7: memref<1x96xf32, #tpu.memory_space<vmem>>, %arg8: memref<32x96xf32, #tpu.memory_space<vmem>>, %arg9: memref<1x32xf32, #tpu.memory_space<vmem>>, %arg10: memref<32x128xbf16, #tpu.memory_space<vmem>>, %arg11: memref<1x128xf32, #tpu.memory_space<vmem>>, %arg12: memref<16x128xf32, #tpu.memory_space<vmem>>, %arg13: memref<2x32xf32, #tpu.memory_space<vmem>>, %arg14: memref<2x32xf32, #tpu.memory_space<vmem>>, %arg15: memref<16x96xf32, #tpu.memory_space<vmem>>, %arg16: memref<16x32xf32, #tpu.memory_space<vmem>>) attributes {dimension_semantics = [#tpu.dimension_semantics<arbitrary>], iteration_bounds = array<i64: 1>, scalar_prefetch = 0 : i64, scratch_operands = 3 : i64, tpu.core_type = #tpu.core_type<tc>, window_params = [{transform_indices = @transform_0, window_bounds = array<i64: 16, 4>}, {transform_indices = @transform_1, window_bounds = array<i64: 16, 32>}, {pipeline_mode = #tpu.pipeline_mode<synchronous>, transform_indices = @transform_2, window_bounds = array<i64: 2, 32>}, {pipeline_mode = #tpu.pipeline_mode<synchronous>, transform_indices = @transform_3, window_bounds = array<i64: 4, 32>}, {pipeline_mode = #tpu.pipeline_mode<synchronous>, transform_indices = @transform_4, window_bounds = array<i64: 1, 32>}, {pipeline_mode = #tpu.pipeline_mode<synchronous>, transform_indices = @transform_5, window_bounds = array<i64: 32, 96>}, {pipeline_mode = #tpu.pipeline_mode<synchronous>, transform_indices = @transform_6, window_bounds = array<i64: 1, 96>}, {pipeline_mode = #tpu.pipeline_mode<synchronous>, transform_indices = @transform_7, window_bounds = array<i64: 32, 96>}, {pipeline_mode = #tpu.pipeline_mode<synchronous>, transform_indices = @transform_8, window_bounds = array<i64: 1, 32>}, {pipeline_mode = #tpu.pipeline_mode<synchronous>, transform_indices = @transform_9, window_bounds = array<i64: 32, 128>}, {pipeline_mode = #tpu.pipeline_mode<synchronous>, transform_indices = @transform_10, window_bounds = array<i64: 1, 128>}, {transform_indices = @transform_11, window_bounds = array<i64: 16, 128>}, {pipeline_mode = #tpu.pipeline_mode<synchronous>, transform_indices = @transform_12, window_bounds = array<i64: 2, 32>}]} {
    %c0_i32 = arith.constant 0 : i32
    %0 = arith.cmpi eq, %arg0, %c0_i32 : i32
    %1 = arith.extui %0 : i1 to i32
    %c0_i32_0 = arith.constant 0 : i32
    %2 = arith.cmpi ne, %1, %c0_i32_0 : i32
    scf.if %2 {
      %c0_99 = arith.constant 0 : index
      %c0_100 = arith.constant 0 : index
      %305 = vector.load %arg3[%c0_99, %c0_100] : memref<2x32xf32, #tpu.memory_space<vmem>>, vector<2x32xf32>
      %c0_101 = arith.constant 0 : index
      %c0_102 = arith.constant 0 : index
      %306 = vector.load %arg14[%c0_101, %c0_102] : memref<2x32xf32, #tpu.memory_space<vmem>>, vector<2x32xf32>
      tpu.vector_store %arg14[%c0_101, %c0_102], %305 {strides = array<i32>} : memref<2x32xf32, #tpu.memory_space<vmem>>, vector<2x32xf32>,
    } else {
    }
    %c0 = arith.constant 0 : index
    %c0_1 = arith.constant 0 : index
    %3 = vector.load %arg1[%c0, %c0_1] : memref<16x4xbf16, #tpu.memory_space<vmem>>, vector<16x4xbf16>
    %c0_2 = arith.constant 0 : index
    %c0_3 = arith.constant 0 : index
    %4 = vector.load %arg4[%c0_2, %c0_3] : memref<4x32xbf16, #tpu.memory_space<vmem>>, vector<4x32xbf16>
    %cst = arith.constant dense<0.000000e+00> : vector<16x32xf32>
    %5 = tpu.matmul %3, %4, %cst {dimension_numbers = #tpu.dot_dimension_numbers<[1], [0], [0], [1], [0, 0, 1, 1], [], []>} : vector<16x4xbf16>, vector<4x32xbf16>, vector<16x32xf32> -> vector<16x32xf32>
    %c0_4 = arith.constant 0 : index
    %c0_5 = arith.constant 0 : index
    %6 = vector.load %arg5[%c0_4, %c0_5] : memref<1x32xf32, #tpu.memory_space<vmem>>, vector<1x32xf32>
    %7 = vector.broadcast %6 : vector<1x32xf32> to vector<16x32xf32>
    %8 = arith.addf %5, %7 : vector<16x32xf32>
    %c0_6 = arith.constant 0 : index
    %c0_7 = arith.constant 0 : index
    %9 = vector.load %arg2[%c0_6, %c0_7] : memref<16x32xf32, #tpu.memory_space<vmem>>, vector<16x32xf32>
    %10 = arith.addf %8, %9 : vector<16x32xf32>
    %11 = arith.truncf %10 : vector<16x32xf32> to vector<16x32xbf16>
    %c0_8 = arith.constant 0 : index
    %c0_9 = arith.constant 0 : index
    %12 = vector.load %arg6[%c0_8, %c0_9] : memref<32x96xbf16, #tpu.memory_space<vmem>>, vector<32x96xbf16>
    %cst_10 = arith.constant dense<0.000000e+00> : vector<16x96xf32>
    %13 = tpu.matmul %11, %12, %cst_10 {dimension_numbers = #tpu.dot_dimension_numbers<[1], [0], [0], [1], [0, 0, 1, 1], [], []>} : vector<16x32xbf16>, vector<32x96xbf16>, vector<16x96xf32> -> vector<16x96xf32>
    %c0_11 = arith.constant 0 : index
    %c0_12 = arith.constant 0 : index
    %14 = vector.load %arg7[%c0_11, %c0_12] : memref<1x96xf32, #tpu.memory_space<vmem>>, vector<1x96xf32>
    %15 = vector.broadcast %14 : vector<1x96xf32> to vector<16x96xf32>
    %16 = arith.addf %13, %15 : vector<16x96xf32>
    %c0_13 = arith.constant 0 : index
    %c0_14 = arith.constant 0 : index
    %17 = vector.load %arg15[%c0_13, %c0_14] : memref<16x96xf32, #tpu.memory_space<vmem>>, vector<16x96xf32>
    tpu.vector_store %arg15[%c0_13, %c0_14], %16 {strides = array<i32>} : memref<16x96xf32, #tpu.memory_space<vmem>>, vector<16x96xf32>,
    %c0_15 = arith.constant 0 : index
    %c0_16 = arith.constant 0 : index
    %18 = vector.load %arg8[%c0_15, %c0_16] : memref<32x96xf32, #tpu.memory_space<vmem>>, vector<32x96xf32>
    %c0_17 = arith.constant 0 : index
    %c0_18 = arith.constant 0 : index
    %19 = vector.load %arg9[%c0_17, %c0_18] : memref<1x32xf32, #tpu.memory_space<vmem>>, vector<1x32xf32>
    %20 = vector.shape_cast %19 : vector<1x32xf32> to vector<1x32xf32>
    %21 = vector.broadcast %20 : vector<1x32xf32> to vector<2x32xf32>
    %c0_19 = arith.constant 0 : index
    %c0_20 = arith.constant 0 : index
    %22 = vector.load %arg14[%c0_19, %c0_20] : memref<2x32xf32, #tpu.memory_space<vmem>>, vector<2x32xf32>
    %c0_i32_21 = arith.constant 0 : i32
    %c2_i32 = arith.constant 2 : i32
    %23 = arith.muli %c0_i32_21, %c2_i32 : i32
    %24 = arith.index_cast %23 : i32 to index
    %c0_22 = arith.constant 0 : index
    %25 = vector.load %arg15[%24, %c0_22] : memref<16x96xf32, #tpu.memory_space<vmem>>, vector<2x96xf32>
    %cst_23 = arith.constant dense<0.000000e+00> : vector<2x96xf32>
    %26 = tpu.matmul %22, %18, %cst_23 {dimension_numbers = #tpu.dot_dimension_numbers<[1], [0], [0], [1], [0, 0, 1, 1], [], []>} : vector<2x32xf32>, vector<32x96xf32>, vector<2x96xf32> -> vector<2x96xf32>
    %27 = vector.extract_strided_slice %25 {offsets = [0, 0], sizes = [2, 32], strides = [1, 1]} : vector<2x96xf32> to vector<2x32xf32>
    %28 = vector.extract_strided_slice %26 {offsets = [0, 0], sizes = [2, 32], strides = [1, 1]} : vector<2x96xf32> to vector<2x32xf32>
    %29 = arith.addf %27, %28 : vector<2x32xf32>
    %30 = arith.negf %29 : vector<2x32xf32>
    %31 = math.exp %30 : vector<2x32xf32>
    %cst_24 = arith.constant 1.000000e+00 : f32
    %32 = vector.broadcast %cst_24 : f32 to vector<2x32xf32>
    %33 = arith.addf %32, %31 : vector<2x32xf32>
    %34 = arith.divf %32, %33 : vector<2x32xf32>
    %35 = vector.extract_strided_slice %25 {offsets = [0, 32], sizes = [2, 32], strides = [1, 1]} : vector<2x96xf32> to vector<2x32xf32>
    %36 = vector.extract_strided_slice %26 {offsets = [0, 32], sizes = [2, 32], strides = [1, 1]} : vector<2x96xf32> to vector<2x32xf32>
    %37 = arith.addf %35, %36 : vector<2x32xf32>
    %38 = arith.negf %37 : vector<2x32xf32>
    %39 = math.exp %38 : vector<2x32xf32>
    %cst_25 = arith.constant 1.000000e+00 : f32
    %40 = vector.broadcast %cst_25 : f32 to vector<2x32xf32>
    %41 = arith.addf %40, %39 : vector<2x32xf32>
    %42 = arith.divf %40, %41 : vector<2x32xf32>
    %43 = vector.extract_strided_slice %25 {offsets = [0, 64], sizes = [2, 32], strides = [1, 1]} : vector<2x96xf32> to vector<2x32xf32>
    %44 = vector.extract_strided_slice %26 {offsets = [0, 64], sizes = [2, 32], strides = [1, 1]} : vector<2x96xf32> to vector<2x32xf32>
    %45 = arith.addf %44, %21 : vector<2x32xf32>
    %46 = arith.mulf %34, %45 : vector<2x32xf32>
    %47 = arith.addf %43, %46 : vector<2x32xf32>
    %48 = math.tanh %47 : vector<2x32xf32>
    %cst_26 = arith.constant 1.000000e+00 : f32
    %49 = vector.broadcast %cst_26 : f32 to vector<2x32xf32>
    %50 = arith.subf %49, %42 : vector<2x32xf32>
    %51 = arith.mulf %50, %48 : vector<2x32xf32>
    %52 = arith.mulf %42, %22 : vector<2x32xf32>
    %53 = arith.addf %51, %52 : vector<2x32xf32>
    %c2_i32_27 = arith.constant 2 : i32
    %54 = arith.muli %c0_i32_21, %c2_i32_27 : i32
    %55 = arith.index_cast %54 : i32 to index
    %c0_28 = arith.constant 0 : index
    %56 = vector.load %arg16[%55, %c0_28] : memref<16x32xf32, #tpu.memory_space<vmem>>, vector<2x32xf32>
    tpu.vector_store %arg16[%55, %c0_28], %53 {strides = array<i32>} : memref<16x32xf32, #tpu.memory_space<vmem>>, vector<2x32xf32>,
    %c1_i32 = arith.constant 1 : i32
    %c2_i32_29 = arith.constant 2 : i32
    %57 = arith.muli %c1_i32, %c2_i32_29 : i32
    %58 = arith.index_cast %57 : i32 to index
    %c0_30 = arith.constant 0 : index
    %59 = vector.load %arg15[%58, %c0_30] : memref<16x96xf32, #tpu.memory_space<vmem>>, vector<2x96xf32>
    %cst_31 = arith.constant dense<0.000000e+00> : vector<2x96xf32>
    %60 = tpu.matmul %53, %18, %cst_31 {dimension_numbers = #tpu.dot_dimension_numbers<[1], [0], [0], [1], [0, 0, 1, 1], [], []>} : vector<2x32xf32>, vector<32x96xf32>, vector<2x96xf32> -> vector<2x96xf32>
    %61 = vector.extract_strided_slice %59 {offsets = [0, 0], sizes = [2, 32], strides = [1, 1]} : vector<2x96xf32> to vector<2x32xf32>
    %62 = vector.extract_strided_slice %60 {offsets = [0, 0], sizes = [2, 32], strides = [1, 1]} : vector<2x96xf32> to vector<2x32xf32>
    %63 = arith.addf %61, %62 : vector<2x32xf32>
    %64 = arith.negf %63 : vector<2x32xf32>
    %65 = math.exp %64 : vector<2x32xf32>
    %cst_32 = arith.constant 1.000000e+00 : f32
    %66 = vector.broadcast %cst_32 : f32 to vector<2x32xf32>
    %67 = arith.addf %66, %65 : vector<2x32xf32>
    %68 = arith.divf %66, %67 : vector<2x32xf32>
    %69 = vector.extract_strided_slice %59 {offsets = [0, 32], sizes = [2, 32], strides = [1, 1]} : vector<2x96xf32> to vector<2x32xf32>
    %70 = vector.extract_strided_slice %60 {offsets = [0, 32], sizes = [2, 32], strides = [1, 1]} : vector<2x96xf32> to vector<2x32xf32>
    %71 = arith.addf %69, %70 : vector<2x32xf32>
    %72 = arith.negf %71 : vector<2x32xf32>
    %73 = math.exp %72 : vector<2x32xf32>
    %cst_33 = arith.constant 1.000000e+00 : f32
    %74 = vector.broadcast %cst_33 : f32 to vector<2x32xf32>
    %75 = arith.addf %74, %73 : vector<2x32xf32>
    %76 = arith.divf %74, %75 : vector<2x32xf32>
    %77 = vector.extract_strided_slice %59 {offsets = [0, 64], sizes = [2, 32], strides = [1, 1]} : vector<2x96xf32> to vector<2x32xf32>
    %78 = vector.extract_strided_slice %60 {offsets = [0, 64], sizes = [2, 32], strides = [1, 1]} : vector<2x96xf32> to vector<2x32xf32>
    %79 = arith.addf %78, %21 : vector<2x32xf32>
    %80 = arith.mulf %68, %79 : vector<2x32xf32>
    %81 = arith.addf %77, %80 : vector<2x32xf32>
    %82 = math.tanh %81 : vector<2x32xf32>
    %cst_34 = arith.constant 1.000000e+00 : f32
    %83 = vector.broadcast %cst_34 : f32 to vector<2x32xf32>
    %84 = arith.subf %83, %76 : vector<2x32xf32>
    %85 = arith.mulf %84, %82 : vector<2x32xf32>
    %86 = arith.mulf %76, %53 : vector<2x32xf32>
    %87 = arith.addf %85, %86 : vector<2x32xf32>
    %c2_i32_35 = arith.constant 2 : i32
    %88 = arith.muli %c1_i32, %c2_i32_35 : i32
    %89 = arith.index_cast %88 : i32 to index
    %c0_36 = arith.constant 0 : index
    %90 = vector.load %arg16[%89, %c0_36] : memref<16x32xf32, #tpu.memory_space<vmem>>, vector<2x32xf32>
    tpu.vector_store %arg16[%89, %c0_36], %87 {strides = array<i32>} : memref<16x32xf32, #tpu.memory_space<vmem>>, vector<2x32xf32>,
    %c2_i32_37 = arith.constant 2 : i32
    %c2_i32_38 = arith.constant 2 : i32
    %91 = arith.muli %c2_i32_37, %c2_i32_38 : i32
    %92 = arith.index_cast %91 : i32 to index
    %c0_39 = arith.constant 0 : index
    %93 = vector.load %arg15[%92, %c0_39] : memref<16x96xf32, #tpu.memory_space<vmem>>, vector<2x96xf32>
    %cst_40 = arith.constant dense<0.000000e+00> : vector<2x96xf32>
    %94 = tpu.matmul %87, %18, %cst_40 {dimension_numbers = #tpu.dot_dimension_numbers<[1], [0], [0], [1], [0, 0, 1, 1], [], []>} : vector<2x32xf32>, vector<32x96xf32>, vector<2x96xf32> -> vector<2x96xf32>
    %95 = vector.extract_strided_slice %93 {offsets = [0, 0], sizes = [2, 32], strides = [1, 1]} : vector<2x96xf32> to vector<2x32xf32>
    %96 = vector.extract_strided_slice %94 {offsets = [0, 0], sizes = [2, 32], strides = [1, 1]} : vector<2x96xf32> to vector<2x32xf32>
    %97 = arith.addf %95, %96 : vector<2x32xf32>
    %98 = arith.negf %97 : vector<2x32xf32>
    %99 = math.exp %98 : vector<2x32xf32>
    %cst_41 = arith.constant 1.000000e+00 : f32
    %100 = vector.broadcast %cst_41 : f32 to vector<2x32xf32>
    %101 = arith.addf %100, %99 : vector<2x32xf32>
    %102 = arith.divf %100, %101 : vector<2x32xf32>
    %103 = vector.extract_strided_slice %93 {offsets = [0, 32], sizes = [2, 32], strides = [1, 1]} : vector<2x96xf32> to vector<2x32xf32>
    %104 = vector.extract_strided_slice %94 {offsets = [0, 32], sizes = [2, 32], strides = [1, 1]} : vector<2x96xf32> to vector<2x32xf32>
    %105 = arith.addf %103, %104 : vector<2x32xf32>
    %106 = arith.negf %105 : vector<2x32xf32>
    %107 = math.exp %106 : vector<2x32xf32>
    %cst_42 = arith.constant 1.000000e+00 : f32
    %108 = vector.broadcast %cst_42 : f32 to vector<2x32xf32>
    %109 = arith.addf %108, %107 : vector<2x32xf32>
    %110 = arith.divf %108, %109 : vector<2x32xf32>
    %111 = vector.extract_strided_slice %93 {offsets = [0, 64], sizes = [2, 32], strides = [1, 1]} : vector<2x96xf32> to vector<2x32xf32>
    %112 = vector.extract_strided_slice %94 {offsets = [0, 64], sizes = [2, 32], strides = [1, 1]} : vector<2x96xf32> to vector<2x32xf32>
    %113 = arith.addf %112, %21 : vector<2x32xf32>
    %114 = arith.mulf %102, %113 : vector<2x32xf32>
    %115 = arith.addf %111, %114 : vector<2x32xf32>
    %116 = math.tanh %115 : vector<2x32xf32>
    %cst_43 = arith.constant 1.000000e+00 : f32
    %117 = vector.broadcast %cst_43 : f32 to vector<2x32xf32>
    %118 = arith.subf %117, %110 : vector<2x32xf32>
    %119 = arith.mulf %118, %116 : vector<2x32xf32>
    %120 = arith.mulf %110, %87 : vector<2x32xf32>
    %121 = arith.addf %119, %120 : vector<2x32xf32>
    %c2_i32_44 = arith.constant 2 : i32
    %122 = arith.muli %c2_i32_37, %c2_i32_44 : i32
    %123 = arith.index_cast %122 : i32 to index
    %c0_45 = arith.constant 0 : index
    %124 = vector.load %arg16[%123, %c0_45] : memref<16x32xf32, #tpu.memory_space<vmem>>, vector<2x32xf32>
    tpu.vector_store %arg16[%123, %c0_45], %121 {strides = array<i32>} : memref<16x32xf32, #tpu.memory_space<vmem>>, vector<2x32xf32>,
    %c3_i32 = arith.constant 3 : i32
    %c2_i32_46 = arith.constant 2 : i32
    %125 = arith.muli %c3_i32, %c2_i32_46 : i32
    %126 = arith.index_cast %125 : i32 to index
    %c0_47 = arith.constant 0 : index
    %127 = vector.load %arg15[%126, %c0_47] : memref<16x96xf32, #tpu.memory_space<vmem>>, vector<2x96xf32>
    %cst_48 = arith.constant dense<0.000000e+00> : vector<2x96xf32>
    %128 = tpu.matmul %121, %18, %cst_48 {dimension_numbers = #tpu.dot_dimension_numbers<[1], [0], [0], [1], [0, 0, 1, 1], [], []>} : vector<2x32xf32>, vector<32x96xf32>, vector<2x96xf32> -> vector<2x96xf32>
    %129 = vector.extract_strided_slice %127 {offsets = [0, 0], sizes = [2, 32], strides = [1, 1]} : vector<2x96xf32> to vector<2x32xf32>
    %130 = vector.extract_strided_slice %128 {offsets = [0, 0], sizes = [2, 32], strides = [1, 1]} : vector<2x96xf32> to vector<2x32xf32>
    %131 = arith.addf %129, %130 : vector<2x32xf32>
    %132 = arith.negf %131 : vector<2x32xf32>
    %133 = math.exp %132 : vector<2x32xf32>
    %cst_49 = arith.constant 1.000000e+00 : f32
    %134 = vector.broadcast %cst_49 : f32 to vector<2x32xf32>
    %135 = arith.addf %134, %133 : vector<2x32xf32>
    %136 = arith.divf %134, %135 : vector<2x32xf32>
    %137 = vector.extract_strided_slice %127 {offsets = [0, 32], sizes = [2, 32], strides = [1, 1]} : vector<2x96xf32> to vector<2x32xf32>
    %138 = vector.extract_strided_slice %128 {offsets = [0, 32], sizes = [2, 32], strides = [1, 1]} : vector<2x96xf32> to vector<2x32xf32>
    %139 = arith.addf %137, %138 : vector<2x32xf32>
    %140 = arith.negf %139 : vector<2x32xf32>
    %141 = math.exp %140 : vector<2x32xf32>
    %cst_50 = arith.constant 1.000000e+00 : f32
    %142 = vector.broadcast %cst_50 : f32 to vector<2x32xf32>
    %143 = arith.addf %142, %141 : vector<2x32xf32>
    %144 = arith.divf %142, %143 : vector<2x32xf32>
    %145 = vector.extract_strided_slice %127 {offsets = [0, 64], sizes = [2, 32], strides = [1, 1]} : vector<2x96xf32> to vector<2x32xf32>
    %146 = vector.extract_strided_slice %128 {offsets = [0, 64], sizes = [2, 32], strides = [1, 1]} : vector<2x96xf32> to vector<2x32xf32>
    %147 = arith.addf %146, %21 : vector<2x32xf32>
    %148 = arith.mulf %136, %147 : vector<2x32xf32>
    %149 = arith.addf %145, %148 : vector<2x32xf32>
    %150 = math.tanh %149 : vector<2x32xf32>
    %cst_51 = arith.constant 1.000000e+00 : f32
    %151 = vector.broadcast %cst_51 : f32 to vector<2x32xf32>
    %152 = arith.subf %151, %144 : vector<2x32xf32>
    %153 = arith.mulf %152, %150 : vector<2x32xf32>
    %154 = arith.mulf %144, %121 : vector<2x32xf32>
    %155 = arith.addf %153, %154 : vector<2x32xf32>
    %c2_i32_52 = arith.constant 2 : i32
    %156 = arith.muli %c3_i32, %c2_i32_52 : i32
    %157 = arith.index_cast %156 : i32 to index
    %c0_53 = arith.constant 0 : index
    %158 = vector.load %arg16[%157, %c0_53] : memref<16x32xf32, #tpu.memory_space<vmem>>, vector<2x32xf32>
    tpu.vector_store %arg16[%157, %c0_53], %155 {strides = array<i32>} : memref<16x32xf32, #tpu.memory_space<vmem>>, vector<2x32xf32>,
    %c4_i32 = arith.constant 4 : i32
    %c2_i32_54 = arith.constant 2 : i32
    %159 = arith.muli %c4_i32, %c2_i32_54 : i32
    %160 = arith.index_cast %159 : i32 to index
    %c0_55 = arith.constant 0 : index
    %161 = vector.load %arg15[%160, %c0_55] : memref<16x96xf32, #tpu.memory_space<vmem>>, vector<2x96xf32>
    %cst_56 = arith.constant dense<0.000000e+00> : vector<2x96xf32>
    %162 = tpu.matmul %155, %18, %cst_56 {dimension_numbers = #tpu.dot_dimension_numbers<[1], [0], [0], [1], [0, 0, 1, 1], [], []>} : vector<2x32xf32>, vector<32x96xf32>, vector<2x96xf32> -> vector<2x96xf32>
    %163 = vector.extract_strided_slice %161 {offsets = [0, 0], sizes = [2, 32], strides = [1, 1]} : vector<2x96xf32> to vector<2x32xf32>
    %164 = vector.extract_strided_slice %162 {offsets = [0, 0], sizes = [2, 32], strides = [1, 1]} : vector<2x96xf32> to vector<2x32xf32>
    %165 = arith.addf %163, %164 : vector<2x32xf32>
    %166 = arith.negf %165 : vector<2x32xf32>
    %167 = math.exp %166 : vector<2x32xf32>
    %cst_57 = arith.constant 1.000000e+00 : f32
    %168 = vector.broadcast %cst_57 : f32 to vector<2x32xf32>
    %169 = arith.addf %168, %167 : vector<2x32xf32>
    %170 = arith.divf %168, %169 : vector<2x32xf32>
    %171 = vector.extract_strided_slice %161 {offsets = [0, 32], sizes = [2, 32], strides = [1, 1]} : vector<2x96xf32> to vector<2x32xf32>
    %172 = vector.extract_strided_slice %162 {offsets = [0, 32], sizes = [2, 32], strides = [1, 1]} : vector<2x96xf32> to vector<2x32xf32>
    %173 = arith.addf %171, %172 : vector<2x32xf32>
    %174 = arith.negf %173 : vector<2x32xf32>
    %175 = math.exp %174 : vector<2x32xf32>
    %cst_58 = arith.constant 1.000000e+00 : f32
    %176 = vector.broadcast %cst_58 : f32 to vector<2x32xf32>
    %177 = arith.addf %176, %175 : vector<2x32xf32>
    %178 = arith.divf %176, %177 : vector<2x32xf32>
    %179 = vector.extract_strided_slice %161 {offsets = [0, 64], sizes = [2, 32], strides = [1, 1]} : vector<2x96xf32> to vector<2x32xf32>
    %180 = vector.extract_strided_slice %162 {offsets = [0, 64], sizes = [2, 32], strides = [1, 1]} : vector<2x96xf32> to vector<2x32xf32>
    %181 = arith.addf %180, %21 : vector<2x32xf32>
    %182 = arith.mulf %170, %181 : vector<2x32xf32>
    %183 = arith.addf %179, %182 : vector<2x32xf32>
    %184 = math.tanh %183 : vector<2x32xf32>
    %cst_59 = arith.constant 1.000000e+00 : f32
    %185 = vector.broadcast %cst_59 : f32 to vector<2x32xf32>
    %186 = arith.subf %185, %178 : vector<2x32xf32>
    %187 = arith.mulf %186, %184 : vector<2x32xf32>
    %188 = arith.mulf %178, %155 : vector<2x32xf32>
    %189 = arith.addf %187, %188 : vector<2x32xf32>
    %c2_i32_60 = arith.constant 2 : i32
    %190 = arith.muli %c4_i32, %c2_i32_60 : i32
    %191 = arith.index_cast %190 : i32 to index
    %c0_61 = arith.constant 0 : index
    %192 = vector.load %arg16[%191, %c0_61] : memref<16x32xf32, #tpu.memory_space<vmem>>, vector<2x32xf32>
    tpu.vector_store %arg16[%191, %c0_61], %189 {strides = array<i32>} : memref<16x32xf32, #tpu.memory_space<vmem>>, vector<2x32xf32>,
    %c5_i32 = arith.constant 5 : i32
    %c2_i32_62 = arith.constant 2 : i32
    %193 = arith.muli %c5_i32, %c2_i32_62 : i32
    %194 = arith.index_cast %193 : i32 to index
    %c0_63 = arith.constant 0 : index
    %195 = vector.load %arg15[%194, %c0_63] : memref<16x96xf32, #tpu.memory_space<vmem>>, vector<2x96xf32>
    %cst_64 = arith.constant dense<0.000000e+00> : vector<2x96xf32>
    %196 = tpu.matmul %189, %18, %cst_64 {dimension_numbers = #tpu.dot_dimension_numbers<[1], [0], [0], [1], [0, 0, 1, 1], [], []>} : vector<2x32xf32>, vector<32x96xf32>, vector<2x96xf32> -> vector<2x96xf32>
    %197 = vector.extract_strided_slice %195 {offsets = [0, 0], sizes = [2, 32], strides = [1, 1]} : vector<2x96xf32> to vector<2x32xf32>
    %198 = vector.extract_strided_slice %196 {offsets = [0, 0], sizes = [2, 32], strides = [1, 1]} : vector<2x96xf32> to vector<2x32xf32>
    %199 = arith.addf %197, %198 : vector<2x32xf32>
    %200 = arith.negf %199 : vector<2x32xf32>
    %201 = math.exp %200 : vector<2x32xf32>
    %cst_65 = arith.constant 1.000000e+00 : f32
    %202 = vector.broadcast %cst_65 : f32 to vector<2x32xf32>
    %203 = arith.addf %202, %201 : vector<2x32xf32>
    %204 = arith.divf %202, %203 : vector<2x32xf32>
    %205 = vector.extract_strided_slice %195 {offsets = [0, 32], sizes = [2, 32], strides = [1, 1]} : vector<2x96xf32> to vector<2x32xf32>
    %206 = vector.extract_strided_slice %196 {offsets = [0, 32], sizes = [2, 32], strides = [1, 1]} : vector<2x96xf32> to vector<2x32xf32>
    %207 = arith.addf %205, %206 : vector<2x32xf32>
    %208 = arith.negf %207 : vector<2x32xf32>
    %209 = math.exp %208 : vector<2x32xf32>
    %cst_66 = arith.constant 1.000000e+00 : f32
    %210 = vector.broadcast %cst_66 : f32 to vector<2x32xf32>
    %211 = arith.addf %210, %209 : vector<2x32xf32>
    %212 = arith.divf %210, %211 : vector<2x32xf32>
    %213 = vector.extract_strided_slice %195 {offsets = [0, 64], sizes = [2, 32], strides = [1, 1]} : vector<2x96xf32> to vector<2x32xf32>
    %214 = vector.extract_strided_slice %196 {offsets = [0, 64], sizes = [2, 32], strides = [1, 1]} : vector<2x96xf32> to vector<2x32xf32>
    %215 = arith.addf %214, %21 : vector<2x32xf32>
    %216 = arith.mulf %204, %215 : vector<2x32xf32>
    %217 = arith.addf %213, %216 : vector<2x32xf32>
    %218 = math.tanh %217 : vector<2x32xf32>
    %cst_67 = arith.constant 1.000000e+00 : f32
    %219 = vector.broadcast %cst_67 : f32 to vector<2x32xf32>
    %220 = arith.subf %219, %212 : vector<2x32xf32>
    %221 = arith.mulf %220, %218 : vector<2x32xf32>
    %222 = arith.mulf %212, %189 : vector<2x32xf32>
    %223 = arith.addf %221, %222 : vector<2x32xf32>
    %c2_i32_68 = arith.constant 2 : i32
    %224 = arith.muli %c5_i32, %c2_i32_68 : i32
    %225 = arith.index_cast %224 : i32 to index
    %c0_69 = arith.constant 0 : index
    %226 = vector.load %arg16[%225, %c0_69] : memref<16x32xf32, #tpu.memory_space<vmem>>, vector<2x32xf32>
    tpu.vector_store %arg16[%225, %c0_69], %223 {strides = array<i32>} : memref<16x32xf32, #tpu.memory_space<vmem>>, vector<2x32xf32>,
    %c6_i32 = arith.constant 6 : i32
    %c2_i32_70 = arith.constant 2 : i32
    %227 = arith.muli %c6_i32, %c2_i32_70 : i32
    %228 = arith.index_cast %227 : i32 to index
    %c0_71 = arith.constant 0 : index
    %229 = vector.load %arg15[%228, %c0_71] : memref<16x96xf32, #tpu.memory_space<vmem>>, vector<2x96xf32>
    %cst_72 = arith.constant dense<0.000000e+00> : vector<2x96xf32>
    %230 = tpu.matmul %223, %18, %cst_72 {dimension_numbers = #tpu.dot_dimension_numbers<[1], [0], [0], [1], [0, 0, 1, 1], [], []>} : vector<2x32xf32>, vector<32x96xf32>, vector<2x96xf32> -> vector<2x96xf32>
    %231 = vector.extract_strided_slice %229 {offsets = [0, 0], sizes = [2, 32], strides = [1, 1]} : vector<2x96xf32> to vector<2x32xf32>
    %232 = vector.extract_strided_slice %230 {offsets = [0, 0], sizes = [2, 32], strides = [1, 1]} : vector<2x96xf32> to vector<2x32xf32>
    %233 = arith.addf %231, %232 : vector<2x32xf32>
    %234 = arith.negf %233 : vector<2x32xf32>
    %235 = math.exp %234 : vector<2x32xf32>
    %cst_73 = arith.constant 1.000000e+00 : f32
    %236 = vector.broadcast %cst_73 : f32 to vector<2x32xf32>
    %237 = arith.addf %236, %235 : vector<2x32xf32>
    %238 = arith.divf %236, %237 : vector<2x32xf32>
    %239 = vector.extract_strided_slice %229 {offsets = [0, 32], sizes = [2, 32], strides = [1, 1]} : vector<2x96xf32> to vector<2x32xf32>
    %240 = vector.extract_strided_slice %230 {offsets = [0, 32], sizes = [2, 32], strides = [1, 1]} : vector<2x96xf32> to vector<2x32xf32>
    %241 = arith.addf %239, %240 : vector<2x32xf32>
    %242 = arith.negf %241 : vector<2x32xf32>
    %243 = math.exp %242 : vector<2x32xf32>
    %cst_74 = arith.constant 1.000000e+00 : f32
    %244 = vector.broadcast %cst_74 : f32 to vector<2x32xf32>
    %245 = arith.addf %244, %243 : vector<2x32xf32>
    %246 = arith.divf %244, %245 : vector<2x32xf32>
    %247 = vector.extract_strided_slice %229 {offsets = [0, 64], sizes = [2, 32], strides = [1, 1]} : vector<2x96xf32> to vector<2x32xf32>
    %248 = vector.extract_strided_slice %230 {offsets = [0, 64], sizes = [2, 32], strides = [1, 1]} : vector<2x96xf32> to vector<2x32xf32>
    %249 = arith.addf %248, %21 : vector<2x32xf32>
    %250 = arith.mulf %238, %249 : vector<2x32xf32>
    %251 = arith.addf %247, %250 : vector<2x32xf32>
    %252 = math.tanh %251 : vector<2x32xf32>
    %cst_75 = arith.constant 1.000000e+00 : f32
    %253 = vector.broadcast %cst_75 : f32 to vector<2x32xf32>
    %254 = arith.subf %253, %246 : vector<2x32xf32>
    %255 = arith.mulf %254, %252 : vector<2x32xf32>
    %256 = arith.mulf %246, %223 : vector<2x32xf32>
    %257 = arith.addf %255, %256 : vector<2x32xf32>
    %c2_i32_76 = arith.constant 2 : i32
    %258 = arith.muli %c6_i32, %c2_i32_76 : i32
    %259 = arith.index_cast %258 : i32 to index
    %c0_77 = arith.constant 0 : index
    %260 = vector.load %arg16[%259, %c0_77] : memref<16x32xf32, #tpu.memory_space<vmem>>, vector<2x32xf32>
    tpu.vector_store %arg16[%259, %c0_77], %257 {strides = array<i32>} : memref<16x32xf32, #tpu.memory_space<vmem>>, vector<2x32xf32>,
    %c7_i32 = arith.constant 7 : i32
    %c2_i32_78 = arith.constant 2 : i32
    %261 = arith.muli %c7_i32, %c2_i32_78 : i32
    %262 = arith.index_cast %261 : i32 to index
    %c0_79 = arith.constant 0 : index
    %263 = vector.load %arg15[%262, %c0_79] : memref<16x96xf32, #tpu.memory_space<vmem>>, vector<2x96xf32>
    %cst_80 = arith.constant dense<0.000000e+00> : vector<2x96xf32>
    %264 = tpu.matmul %257, %18, %cst_80 {dimension_numbers = #tpu.dot_dimension_numbers<[1], [0], [0], [1], [0, 0, 1, 1], [], []>} : vector<2x32xf32>, vector<32x96xf32>, vector<2x96xf32> -> vector<2x96xf32>
    %265 = vector.extract_strided_slice %263 {offsets = [0, 0], sizes = [2, 32], strides = [1, 1]} : vector<2x96xf32> to vector<2x32xf32>
    %266 = vector.extract_strided_slice %264 {offsets = [0, 0], sizes = [2, 32], strides = [1, 1]} : vector<2x96xf32> to vector<2x32xf32>
    %267 = arith.addf %265, %266 : vector<2x32xf32>
    %268 = arith.negf %267 : vector<2x32xf32>
    %269 = math.exp %268 : vector<2x32xf32>
    %cst_81 = arith.constant 1.000000e+00 : f32
    %270 = vector.broadcast %cst_81 : f32 to vector<2x32xf32>
    %271 = arith.addf %270, %269 : vector<2x32xf32>
    %272 = arith.divf %270, %271 : vector<2x32xf32>
    %273 = vector.extract_strided_slice %263 {offsets = [0, 32], sizes = [2, 32], strides = [1, 1]} : vector<2x96xf32> to vector<2x32xf32>
    %274 = vector.extract_strided_slice %264 {offsets = [0, 32], sizes = [2, 32], strides = [1, 1]} : vector<2x96xf32> to vector<2x32xf32>
    %275 = arith.addf %273, %274 : vector<2x32xf32>
    %276 = arith.negf %275 : vector<2x32xf32>
    %277 = math.exp %276 : vector<2x32xf32>
    %cst_82 = arith.constant 1.000000e+00 : f32
    %278 = vector.broadcast %cst_82 : f32 to vector<2x32xf32>
    %279 = arith.addf %278, %277 : vector<2x32xf32>
    %280 = arith.divf %278, %279 : vector<2x32xf32>
    %281 = vector.extract_strided_slice %263 {offsets = [0, 64], sizes = [2, 32], strides = [1, 1]} : vector<2x96xf32> to vector<2x32xf32>
    %282 = vector.extract_strided_slice %264 {offsets = [0, 64], sizes = [2, 32], strides = [1, 1]} : vector<2x96xf32> to vector<2x32xf32>
    %283 = arith.addf %282, %21 : vector<2x32xf32>
    %284 = arith.mulf %272, %283 : vector<2x32xf32>
    %285 = arith.addf %281, %284 : vector<2x32xf32>
    %286 = math.tanh %285 : vector<2x32xf32>
    %cst_83 = arith.constant 1.000000e+00 : f32
    %287 = vector.broadcast %cst_83 : f32 to vector<2x32xf32>
    %288 = arith.subf %287, %280 : vector<2x32xf32>
    %289 = arith.mulf %288, %286 : vector<2x32xf32>
    %290 = arith.mulf %280, %257 : vector<2x32xf32>
    %291 = arith.addf %289, %290 : vector<2x32xf32>
    %c2_i32_84 = arith.constant 2 : i32
    %292 = arith.muli %c7_i32, %c2_i32_84 : i32
    %293 = arith.index_cast %292 : i32 to index
    %c0_85 = arith.constant 0 : index
    %294 = vector.load %arg16[%293, %c0_85] : memref<16x32xf32, #tpu.memory_space<vmem>>, vector<2x32xf32>
    tpu.vector_store %arg16[%293, %c0_85], %291 {strides = array<i32>} : memref<16x32xf32, #tpu.memory_space<vmem>>, vector<2x32xf32>,
    %c8_i32 = arith.constant 8 : i32
    %c0_86 = arith.constant 0 : index
    %c0_87 = arith.constant 0 : index
    %295 = vector.load %arg14[%c0_86, %c0_87] : memref<2x32xf32, #tpu.memory_space<vmem>>, vector<2x32xf32>
    tpu.vector_store %arg14[%c0_86, %c0_87], %291 {strides = array<i32>} : memref<2x32xf32, #tpu.memory_space<vmem>>, vector<2x32xf32>,
    %c0_88 = arith.constant 0 : index
    %c0_89 = arith.constant 0 : index
    %296 = vector.load %arg13[%c0_88, %c0_89] : memref<2x32xf32, #tpu.memory_space<vmem>>, vector<2x32xf32>
    tpu.vector_store %arg13[%c0_88, %c0_89], %291 {strides = array<i32>} : memref<2x32xf32, #tpu.memory_space<vmem>>, vector<2x32xf32>,
    %c0_90 = arith.constant 0 : index
    %c0_91 = arith.constant 0 : index
    %297 = vector.load %arg16[%c0_90, %c0_91] : memref<16x32xf32, #tpu.memory_space<vmem>>, vector<16x32xf32>
    %298 = arith.truncf %297 : vector<16x32xf32> to vector<16x32xbf16>
    %c0_92 = arith.constant 0 : index
    %c0_93 = arith.constant 0 : index
    %299 = vector.load %arg10[%c0_92, %c0_93] : memref<32x128xbf16, #tpu.memory_space<vmem>>, vector<32x128xbf16>
    %cst_94 = arith.constant dense<0.000000e+00> : vector<16x128xf32>
    %300 = tpu.matmul %298, %299, %cst_94 {dimension_numbers = #tpu.dot_dimension_numbers<[1], [0], [0], [1], [0, 0, 1, 1], [], []>} : vector<16x32xbf16>, vector<32x128xbf16>, vector<16x128xf32> -> vector<16x128xf32>
    %c0_95 = arith.constant 0 : index
    %c0_96 = arith.constant 0 : index
    %301 = vector.load %arg11[%c0_95, %c0_96] : memref<1x128xf32, #tpu.memory_space<vmem>>, vector<1x128xf32>
    %302 = vector.broadcast %301 : vector<1x128xf32> to vector<16x128xf32>
    %303 = arith.addf %300, %302 : vector<16x128xf32>
    %c0_97 = arith.constant 0 : index
    %c0_98 = arith.constant 0 : index
    %304 = vector.load %arg12[%c0_97, %c0_98] : memref<16x128xf32, #tpu.memory_space<vmem>>, vector<16x128xf32>
    tpu.vector_store %arg12[%c0_97, %c0_98], %303 {strides = array<i32>} : memref<16x128xf32, #tpu.memory_space<vmem>>, vector<16x128xf32>,
    return
  }
  func.func @transform_0(%arg0: i32) -> (i32, i32) {
    %c0_i32 = arith.constant 0 : i32
    %c0_i32_0 = arith.constant 0 : i32
    return %arg0, %c0_i32 : i32, i32
  }
  func.func @transform_1(%arg0: i32) -> (i32, i32) {
    %c0_i32 = arith.constant 0 : i32
    %c0_i32_0 = arith.constant 0 : i32
    return %arg0, %c0_i32 : i32, i32
  }
  func.func @transform_2(%arg0: i32) -> (i32, i32) {
    %c0_i32 = arith.constant 0 : i32
    %c0_i32_0 = arith.constant 0 : i32
    %c0_i32_1 = arith.constant 0 : i32
    return %c0_i32, %c0_i32_0 : i32, i32
  }
  func.func @transform_3(%arg0: i32) -> (i32, i32) {
    %c0_i32 = arith.constant 0 : i32
    %c0_i32_0 = arith.constant 0 : i32
    %c0_i32_1 = arith.constant 0 : i32
    return %c0_i32, %c0_i32_0 : i32, i32
  }
  func.func @transform_4(%arg0: i32) -> (i32, i32) {
    %c0_i32 = arith.constant 0 : i32
    %c0_i32_0 = arith.constant 0 : i32
    %c0_i32_1 = arith.constant 0 : i32
    return %c0_i32, %c0_i32_0 : i32, i32
  }
  func.func @transform_5(%arg0: i32) -> (i32, i32) {
    %c0_i32 = arith.constant 0 : i32
    %c0_i32_0 = arith.constant 0 : i32
    %c0_i32_1 = arith.constant 0 : i32
    return %c0_i32, %c0_i32_0 : i32, i32
  }
  func.func @transform_6(%arg0: i32) -> (i32, i32) {
    %c0_i32 = arith.constant 0 : i32
    %c0_i32_0 = arith.constant 0 : i32
    %c0_i32_1 = arith.constant 0 : i32
    return %c0_i32, %c0_i32_0 : i32, i32
  }
  func.func @transform_7(%arg0: i32) -> (i32, i32) {
    %c0_i32 = arith.constant 0 : i32
    %c0_i32_0 = arith.constant 0 : i32
    %c0_i32_1 = arith.constant 0 : i32
    return %c0_i32, %c0_i32_0 : i32, i32
  }
  func.func @transform_8(%arg0: i32) -> (i32, i32) {
    %c0_i32 = arith.constant 0 : i32
    %c0_i32_0 = arith.constant 0 : i32
    %c0_i32_1 = arith.constant 0 : i32
    return %c0_i32, %c0_i32_0 : i32, i32
  }
  func.func @transform_9(%arg0: i32) -> (i32, i32) {
    %c0_i32 = arith.constant 0 : i32
    %c0_i32_0 = arith.constant 0 : i32
    %c0_i32_1 = arith.constant 0 : i32
    return %c0_i32, %c0_i32_0 : i32, i32
  }
  func.func @transform_10(%arg0: i32) -> (i32, i32) {
    %c0_i32 = arith.constant 0 : i32
    %c0_i32_0 = arith.constant 0 : i32
    %c0_i32_1 = arith.constant 0 : i32
    return %c0_i32, %c0_i32_0 : i32, i32
  }
  func.func @transform_11(%arg0: i32) -> (i32, i32) {
    %c0_i32 = arith.constant 0 : i32
    %c0_i32_0 = arith.constant 0 : i32
    return %arg0, %c0_i32 : i32, i32
  }
  func.func @transform_12(%arg0: i32) -> (i32, i32) {
    %c0_i32 = arith.constant 0 : i32
    %c0_i32_0 = arith.constant 0 : i32
    %c0_i32_1 = arith.constant 0 : i32
    return %c0_i32, %c0_i32_0 : i32, i32
  }
}

module attributes {stable_mosaic.version = 11 : i64} {
  func.func @sample_mlp_kernel(%arg0: memref<70x16xbf16, #tpu.memory_space<vmem>>, %arg1: memref<64x32xf32, #tpu.memory_space<vmem>>, %arg2: memref<4x16x32xbf16, #tpu.memory_space<vmem>>, %arg3: memref<32x32xbf16, #tpu.memory_space<vmem>>, %arg4: memref<1x32xf32, #tpu.memory_space<vmem>>, %arg5: memref<32x16xbf16, #tpu.memory_space<vmem>>, %arg6: memref<1x16xf32, #tpu.memory_space<vmem>>, %arg7: memref<64x16xf32, #tpu.memory_space<vmem>>) attributes {dimension_semantics = [], scalar_prefetch = 0 : i64, scratch_operands = 0 : i64, tpu.core_type = #tpu.core_type<tc>} {
    %c0 = arith.constant 0 : index
    %c0_0 = arith.constant 0 : index
    %0 = vector.load %arg1[%c0, %c0_0] : memref<64x32xf32, #tpu.memory_space<vmem>>, vector<64x32xf32>
    %c0_1 = arith.constant 0 : index
    %c0_2 = arith.constant 0 : index
    %1 = vector.load %arg0[%c0_1, %c0_2] : memref<70x16xbf16, #tpu.memory_space<vmem>>, vector<64x16xbf16>
    %c0_3 = arith.constant 0 : index
    %c0_4 = arith.constant 0 : index
    %c0_5 = arith.constant 0 : index
    %2 = vector.load %arg2[%c0_3, %c0_4, %c0_5] : memref<4x16x32xbf16, #tpu.memory_space<vmem>>, vector<1x16x32xbf16>
    %3 = vector.shape_cast %2 : vector<1x16x32xbf16> to vector<16x32xbf16>
    %cst = arith.constant dense<0.000000e+00> : vector<64x32xf32>
    %4 = tpu.matmul %1, %3, %cst {dimension_numbers = #tpu.dot_dimension_numbers<[1], [0], [0], [1], [0, 0, 1, 1], [], []>} : vector<64x16xbf16>, vector<16x32xbf16>, vector<64x32xf32> -> vector<64x32xf32>
    %5 = arith.addf %0, %4 : vector<64x32xf32>
    %c2 = arith.constant 2 : index
    %c0_6 = arith.constant 0 : index
    %6 = vector.load %arg0[%c2, %c0_6] : memref<70x16xbf16, #tpu.memory_space<vmem>>, vector<64x16xbf16>
    %c1 = arith.constant 1 : index
    %c0_7 = arith.constant 0 : index
    %c0_8 = arith.constant 0 : index
    %7 = vector.load %arg2[%c1, %c0_7, %c0_8] : memref<4x16x32xbf16, #tpu.memory_space<vmem>>, vector<1x16x32xbf16>
    %8 = vector.shape_cast %7 : vector<1x16x32xbf16> to vector<16x32xbf16>
    %cst_9 = arith.constant dense<0.000000e+00> : vector<64x32xf32>
    %9 = tpu.matmul %6, %8, %cst_9 {dimension_numbers = #tpu.dot_dimension_numbers<[1], [0], [0], [1], [0, 0, 1, 1], [], []>} : vector<64x16xbf16>, vector<16x32xbf16>, vector<64x32xf32> -> vector<64x32xf32>
    %10 = arith.addf %5, %9 : vector<64x32xf32>
    %c4 = arith.constant 4 : index
    %c0_10 = arith.constant 0 : index
    %11 = vector.load %arg0[%c4, %c0_10] : memref<70x16xbf16, #tpu.memory_space<vmem>>, vector<64x16xbf16>
    %c2_11 = arith.constant 2 : index
    %c0_12 = arith.constant 0 : index
    %c0_13 = arith.constant 0 : index
    %12 = vector.load %arg2[%c2_11, %c0_12, %c0_13] : memref<4x16x32xbf16, #tpu.memory_space<vmem>>, vector<1x16x32xbf16>
    %13 = vector.shape_cast %12 : vector<1x16x32xbf16> to vector<16x32xbf16>
    %cst_14 = arith.constant dense<0.000000e+00> : vector<64x32xf32>
    %14 = tpu.matmul %11, %13, %cst_14 {dimension_numbers = #tpu.dot_dimension_numbers<[1], [0], [0], [1], [0, 0, 1, 1], [], []>} : vector<64x16xbf16>, vector<16x32xbf16>, vector<64x32xf32> -> vector<64x32xf32>
    %15 = arith.addf %10, %14 : vector<64x32xf32>
    %c6 = arith.constant 6 : index
    %c0_15 = arith.constant 0 : index
    %16 = vector.load %arg0[%c6, %c0_15] : memref<70x16xbf16, #tpu.memory_space<vmem>>, vector<64x16xbf16>
    %c3 = arith.constant 3 : index
    %c0_16 = arith.constant 0 : index
    %c0_17 = arith.constant 0 : index
    %17 = vector.load %arg2[%c3, %c0_16, %c0_17] : memref<4x16x32xbf16, #tpu.memory_space<vmem>>, vector<1x16x32xbf16>
    %18 = vector.shape_cast %17 : vector<1x16x32xbf16> to vector<16x32xbf16>
    %cst_18 = arith.constant dense<0.000000e+00> : vector<64x32xf32>
    %19 = tpu.matmul %16, %18, %cst_18 {dimension_numbers = #tpu.dot_dimension_numbers<[1], [0], [0], [1], [0, 0, 1, 1], [], []>} : vector<64x16xbf16>, vector<16x32xbf16>, vector<64x32xf32> -> vector<64x32xf32>
    %20 = arith.addf %15, %19 : vector<64x32xf32>
    %cst_19 = arith.constant 0.000000e+00 : f32
    %21 = vector.broadcast %cst_19 : f32 to vector<64x32xf32>
    %22 = arith.maximumf %20, %21 : vector<64x32xf32>
    %23 = arith.truncf %22 : vector<64x32xf32> to vector<64x32xbf16>
    %c0_20 = arith.constant 0 : index
    %c0_21 = arith.constant 0 : index
    %24 = vector.load %arg3[%c0_20, %c0_21] : memref<32x32xbf16, #tpu.memory_space<vmem>>, vector<32x32xbf16>
    %cst_22 = arith.constant dense<0.000000e+00> : vector<64x32xf32>
    %25 = tpu.matmul %23, %24, %cst_22 {dimension_numbers = #tpu.dot_dimension_numbers<[1], [0], [0], [1], [0, 0, 1, 1], [], []>} : vector<64x32xbf16>, vector<32x32xbf16>, vector<64x32xf32> -> vector<64x32xf32>
    %c0_23 = arith.constant 0 : index
    %c0_24 = arith.constant 0 : index
    %26 = vector.load %arg4[%c0_23, %c0_24] : memref<1x32xf32, #tpu.memory_space<vmem>>, vector<1x32xf32>
    %27 = vector.broadcast %26 : vector<1x32xf32> to vector<64x32xf32>
    %28 = arith.addf %25, %27 : vector<64x32xf32>
    %cst_25 = arith.constant 0.000000e+00 : f32
    %29 = vector.broadcast %cst_25 : f32 to vector<64x32xf32>
    %30 = arith.maximumf %28, %29 : vector<64x32xf32>
    %31 = arith.truncf %30 : vector<64x32xf32> to vector<64x32xbf16>
    %c0_26 = arith.constant 0 : index
    %c0_27 = arith.constant 0 : index
    %32 = vector.load %arg5[%c0_26, %c0_27] : memref<32x16xbf16, #tpu.memory_space<vmem>>, vector<32x16xbf16>
    %cst_28 = arith.constant dense<0.000000e+00> : vector<64x16xf32>
    %33 = tpu.matmul %31, %32, %cst_28 {dimension_numbers = #tpu.dot_dimension_numbers<[1], [0], [0], [1], [0, 0, 1, 1], [], []>} : vector<64x32xbf16>, vector<32x16xbf16>, vector<64x16xf32> -> vector<64x16xf32>
    %c0_29 = arith.constant 0 : index
    %c0_30 = arith.constant 0 : index
    %34 = vector.load %arg6[%c0_29, %c0_30] : memref<1x16xf32, #tpu.memory_space<vmem>>, vector<1x16xf32>
    %35 = vector.broadcast %34 : vector<1x16xf32> to vector<64x16xf32>
    %36 = arith.addf %33, %35 : vector<64x16xf32>
    %cst_31 = arith.constant dense<0xFF800000> : vector<64xf32>
    %37 = vector.multi_reduction <maximumf>, %36, %cst_31 [1] : vector<64x16xf32> to vector<64xf32>
    %38 = vector.shape_cast %37 : vector<64xf32> to vector<64x1xf32>
    %39 = vector.broadcast %38 : vector<64x1xf32> to vector<64x16xf32>
    %40 = arith.subf %36, %39 : vector<64x16xf32>
    %41 = math.exp %40 : vector<64x16xf32>
    %cst_32 = arith.constant dense<0.000000e+00> : vector<64xf32>
    %42 = vector.multi_reduction <add>, %41, %cst_32 [1] : vector<64x16xf32> to vector<64xf32>
    %43 = vector.shape_cast %42 : vector<64xf32> to vector<64x1xf32>
    %44 = math.log %43 : vector<64x1xf32>
    %45 = arith.addf %38, %44 : vector<64x1xf32>
    %46 = vector.broadcast %45 : vector<64x1xf32> to vector<64x16xf32>
    %47 = arith.subf %36, %46 : vector<64x16xf32>
    %c0_33 = arith.constant 0 : index
    %c0_34 = arith.constant 0 : index
    %48 = vector.load %arg7[%c0_33, %c0_34] : memref<64x16xf32, #tpu.memory_space<vmem>>, vector<64x16xf32>
    tpu.vector_store %arg7[%c0_33, %c0_34], %47 {strides = array<i32>} : memref<64x16xf32, #tpu.memory_space<vmem>>, vector<64x16xf32>,
    return
  }
}

</mosaic_0001>

<llo_original>
// kernel: predictor_forward.3
$region0: #{predictor_forward.3}
  #allocation0 [shape = 'u32[]', space=smem, size = 0x4, offset = 0x4, fixed_abs, tag = 'smem constant byte address 0x4 - core index']
  #allocation1 [shape = 'u32[144,128]{1,0:T(1,128)}', space=vmem, size = 0x12000, scoped, tag = 'internal scratch']
  #allocation2 [shape = 'f32[2,32]{1,0:T(2,128)}', space=vmem, size = 0x400, scoped, tag = 'scratch operand']
  #allocation3 [shape = 'f32[4,96]{1,0:T(4,128)}', space=vmem, size = 0x800, scoped, tag = 'scratch operand']
  #allocation4 [shape = 'f32[4,32]{1,0:T(4,128)}', space=vmem, size = 0x800, scoped, tag = 'scratch operand']
  %s0 = inlined_call_operand.vmem [shape: bf16[4,16], index: 0, kind: input, shape index: {}]
  %s1 = inlined_call_operand.vmem [shape: f32[2,32], index: 1, kind: input, shape index: {}]
  %s2 = inlined_call_operand.vmem [shape: bf16[16,96], index: 2, kind: input, shape index: {}]
  %s3 = inlined_call_operand.vmem [shape: f32[1,96], index: 3, kind: input, shape index: {}]
  %s4 = inlined_call_operand.vmem [shape: f32[32,96], index: 4, kind: input, shape index: {}]
  %s5 = inlined_call_operand.vmem [shape: f32[1,32], index: 5, kind: input, shape index: {}]
  %s6 = inlined_call_operand.vmem [shape: bf16[32,128], index: 6, kind: input, shape index: {}]
  %s7 = inlined_call_operand.vmem [shape: f32[1,128], index: 7, kind: input, shape index: {}]
  %s8 = inlined_call_operand.vmem [shape: f32[4,128], index: 8, kind: output, shape index: {0}]
  %s9 = inlined_call_operand.hbm [shape: f32[2,32], index: 9, kind: output, shape index: {1}]
  %10 = xla_tuple %s8, %s9
  %s11 = sld [smem:[#allocation0]]
  $region54: #{predictor_forward.3} parent=0
    _
  %s13 = ssub.s32 1, %s11
  %s14 = scalar_select 0, %s13, %s11
  $region1: #{predictor_forward.3} parent=0
    #allocation5 [shape = 'u8[1024]{0}', space=vmem, size = 0x400, scoped, tag = 'output window, operand 1, single buffered']
    #allocation6 [shape = 's32[1]{0}', space=sflag, size = 0x4, scoped, tag = 'scoped memory for predictor_forward.3']
    %15 = vsyncpa [#allocation6], 0
    // Predicated region
    $region2: #{predictor_forward.3} parent=1 // pred_check
      _
    $region3: #{predictor_forward.3} parent=1 // pred_check_branch
      %17 = sbr.rel (0) target = $region5
    $region4: #{predictor_forward.3} parent=1 // pred_region
      _
    $region5: #{predictor_forward.3} parent=1 // pred_fallthru
      _
    // Predicated region
    $region6: #{predictor_forward.3} parent=1 // pred_check
      _
    $region7: #{predictor_forward.3} parent=1 // pred_check_branch
      %19 = sbr.rel (0) target = $region9
    $region8: #{predictor_forward.3} parent=1 // pred_region
      _
    $region9: #{predictor_forward.3} parent=1 // pred_fallthru
      _
    // Predicated region
    $region10: #{predictor_forward.3} parent=1 // pred_check
      _
    $region11: #{predictor_forward.3} parent=1 // pred_check_branch
      %21 = sbr.rel (0) target = $region13
    $region12: #{predictor_forward.3} parent=1 // pred_region
      _
    $region13: #{predictor_forward.3} parent=1 // pred_fallthru
      _
    // Predicated region
    $region14: #{predictor_forward.3} parent=1 // pred_check
      _
    $region15: #{predictor_forward.3} parent=1 // pred_check_branch
      %23 = sbr.rel (0) target = $region17
    $region16: #{predictor_forward.3} parent=1 // pred_region
      _
    $region17: #{predictor_forward.3} parent=1 // pred_fallthru
      _
    // Predicated region
    $region18: #{predictor_forward.3} parent=1 // pred_check
      _
    $region19: #{predictor_forward.3} parent=1 // pred_check_branch
      %25 = sbr.rel (0) target = $region21
    $region20: #{predictor_forward.3} parent=1 // pred_region
      _
    $region21: #{predictor_forward.3} parent=1 // pred_fallthru
      _
    // Predicated region
    $region22: #{predictor_forward.3} parent=1 // pred_check
      _
    $region23: #{predictor_forward.3} parent=1 // pred_check_branch
      %27 = sbr.rel (0) target = $region25
    $region24: #{predictor_forward.3} parent=1 // pred_region
      _
    $region25: #{predictor_forward.3} parent=1 // pred_fallthru
      _
    // Predicated region
    $region26: #{predictor_forward.3} parent=1 // pred_check
      _
    $region27: #{predictor_forward.3} parent=1 // pred_check_branch
      %29 = sbr.rel (0) target = $region29
    $region28: #{predictor_forward.3} parent=1 // pred_region
      _
    $region29: #{predictor_forward.3} parent=1 // pred_fallthru
      _
    // Predicated region
    $region30: #{predictor_forward.3} parent=1 // pred_check
      _
    $region31: #{predictor_forward.3} parent=1 // pred_check_branch
      %31 = sbr.rel (0) target = $region33
    $region32: #{predictor_forward.3} parent=1 // pred_region
      _
    $region33: #{predictor_forward.3} parent=1 // pred_fallthru
      _
    %p33 = scmp.eq.s32.totalorder 0, 0
    // Predicated region
    $region34: #{predictor_forward.3} parent=1 // pred_check
      %p34 = pneg %p33
    $region35: #{predictor_forward.3} parent=1 // pred_check_branch
      %36 = sbr.rel (%p34) target = $region37
    $region36: #{predictor_forward.3} parent=1 // pred_region
      %v37 = vld [vmem:[%s1] sm:$0x3]
      %vm38 = vcmask 254976
      %39 = vst.msk [vmem:[#allocation2] sm:$0x3] %vm38, %v37
    $region37: #{predictor_forward.3} parent=1 // pred_fallthru
      _
    %v40 = vld [vmem:[%s0] sm:$0x3]
    %v41 = vld [vmem:[%s2] sm:$0xf]
    %v42 = vld [vmem:[%s2 + $0x4] sm:$0xf]
    %v43 = vld [vmem:[%s3] sm:$0x1]
    %v45 = vlaneseq
    %v46 = vshrl.u32 %v45, 7
    %v47 = vsub.s32 0, %v46
    %v48 = vrot.slane %v43, %v47
    %v52 = vunpack.c.l.b16 %v41
    %v53 = vunpack.c.l.b16 %v42
    %v54 = vpack.c.b16 %v53, %v52
    %vm56 = vcmask 130048
    %v58 = vsel %vm56, %v40, 0
    %60 = vmatprep.subr.bf16.mxu0 0
    %61 = vmatpush1.bf16.msra.mxu0 0
    %62 = vmatprep.subr.bf16.mxu0 0
    %63 = vmatpush1.bf16.msra.mxu0 0
    %64 = vmatprep.subr.bf16.mxu0 0
    %65 = vmatpush1.bf16.msra.mxu0 0
    %66 = vmatprep.subr.bf16.mxu0 0
    %67 = vmatpush1.bf16.msra.mxu0 0
    %68 = vmatprep.subr.bf16.mxu0 0
    %69 = vmatpush1.bf16.msra.mxu0 0
    %70 = vmatprep.subr.bf16.mxu0 0
    %71 = vmatpush1.bf16.msra.mxu0 0
    %72 = vmatprep.subr.bf16.mxu0 0
    %73 = vmatpush1.bf16.msra.mxu0 0
    %74 = vmatprep.subr.bf16.mxu0 0
    %75 = vmatpush1.bf16.msra.mxu0 %v54
    %76 = vmatprep.subr.bf16.mxu0 0
    %77 = vmatpush2.bf16.msra.mxu0 0
    %78 = vmatprep.subr.bf16.mxu0 0
    %79 = vmatpush2.bf16.msra.mxu0 0
    %80 = vmatprep.subr.bf16.mxu0 0
    %81 = vmatpush2.bf16.msra.mxu0 0
    %82 = vmatprep.subr.bf16.mxu0 0
    %83 = vmatpush2.bf16.msra.mxu0 0
    %84 = vmatprep.subr.bf16.mxu0 0
    %85 = vmatpush2.bf16.msra.mxu0 0
    %86 = vmatprep.subr.bf16.mxu0 0
    %87 = vmatpush2.bf16.msra.mxu0 0
    %88 = vmatprep.subr.bf16.mxu0 0
    %89 = vmatpush2.bf16.msra.mxu0 0
    %90 = vmatprep.subr.bf16.mxu0 0
    %91 = vmatpush2.bf16.msra.mxu0 0
    %92 = vmatprep.mubr.bf16.mxu0 0
    %93 = vmatmul.mubr.bf16.gmra.mxu0 %v58
    %v94 = vpop.f32.mrf.mxu0
    %v95 = vadd.f32 %v48, %v94
    %v96 = vpop.f32.mrf.mxu0
    %v97 = vpop.f32.mrf.mxu0
    %v98 = vpop.f32.mrf.mxu0
    %99 = vdwg.mxu0
    %vm100 = vcmask 781312
    %101 = vst.msk [vmem:[#allocation3] sm:$0xf] %vm100, %v95
    %v102 = vld [vmem:[%s4] sm:$0xff]
    %v103 = vld [vmem:[%s4 + $0x8] sm:$0xff]
    %v104 = vld [vmem:[%s4 + $0x10] sm:$0xff]
    %v105 = vld [vmem:[%s4 + $0x18] sm:$0xff]
    %v106 = vld [vmem:[%s5] sm:$0x1]
    %v108 = vlaneseq
    %v109 = vshrl.u32 %v108, 7
    %v110 = vsub.s32 0, %v109
    %v111 = vrot.slane %v106, %v110
    %v112 = vld [vmem:[#allocation2] sm:$0x3]
    %v113 = vld [vmem:[#allocation3] sm:$0x3]
    %vm114 = vcmask 261120
    %v116 = vsel %vm114, %v112, 0
    %118 = vmatprep.subr.mxu0 0.0
    %119 = vmatpush1.msra.mxu0 0.0
    %120 = vmatprep.subr.mxu0 0.0
    %121 = vmatpush1.msra.mxu0 0.0
    %122 = vmatprep.subr.mxu0 0.0
    %123 = vmatpush1.msra.mxu0 0.0
    %124 = vmatprep.subr.mxu0 0.0
    %125 = vmatpush1.msra.mxu0 0.0
    %126 = vmatprep.subr.mxu0 0.0
    %127 = vmatpush1.msra.mxu0 0.0
    %128 = vmatprep.subr.mxu0 0.0
    %129 = vmatpush1.msra.mxu0 0.0
    %130 = vmatprep.subr.mxu0 0.0
    %131 = vmatpush1.msra.mxu0 0.0
    %132 = vmatprep.subr.mxu0 0.0
    %133 = vmatpush1.msra.mxu0 0.0
    %134 = vmatprep.subr.mxu0 0.0
    %135 = vmatpush1.msra.mxu0 0.0
    %136 = vmatprep.subr.mxu0 0.0
    %137 = vmatpush1.msra.mxu0 0.0
    %138 = vmatprep.subr.mxu0 0.0
    %139 = vmatpush1.msra.mxu0 0.0
    %140 = vmatprep.subr.mxu0 0.0
    %141 = vmatpush1.msra.mxu0 0.0
    %142 = vmatprep.subr.mxu0 0.0
    %143 = vmatpush1.msra.mxu0 %v105
    %144 = vmatprep.subr.mxu0 0.0
    %145 = vmatpush1.msra.mxu0 %v104
    %146 = vmatprep.subr.mxu0 0.0
    %147 = vmatpush1.msra.mxu0 %v103
    %148 = vmatprep.subr.mxu0 0.0
    %149 = vmatpush1.msra.mxu0 %v102
    %150 = vmatprep.subr.mxu0 0.0
    %151 = vmatpush2.msra.mxu0 0.0
    %152 = vmatprep.subr.mxu0 0.0
    %153 = vmatpush2.msra.mxu0 0.0
    %154 = vmatprep.subr.mxu0 0.0
    %155 = vmatpush2.msra.mxu0 0.0
    %156 = vmatprep.subr.mxu0 0.0
    %157 = vmatpush2.msra.mxu0 0.0
    %158 = vmatprep.subr.mxu0 0.0
    %159 = vmatpush2.msra.mxu0 0.0
    %160 = vmatprep.subr.mxu0 0.0
    %161 = vmatpush2.msra.mxu0 0.0
    %162 = vmatprep.subr.mxu0 0.0
    %163 = vmatpush2.msra.mxu0 0.0
    %164 = vmatprep.subr.mxu0 0.0
    %165 = vmatpush2.msra.mxu0 0.0
    %166 = vmatprep.subr.mxu0 0.0
    %167 = vmatpush2.msra.mxu0 0.0
    %168 = vmatprep.subr.mxu0 0.0
    %169 = vmatpush2.msra.mxu0 0.0
    %170 = vmatprep.subr.mxu0 0.0
    %171 = vmatpush2.msra.mxu0 0.0
    %172 = vmatprep.subr.mxu0 0.0
    %173 = vmatpush2.msra.mxu0 0.0
    %174 = vmatprep.subr.mxu0 0.0
    %175 = vmatpush2.msra.mxu0 0.0
    %176 = vmatprep.subr.mxu0 0.0
    %177 = vmatpush2.msra.mxu0 0.0
    %178 = vmatprep.subr.mxu0 0.0
    %179 = vmatpush2.msra.mxu0 0.0
    %180 = vmatprep.subr.mxu0 0.0
    %181 = vmatpush2.msra.mxu0 0.0
    %182 = vmatprep.mubr.f32.mxu0 0.0
    %183 = vmatmul.mubr.f32.gmra.mxu0 %v116
    %v184 = vpop.f32.mrf.mxu0
    %v185 = vadd.f32 0.0, %v184
    %v186 = vpop.f32.mrf.mxu0
    %187 = vdwg.mxu0
    %v188 = vadd.f32 %v113, %v185
    %v189 = vxor.u32 %v188, 2147483648
    %v190 = vmul.f32 %v189, 1.442695
    %v191 = vpow.pop %v190
    %v192 = vadd.f32 %v191, 1.0
    %v193 = vrcp.pop %v192
    %v194 = vmul.f32 1.0, %v193
    %195 = vrot.lane.b32.xlu0 %v111, 64
    %v196 = vpop.permute.xlu0 %195
    %v198 = vadd.f32 %v185, %v196
    %200 = vrot.lane.b32.xlu0 %v198, 64
    %v201 = vpop.permute.xlu0 %200
    %v203 = vmul.f32 %v194, %v201
    %205 = vrot.lane.b32.xlu0 %v203, 64
    %v206 = vpop.permute.xlu0 %205
    %v208 = vadd.f32 %v113, %v206
    %v209 = vtanh.pop %v208
    %v210 = vsub.f32 1.0, %v194
    %212 = vrot.lane.b32.xlu0 %v209, 96
    %v213 = vpop.permute.xlu0 %212
    %v215 = vmul.f32 %v210, %v213
    %216 = vrot.lane.b32.xlu0 %v112, 32
    %v217 = vpop.permute.xlu0 %216
    %v219 = vmul.f32 %v194, %v217
    %v220 = vadd.f32 %v215, %v219
    %222 = vrot.lane.b32.xlu0 %v220, 96
    %v223 = vpop.permute.xlu0 %222
    %vm225 = vcmask 254976
    %226 = vst.msk [vmem:[#allocation4] sm:$0x3] %vm225, %v223
    %v227 = vld [vmem:[#allocation3 + $0x2] sm:$0x3]
    %v228 = vsel %vm114, %v223, 0
    %230 = vmatprep.subr.mxu0 0.0
    %231 = vmatpush1.msra.mxu0 0.0
    %232 = vmatprep.subr.mxu0 0.0
    %233 = vmatpush1.msra.mxu0 0.0
    %234 = vmatprep.subr.mxu0 0.0
    %235 = vmatpush1.msra.mxu0 0.0
    %236 = vmatprep.subr.mxu0 0.0
    %237 = vmatpush1.msra.mxu0 0.0
    %238 = vmatprep.subr.mxu0 0.0
    %239 = vmatpush1.msra.mxu0 0.0
    %240 = vmatprep.subr.mxu0 0.0
    %241 = vmatpush1.msra.mxu0 0.0
    %242 = vmatprep.subr.mxu0 0.0
    %243 = vmatpush1.msra.mxu0 0.0
    %244 = vmatprep.subr.mxu0 0.0
    %245 = vmatpush1.msra.mxu0 0.0
    %246 = vmatprep.subr.mxu0 0.0
    %247 = vmatpush1.msra.mxu0 0.0
    %248 = vmatprep.subr.mxu0 0.0
    %249 = vmatpush1.msra.mxu0 0.0
    %250 = vmatprep.subr.mxu0 0.0
    %251 = vmatpush1.msra.mxu0 0.0
    %252 = vmatprep.subr.mxu0 0.0
    %253 = vmatpush1.msra.mxu0 0.0
    %254 = vmatprep.subr.mxu0 0.0
    %255 = vmatpush1.msra.mxu0 %v105
    %256 = vmatprep.subr.mxu0 0.0
    %257 = vmatpush1.msra.mxu0 %v104
    %258 = vmatprep.subr.mxu0 0.0
    %259 = vmatpush1.msra.mxu0 %v103
    %260 = vmatprep.subr.mxu0 0.0
    %261 = vmatpush1.msra.mxu0 %v102
    %262 = vmatprep.subr.mxu0 0.0
    %263 = vmatpush2.msra.mxu0 0.0
    %264 = vmatprep.subr.mxu0 0.0
    %265 = vmatpush2.msra.mxu0 0.0
    %266 = vmatprep.subr.mxu0 0.0
    %267 = vmatpush2.msra.mxu0 0.0
    %268 = vmatprep.subr.mxu0 0.0
    %269 = vmatpush2.msra.mxu0 0.0
    %270 = vmatprep.subr.mxu0 0.0
    %271 = vmatpush2.msra.mxu0 0.0
    %272 = vmatprep.subr.mxu0 0.0
    %273 = vmatpush2.msra.mxu0 0.0
    %274 = vmatprep.subr.mxu0 0.0
    %275 = vmatpush2.msra.mxu0 0.0
    %276 = vmatprep.subr.mxu0 0.0
    %277 = vmatpush2.msra.mxu0 0.0
    %278 = vmatprep.subr.mxu0 0.0
    %279 = vmatpush2.msra.mxu0 0.0
    %280 = vmatprep.subr.mxu0 0.0
    %281 = vmatpush2.msra.mxu0 0.0
    %282 = vmatprep.subr.mxu0 0.0
    %283 = vmatpush2.msra.mxu0 0.0
    %284 = vmatprep.subr.mxu0 0.0
    %285 = vmatpush2.msra.mxu0 0.0
    %286 = vmatprep.subr.mxu0 0.0
    %287 = vmatpush2.msra.mxu0 0.0
    %288 = vmatprep.subr.mxu0 0.0
    %289 = vmatpush2.msra.mxu0 0.0
    %290 = vmatprep.subr.mxu0 0.0
    %291 = vmatpush2.msra.mxu0 0.0
    %292 = vmatprep.subr.mxu0 0.0
    %293 = vmatpush2.msra.mxu0 0.0
    %294 = vmatprep.mubr.f32.mxu0 0.0
    %295 = vmatmul.mubr.f32.gmra.mxu0 %v228
    %v296 = vpop.f32.mrf.mxu0
    %v297 = vadd.f32 0.0, %v296
    %v298 = vpop.f32.mrf.mxu0
    %299 = vdwg.mxu0
    %v300 = vadd.f32 %v227, %v297
    %v301 = vxor.u32 %v300, 2147483648
    %v302 = vmul.f32 %v301, 1.442695
    %v303 = vpow.pop %v302
    %v304 = vadd.f32 %v303, 1.0
    %v305 = vrcp.pop %v304
    %v306 = vmul.f32 1.0, %v305
    %v307 = vadd.f32 %v297, %v196
    %309 = vrot.lane.b32.xlu0 %v307, 64
    %v310 = vpop.permute.xlu0 %309
    %v312 = vmul.f32 %v306, %v310
    %314 = vrot.lane.b32.xlu0 %v312, 64
    %v315 = vpop.permute.xlu0 %314
    %v317 = vadd.f32 %v227, %v315
    %v318 = vtanh.pop %v317
    %v319 = vsub.f32 1.0, %v306
    %321 = vrot.lane.b32.xlu0 %v318, 96
    %v322 = vpop.permute.xlu0 %321
    %v324 = vmul.f32 %v319, %v322
    %v325 = vmul.f32 %v306, %v220
    %v326 = vadd.f32 %v324, %v325
    %328 = vrot.lane.b32.xlu0 %v326, 96
    %v329 = vpop.permute.xlu0 %328
    %331 = vst.msk [vmem:[#allocation4 + $0x2] sm:$0x3] %vm225, %v329
    %332 = vst.msk [vmem:[#allocation2] sm:$0x3] %vm225, %v329
    %333 = vst.msk [vmem:[#allocation5] sm:$0x3] %vm225, %v329
    %v334 = vld [vmem:[#allocation4] sm:$0xf]
    %v335 = vpack.c.bf16 %v334, %v334
    %v336 = vld [vmem:[%s6] sm:$0xf]
    %v337 = vld [vmem:[%s6 + $0x4] sm:$0xf]
    %v338 = vld [vmem:[%s6 + $0x8] sm:$0xf]
    %v339 = vld [vmem:[%s6 + $0xc] sm:$0xf]
    %v340 = vld [vmem:[%s7] sm:$0x1]
    %v342 = vlaneseq
    %v343 = vshrl.u32 %v342, 7
    %v344 = vsub.s32 0, %v343
    %v345 = vrot.slane %v340, %v344
    %v351 = vunpack.c.l.b16 %v336
    %v352 = vunpack.c.l.b16 %v337
    %v353 = vunpack.c.l.b16 %v338
    %v354 = vunpack.c.l.b16 %v339
    %v355 = vpack.c.b16 %v352, %v351
    %v356 = vpack.c.b16 %v354, %v353
    %v360 = vsel %vm114, %v335, 0
    %362 = vmatprep.subr.bf16.mxu0 0
    %363 = vmatpush1.bf16.msra.mxu0 0
    %364 = vmatprep.subr.bf16.mxu0 0
    %365 = vmatpush1.bf16.msra.mxu0 0
    %366 = vmatprep.subr.bf16.mxu0 0
    %367 = vmatpush1.bf16.msra.mxu0 0
    %368 = vmatprep.subr.bf16.mxu0 0
    %369 = vmatpush1.bf16.msra.mxu0 0
    %370 = vmatprep.subr.bf16.mxu0 0
    %371 = vmatpush1.bf16.msra.mxu0 0
    %372 = vmatprep.subr.bf16.mxu0 0
    %373 = vmatpush1.bf16.msra.mxu0 0
    %374 = vmatprep.subr.bf16.mxu0 0
    %375 = vmatpush1.bf16.msra.mxu0 %v356
    %376 = vmatprep.subr.bf16.mxu0 0
    %377 = vmatpush1.bf16.msra.mxu0 %v355
    %378 = vmatprep.subr.bf16.mxu0 0
    %379 = vmatpush2.bf16.msra.mxu0 0
    %380 = vmatprep.subr.bf16.mxu0 0
    %381 = vmatpush2.bf16.msra.mxu0 0
    %382 = vmatprep.subr.bf16.mxu0 0
    %383 = vmatpush2.bf16.msra.mxu0 0
    %384 = vmatprep.subr.bf16.mxu0 0
    %385 = vmatpush2.bf16.msra.mxu0 0
    %386 = vmatprep.subr.bf16.mxu0 0
    %387 = vmatpush2.bf16.msra.mxu0 0
    %388 = vmatprep.subr.bf16.mxu0 0
    %389 = vmatpush2.bf16.msra.mxu0 0
    %390 = vmatprep.subr.bf16.mxu0 0
    %391 = vmatpush2.bf16.msra.mxu0 0
    %392 = vmatprep.subr.bf16.mxu0 0
    %393 = vmatpush2.bf16.msra.mxu0 0
    %394 = vmatprep.mubr.bf16.mxu0 0
    %395 = vmatmul.mubr.bf16.gmra.mxu0 %v360
    %v396 = vpop.f32.mrf.mxu0
    %v397 = vadd.f32 %v345, %v396
    %v398 = vpop.f32.mrf.mxu0
    %v399 = vpop.f32.mrf.mxu0
    %v400 = vpop.f32.mrf.mxu0
    %401 = vdwg.mxu0
    %402 = vst [vmem:[%s8] sm:$0xf] %v397
    // Predicated region
    $region38: #{predictor_forward.3} parent=1 // pred_check
      _
    $region39: #{predictor_forward.3} parent=1 // pred_check_branch
      %404 = sbr.rel (0) target = $region41
    $region40: #{predictor_forward.3} parent=1 // pred_region
      _
    $region41: #{predictor_forward.3} parent=1 // pred_fallthru
      _
    // Predicated region
    $region42: #{predictor_forward.3} parent=1 // pred_check
      _
    $region43: #{predictor_forward.3} parent=1 // pred_check_branch
      %406 = sbr.rel (0) target = $region45
    $region44: #{predictor_forward.3} parent=1 // pred_region
      %s408 = ssub.s32 32, 32
      %409 = vsyncadd [#allocation6], %s408
      %s411 = sshll.u32 [#allocation5], 4
      %s412 = int_to_ptr.vmem [resolvable:$true] %s411
      %414 = dma.vmem_to_hbm [thread:$0]  %s412, 32, %s9, [#allocation6]
    $region45: #{predictor_forward.3} parent=1 // pred_fallthru
      _
    // Predicated region
    $region46: #{predictor_forward.3} parent=1 // pred_check
      _
    $region47: #{predictor_forward.3} parent=1 // pred_check_branch
      %416 = sbr.rel (0) target = $region49
    $region48: #{predictor_forward.3} parent=1 // pred_region
      _
    $region49: #{predictor_forward.3} parent=1 // pred_fallthru
      _
    // Predicated region
    $region50: #{predictor_forward.3} parent=1 // pred_check
      _
    $region51: #{predictor_forward.3} parent=1 // pred_check_branch
      %418 = sbr.rel (0) target = $region53
    $region52: #{predictor_forward.3} parent=1 // pred_region
      %419 = dma.done [#allocation6], 32
    $region53: #{predictor_forward.3} parent=1 // pred_fallthru
      _
    %420 = vsyncpa [#allocation6], 1

// kernel: predictor_forward.5
$region0: #{predictor_forward.5}
  #allocation0 [shape = 'u32[]', space=smem, size = 0x4, offset = 0x4, fixed_abs, tag = 'smem constant byte address 0x4 - core index']
  #allocation1 [shape = 'u32[144,128]{1,0:T(1,128)}', space=vmem, size = 0x12000, scoped, tag = 'internal scratch']
  %s0 = inlined_call_operand.vmem [shape: bf16[70,16], index: 0, kind: input, shape index: {}]
  %s1 = inlined_call_operand.vmem [shape: f32[64,32], index: 1, kind: input, shape index: {}]
  %s2 = inlined_call_operand.vmem [shape: bf16[4,16,32], index: 2, kind: input, shape index: {}]
  %s3 = inlined_call_operand.vmem [shape: bf16[32,32], index: 3, kind: input, shape index: {}]
  %s4 = inlined_call_operand.vmem [shape: f32[1,32], index: 4, kind: input, shape index: {}]
  %s5 = inlined_call_operand.vmem [shape: bf16[32,16], index: 5, kind: input, shape index: {}]
  %s6 = inlined_call_operand.vmem [shape: f32[1,16], index: 6, kind: input, shape index: {}]
  %s7 = inlined_call_operand.vmem [shape: f32[64,16], index: 7, kind: output, shape index: {}]
  %s8 = sld [smem:[#allocation0]]
  $region38: #{predictor_forward.5} parent=0
    _
  %s10 = ssub.s32 1, %s8
  %s11 = scalar_select 0, %s10, %s8
  // Predicated region
  $region2: #{predictor_forward.5} parent=0 // pred_check
    _
  $region3: #{predictor_forward.5} parent=0 // pred_check_branch
    %13 = sbr.rel (0) target = $region5
  $region4: #{predictor_forward.5} parent=0 // pred_region
    _
  $region5: #{predictor_forward.5} parent=0 // pred_fallthru
    _
  // Predicated region
  $region6: #{predictor_forward.5} parent=0 // pred_check
    _
  $region7: #{predictor_forward.5} parent=0 // pred_check_branch
    %15 = sbr.rel (0) target = $region9
  $region8: #{predictor_forward.5} parent=0 // pred_region
    _
  $region9: #{predictor_forward.5} parent=0 // pred_fallthru
    _
  // Predicated region
  $region10: #{predictor_forward.5} parent=0 // pred_check
    _
  $region11: #{predictor_forward.5} parent=0 // pred_check_branch
    %17 = sbr.rel (0) target = $region13
  $region12: #{predictor_forward.5} parent=0 // pred_region
    _
  $region13: #{predictor_forward.5} parent=0 // pred_fallthru
    _
  // Predicated region
  $region14: #{predictor_forward.5} parent=0 // pred_check
    _
  $region15: #{predictor_forward.5} parent=0 // pred_check_branch
    %19 = sbr.rel (0) target = $region17
  $region16: #{predictor_forward.5} parent=0 // pred_region
    _
  $region17: #{predictor_forward.5} parent=0 // pred_fallthru
    _
  // Predicated region
  $region18: #{predictor_forward.5} parent=0 // pred_check
    _
  $region19: #{predictor_forward.5} parent=0 // pred_check_branch
    %21 = sbr.rel (0) target = $region21
  $region20: #{predictor_forward.5} parent=0 // pred_region
    _
  $region21: #{predictor_forward.5} parent=0 // pred_fallthru
    _
  // Predicated region
  $region22: #{predictor_forward.5} parent=0 // pred_check
    _
  $region23: #{predictor_forward.5} parent=0 // pred_check_branch
    %23 = sbr.rel (0) target = $region25
  $region24: #{predictor_forward.5} parent=0 // pred_region
    _
  $region25: #{predictor_forward.5} parent=0 // pred_fallthru
    _
  // Predicated region
  $region26: #{predictor_forward.5} parent=0 // pred_check
    _
  $region27: #{predictor_forward.5} parent=0 // pred_check_branch
    %25 = sbr.rel (0) target = $region29
  $region28: #{predictor_forward.5} parent=0 // pred_region
    _
  $region29: #{predictor_forward.5} parent=0 // pred_fallthru
    _
  %v27 = vld [vmem:[%s1] sm:$0xff]
  %v28 = vld [vmem:[%s1 + $0x8] sm:$0xff]
  %v29 = vld [vmem:[%s1 + $0x10] sm:$0xff]
  %v30 = vld [vmem:[%s1 + $0x18] sm:$0xff]
  %v31 = vld [vmem:[%s1 + $0x20] sm:$0xff]
  %v32 = vld [vmem:[%s1 + $0x28] sm:$0xff]
  %v33 = vld [vmem:[%s1 + $0x30] sm:$0xff]
  %v34 = vld [vmem:[%s1 + $0x38] sm:$0xff]
  %v35 = vld [vmem:[%s0] sm:$0xf]
  %v36 = vld [vmem:[%s0 + $0x4] sm:$0xf]
  %v37 = vld [vmem:[%s0 + $0x8] sm:$0xf]
  %v38 = vld [vmem:[%s0 + $0xc] sm:$0xf]
  %v39 = vld [vmem:[%s0 + $0x10] sm:$0xf]
  %v40 = vld [vmem:[%s0 + $0x14] sm:$0xf]
  %v41 = vld [vmem:[%s0 + $0x18] sm:$0xf]
  %v42 = vld [vmem:[%s0 + $0x1c] sm:$0xf]
  %v43 = vld [vmem:[%s2] sm:$0xf]
  %v44 = vld [vmem:[%s2 + $0x4] sm:$0xf]
  %v53 = vunpack.c.l.b16 %v35
  %v54 = vunpack.c.l.b16 %v36
  %v55 = vunpack.c.l.b16 %v37
  %v56 = vunpack.c.l.b16 %v38
  %v57 = vunpack.c.l.b16 %v39
  %v58 = vunpack.c.l.b16 %v40
  %v59 = vunpack.c.l.b16 %v41
  %v60 = vunpack.c.l.b16 %v42
  %v61 = vpack.c.b16 %v54, %v53
  %v62 = vpack.c.b16 %v56, %v55
  %v63 = vpack.c.b16 %v58, %v57
  %v64 = vpack.c.b16 %v60, %v59
  %v67 = vunpack.c.l.b16 %v43
  %v68 = vunpack.c.l.b16 %v44
  %v69 = vpack.c.b16 %v68, %v67
  %vm71 = vcmask 130048
  %v73 = vsel %vm71, %v61, 0
  %v76 = vsel %vm71, %v62, 0
  %v79 = vsel %vm71, %v63, 0
  %v82 = vsel %vm71, %v64, 0
  %84 = vmatprep.subr.bf16.mxu0 0
  %85 = vmatpush1.bf16.msra.mxu0 0
  %86 = vmatprep.subr.bf16.mxu0 0
  %87 = vmatpush1.bf16.msra.mxu0 0
  %88 = vmatprep.subr.bf16.mxu0 0
  %89 = vmatpush1.bf16.msra.mxu0 0
  %90 = vmatprep.subr.bf16.mxu0 0
  %91 = vmatpush1.bf16.msra.mxu0 0
  %92 = vmatprep.subr.bf16.mxu0 0
  %93 = vmatpush1.bf16.msra.mxu0 0
  %94 = vmatprep.subr.bf16.mxu0 0
  %95 = vmatpush1.bf16.msra.mxu0 0
  %96 = vmatprep.subr.bf16.mxu0 0
  %97 = vmatpush1.bf16.msra.mxu0 0
  %98 = vmatprep.subr.bf16.mxu0 0
  %99 = vmatpush1.bf16.msra.mxu0 %v69
  %100 = vmatprep.subr.bf16.mxu0 0
  %101 = vmatpush2.bf16.msra.mxu0 0
  %102 = vmatprep.subr.bf16.mxu0 0
  %103 = vmatpush2.bf16.msra.mxu0 0
  %104 = vmatprep.subr.bf16.mxu0 0
  %105 = vmatpush2.bf16.msra.mxu0 0
  %106 = vmatprep.subr.bf16.mxu0 0
  %107 = vmatpush2.bf16.msra.mxu0 0
  %108 = vmatprep.subr.bf16.mxu0 0
  %109 = vmatpush2.bf16.msra.mxu0 0
  %110 = vmatprep.subr.bf16.mxu0 0
  %111 = vmatpush2.bf16.msra.mxu0 0
  %112 = vmatprep.subr.bf16.mxu0 0
  %113 = vmatpush2.bf16.msra.mxu0 0
  %114 = vmatprep.subr.bf16.mxu0 0
  %115 = vmatpush2.bf16.msra.mxu0 0
  %116 = vmatprep.mubr.bf16.mxu0 0
  %117 = vmatmul.mubr.bf16.gmra.mxu0 %v73
  %v118 = vpop.f32.mrf.mxu0
  %v119 = vadd.f32 0.0, %v118
  %v120 = vpop.f32.mrf.mxu0
  %v121 = vpop.f32.mrf.mxu0
  %v122 = vadd.f32 0.0, %v121
  %v123 = vpop.f32.mrf.mxu0
  %124 = vmatprep.mubr.bf16.mxu0 0
  %125 = vmatmul.mubr.bf16.gmra.mxu0 %v76
  %v126 = vpop.f32.mrf.mxu0
  %v127 = vadd.f32 0.0, %v126
  %v128 = vpop.f32.mrf.mxu0
  %v129 = vpop.f32.mrf.mxu0
  %v130 = vadd.f32 0.0, %v129
  %v131 = vpop.f32.mrf.mxu0
  %132 = vmatprep.mubr.bf16.mxu0 0
  %133 = vmatmul.mubr.bf16.gmra.mxu0 %v79
  %v134 = vpop.f32.mrf.mxu0
  %v135 = vadd.f32 0.0, %v134
  %v136 = vpop.f32.mrf.mxu0
  %v137 = vpop.f32.mrf.mxu0
  %v138 = vadd.f32 0.0, %v137
  %v139 = vpop.f32.mrf.mxu0
  %140 = vmatprep.mubr.bf16.mxu0 0
  %141 = vmatmul.mubr.bf16.gmra.mxu0 %v82
  %v142 = vpop.f32.mrf.mxu0
  %v143 = vadd.f32 0.0, %v142
  %v144 = vpop.f32.mrf.mxu0
  %v145 = vpop.f32.mrf.mxu0
  %v146 = vadd.f32 0.0, %v145
  %v147 = vpop.f32.mrf.mxu0
  %148 = vdwg.mxu0
  %v149 = vadd.f32 %v27, %v119
  %v150 = vadd.f32 %v28, %v122
  %v151 = vadd.f32 %v29, %v127
  %v152 = vadd.f32 %v30, %v130
  %v153 = vadd.f32 %v31, %v135
  %v154 = vadd.f32 %v32, %v138
  %v155 = vadd.f32 %v33, %v143
  %v156 = vadd.f32 %v34, %v146
  %v157 = vld [vmem:[%s0] sm:$0xe]
  %v158 = vld [vmem:[%s0 + $0x4] sm:$0xf]
  %v159 = vld [vmem:[%s0 + $0x8] sm:$0xf]
  %v160 = vld [vmem:[%s0 + $0xc] sm:$0xf]
  %v161 = vld [vmem:[%s0 + $0x10] sm:$0xf]
  %v162 = vld [vmem:[%s0 + $0x14] sm:$0xf]
  %v163 = vld [vmem:[%s0 + $0x18] sm:$0xf]
  %v164 = vld [vmem:[%s0 + $0x1c] sm:$0xf]
  %v165 = vld [vmem:[%s0 + $0x20] sm:$0x1]
  %s166 = scalar_lea.vmem %s2, 8
  %v167 = vld [vmem:[%s166] sm:$0xf]
  %v168 = vld [vmem:[%s166 + $0x4] sm:$0xf]
  %v178 = vunpack.c.l.b16 %v157
  %v179 = vunpack.c.l.b16 %v158
  %v180 = vunpack.c.l.b16 %v159
  %v181 = vunpack.c.l.b16 %v160
  %v182 = vunpack.c.l.b16 %v161
  %v183 = vunpack.c.l.b16 %v162
  %v184 = vunpack.c.l.b16 %v163
  %v185 = vunpack.c.l.b16 %v164
  %v186 = vunpack.c.l.b16 %v165
  %v187 = vpack.c.b16 %v179, %v178
  %v188 = vpack.c.b16 %v181, %v180
  %v189 = vpack.c.b16 %v183, %v182
  %v190 = vpack.c.b16 %v185, %v184
  %v191 = vpack.c.b16 %v186, %v186
  %vm192 = vcmask 1046528
  %v193 = vrot.slane %v187, 1
  %v194 = vrot.slane %v188, 1
  %v195 = vsel %vm192, %v193, %v194
  %v196 = vrot.slane %v189, 1
  %v197 = vsel %vm192, %v194, %v196
  %v198 = vrot.slane %v190, 1
  %v199 = vsel %vm192, %v196, %v198
  %v200 = vrot.slane %v191, 1
  %v201 = vsel %vm192, %v198, %v200
  %v204 = vunpack.c.l.b16 %v167
  %v205 = vunpack.c.l.b16 %v168
  %v206 = vpack.c.b16 %v205, %v204
  %v209 = vsel %vm71, %v195, 0
  %v212 = vsel %vm71, %v197, 0
  %v215 = vsel %vm71, %v199, 0
  %v218 = vsel %vm71, %v201, 0
  %220 = vmatprep.subr.bf16.mxu0 0
  %221 = vmatpush1.bf16.msra.mxu0 0
  %222 = vmatprep.subr.bf16.mxu0 0
  %223 = vmatpush1.bf16.msra.mxu0 0
  %224 = vmatprep.subr.bf16.mxu0 0
  %225 = vmatpush1.bf16.msra.mxu0 0
  %226 = vmatprep.subr.bf16.mxu0 0
  %227 = vmatpush1.bf16.msra.mxu0 0
  %228 = vmatprep.subr.bf16.mxu0 0
  %229 = vmatpush1.bf16.msra.mxu0 0
  %230 = vmatprep.subr.bf16.mxu0 0
  %231 = vmatpush1.bf16.msra.mxu0 0
  %232 = vmatprep.subr.bf16.mxu0 0
  %233 = vmatpush1.bf16.msra.mxu0 0
  %234 = vmatprep.subr.bf16.mxu0 0
  %235 = vmatpush1.bf16.msra.mxu0 %v206
  %236 = vmatprep.subr.bf16.mxu0 0
  %237 = vmatpush2.bf16.msra.mxu0 0
  %238 = vmatprep.subr.bf16.mxu0 0
  %239 = vmatpush2.bf16.msra.mxu0 0
  %240 = vmatprep.subr.bf16.mxu0 0
  %241 = vmatpush2.bf16.msra.mxu0 0
  %242 = vmatprep.subr.bf16.mxu0 0
  %243 = vmatpush2.bf16.msra.mxu0 0
  %244 = vmatprep.subr.bf16.mxu0 0
  %245 = vmatpush2.bf16.msra.mxu0 0
  %246 = vmatprep.subr.bf16.mxu0 0
  %247 = vmatpush2.bf16.msra.mxu0 0
  %248 = vmatprep.subr.bf16.mxu0 0
  %249 = vmatpush2.bf16.msra.mxu0 0
  %250 = vmatprep.subr.bf16.mxu0 0
  %251 = vmatpush2.bf16.msra.mxu0 0
  %252 = vmatprep.mubr.bf16.mxu0 0
  %253 = vmatmul.mubr.bf16.gmra.mxu0 %v209
  %v254 = vpop.f32.mrf.mxu0
  %v255 = vadd.f32 0.0, %v254
  %v256 = vpop.f32.mrf.mxu0
  %v257 = vpop.f32.mrf.mxu0
  %v258 = vadd.f32 0.0, %v257
  %v259 = vpop.f32.mrf.mxu0
  %260 = vmatprep.mubr.bf16.mxu0 0
  %261 = vmatmul.mubr.bf16.gmra.mxu0 %v212
  %v262 = vpop.f32.mrf.mxu0
  %v263 = vadd.f32 0.0, %v262
  %v264 = vpop.f32.mrf.mxu0
  %v265 = vpop.f32.mrf.mxu0
  %v266 = vadd.f32 0.0, %v265
  %v267 = vpop.f32.mrf.mxu0
  %268 = vmatprep.mubr.bf16.mxu0 0
  %269 = vmatmul.mubr.bf16.gmra.mxu0 %v215
  %v270 = vpop.f32.mrf.mxu0
  %v271 = vadd.f32 0.0, %v270
  %v272 = vpop.f32.mrf.mxu0
  %v273 = vpop.f32.mrf.mxu0
  %v274 = vadd.f32 0.0, %v273
  %v275 = vpop.f32.mrf.mxu0
  %276 = vmatprep.mubr.bf16.mxu0 0
  %277 = vmatmul.mubr.bf16.gmra.mxu0 %v218
  %v278 = vpop.f32.mrf.mxu0
  %v279 = vadd.f32 0.0, %v278
  %v280 = vpop.f32.mrf.mxu0
  %v281 = vpop.f32.mrf.mxu0
  %v282 = vadd.f32 0.0, %v281
  %v283 = vpop.f32.mrf.mxu0
  %284 = vdwg.mxu0
  %v285 = vadd.f32 %v149, %v255
  %v286 = vadd.f32 %v150, %v258
  %v287 = vadd.f32 %v151, %v263
  %v288 = vadd.f32 %v152, %v266
  %v289 = vadd.f32 %v153, %v271
  %v290 = vadd.f32 %v154, %v274
  %v291 = vadd.f32 %v155, %v279
  %v292 = vadd.f32 %v156, %v282
  %v293 = vld [vmem:[%s0] sm:$0xc]
  %v294 = vld [vmem:[%s0 + $0x20] sm:$0x3]
  %s295 = scalar_lea.vmem %s2, 16
  %v296 = vld [vmem:[%s295] sm:$0xf]
  %v297 = vld [vmem:[%s295 + $0x4] sm:$0xf]
  %v300 = vunpack.c.l.b16 %v293
  %v301 = vunpack.c.l.b16 %v294
  %v302 = vpack.c.b16 %v179, %v300
  %v303 = vpack.c.b16 %v301, %v301
  %vm304 = vcmask 1045504
  %v305 = vrot.slane %v302, 2
  %v306 = vrot.slane %v188, 2
  %v307 = vsel %vm304, %v305, %v306
  %v308 = vrot.slane %v189, 2
  %v309 = vsel %vm304, %v306, %v308
  %v310 = vrot.slane %v190, 2
  %v311 = vsel %vm304, %v308, %v310
  %v312 = vrot.slane %v303, 2
  %v313 = vsel %vm304, %v310, %v312
  %v316 = vunpack.c.l.b16 %v296
  %v317 = vunpack.c.l.b16 %v297
  %v318 = vpack.c.b16 %v317, %v316
  %v321 = vsel %vm71, %v307, 0
  %v324 = vsel %vm71, %v309, 0
  %v327 = vsel %vm71, %v311, 0
  %v330 = vsel %vm71, %v313, 0
  %332 = vmatprep.subr.bf16.mxu0 0
  %333 = vmatpush1.bf16.msra.mxu0 0
  %334 = vmatprep.subr.bf16.mxu0 0
  %335 = vmatpush1.bf16.msra.mxu0 0
  %336 = vmatprep.subr.bf16.mxu0 0
  %337 = vmatpush1.bf16.msra.mxu0 0
  %338 = vmatprep.subr.bf16.mxu0 0
  %339 = vmatpush1.bf16.msra.mxu0 0
  %340 = vmatprep.subr.bf16.mxu0 0
  %341 = vmatpush1.bf16.msra.mxu0 0
  %342 = vmatprep.subr.bf16.mxu0 0
  %343 = vmatpush1.bf16.msra.mxu0 0
  %344 = vmatprep.subr.bf16.mxu0 0
  %345 = vmatpush1.bf16.msra.mxu0 0
  %346 = vmatprep.subr.bf16.mxu0 0
  %347 = vmatpush1.bf16.msra.mxu0 %v318
  %348 = vmatprep.subr.bf16.mxu0 0
  %349 = vmatpush2.bf16.msra.mxu0 0
  %350 = vmatprep.subr.bf16.mxu0 0
  %351 = vmatpush2.bf16.msra.mxu0 0
  %352 = vmatprep.subr.bf16.mxu0 0
  %353 = vmatpush2.bf16.msra.mxu0 0
  %354 = vmatprep.subr.bf16.mxu0 0
  %355 = vmatpush2.bf16.msra.mxu0 0
  %356 = vmatprep.subr.bf16.mxu0 0
  %357 = vmatpush2.bf16.msra.mxu0 0
  %358 = vmatprep.subr.bf16.mxu0 0
  %359 = vmatpush2.bf16.msra.mxu0 0
  %360 = vmatprep.subr.bf16.mxu0 0
  %361 = vmatpush2.bf16.msra.mxu0 0
  %362 = vmatprep.subr.bf16.mxu0 0
  %363 = vmatpush2.bf16.msra.mxu0 0
  %364 = vmatprep.mubr.bf16.mxu0 0
  %365 = vmatmul.mubr.bf16.gmra.mxu0 %v321
  %v366 = vpop.f32.mrf.mxu0
  %v367 = vadd.f32 0.0, %v366
  %v368 = vpop.f32.mrf.mxu0
  %v369 = vpop.f32.mrf.mxu0
  %v370 = vadd.f32 0.0, %v369
  %v371 = vpop.f32.mrf.mxu0
  %372 = vmatprep.mubr.bf16.mxu0 0
  %373 = vmatmul.mubr.bf16.gmra.mxu0 %v324
  %v374 = vpop.f32.mrf.mxu0
  %v375 = vadd.f32 0.0, %v374
  %v376 = vpop.f32.mrf.mxu0
  %v377 = vpop.f32.mrf.mxu0
  %v378 = vadd.f32 0.0, %v377
  %v379 = vpop.f32.mrf.mxu0
  %380 = vmatprep.mubr.bf16.mxu0 0
  %381 = vmatmul.mubr.bf16.gmra.mxu0 %v327
  %v382 = vpop.f32.mrf.mxu0
  %v383 = vadd.f32 0.0, %v382
  %v384 = vpop.f32.mrf.mxu0
  %v385 = vpop.f32.mrf.mxu0
  %v386 = vadd.f32 0.0, %v385
  %v387 = vpop.f32.mrf.mxu0
  %388 = vmatprep.mubr.bf16.mxu0 0
  %389 = vmatmul.mubr.bf16.gmra.mxu0 %v330
  %v390 = vpop.f32.mrf.mxu0
  %v391 = vadd.f32 0.0, %v390
  %v392 = vpop.f32.mrf.mxu0
  %v393 = vpop.f32.mrf.mxu0
  %v394 = vadd.f32 0.0, %v393
  %v395 = vpop.f32.mrf.mxu0
  %396 = vdwg.mxu0
  %v397 = vadd.f32 %v285, %v367
  %v398 = vadd.f32 %v286, %v370
  %v399 = vadd.f32 %v287, %v375
  %v400 = vadd.f32 %v288, %v378
  %v401 = vadd.f32 %v289, %v383
  %v402 = vadd.f32 %v290, %v386
  %v403 = vadd.f32 %v291, %v391
  %v404 = vadd.f32 %v292, %v394
  %v405 = vld [vmem:[%s0] sm:$0x8]
  %v406 = vld [vmem:[%s0 + $0x20] sm:$0x7]
  %s407 = scalar_lea.vmem %s2, 24
  %v408 = vld [vmem:[%s407] sm:$0xf]
  %v409 = vld [vmem:[%s407 + $0x4] sm:$0xf]
  %v412 = vunpack.c.l.b16 %v405
  %v413 = vunpack.c.l.b16 %v406
  %v414 = vpack.c.b16 %v179, %v412
  %v415 = vpack.c.b16 %v413, %v413
  %vm416 = vcmask 1044480
  %v417 = vrot.slane %v414, 3
  %v418 = vrot.slane %v188, 3
  %v419 = vsel %vm416, %v417, %v418
  %v420 = vrot.slane %v189, 3
  %v421 = vsel %vm416, %v418, %v420
  %v422 = vrot.slane %v190, 3
  %v423 = vsel %vm416, %v420, %v422
  %v424 = vrot.slane %v415, 3
  %v425 = vsel %vm416, %v422, %v424
  %v428 = vunpack.c.l.b16 %v408
  %v429 = vunpack.c.l.b16 %v409
  %v430 = vpack.c.b16 %v429, %v428
  %v433 = vsel %vm71, %v419, 0
  %v436 = vsel %vm71, %v421, 0
  %v439 = vsel %vm71, %v423, 0
  %v442 = vsel %vm71, %v425, 0
  %444 = vmatprep.subr.bf16.mxu0 0
  %445 = vmatpush1.bf16.msra.mxu0 0
  %446 = vmatprep.subr.bf16.mxu0 0
  %447 = vmatpush1.bf16.msra.mxu0 0
  %448 = vmatprep.subr.bf16.mxu0 0
  %449 = vmatpush1.bf16.msra.mxu0 0
  %450 = vmatprep.subr.bf16.mxu0 0
  %451 = vmatpush1.bf16.msra.mxu0 0
  %452 = vmatprep.subr.bf16.mxu0 0
  %453 = vmatpush1.bf16.msra.mxu0 0
  %454 = vmatprep.subr.bf16.mxu0 0
  %455 = vmatpush1.bf16.msra.mxu0 0
  %456 = vmatprep.subr.bf16.mxu0 0
  %457 = vmatpush1.bf16.msra.mxu0 0
  %458 = vmatprep.subr.bf16.mxu0 0
  %459 = vmatpush1.bf16.msra.mxu0 %v430
  %460 = vmatprep.subr.bf16.mxu0 0
  %461 = vmatpush2.bf16.msra.mxu0 0
  %462 = vmatprep.subr.bf16.mxu0 0
  %463 = vmatpush2.bf16.msra.mxu0 0
  %464 = vmatprep.subr.bf16.mxu0 0
  %465 = vmatpush2.bf16.msra.mxu0 0
  %466 = vmatprep.subr.bf16.mxu0 0
  %467 = vmatpush2.bf16.msra.mxu0 0
  %468 = vmatprep.subr.bf16.mxu0 0
  %469 = vmatpush2.bf16.msra.mxu0 0
  %470 = vmatprep.subr.bf16.mxu0 0
  %471 = vmatpush2.bf16.msra.mxu0 0
  %472 = vmatprep.subr.bf16.mxu0 0
  %473 = vmatpush2.bf16.msra.mxu0 0
  %474 = vmatprep.subr.bf16.mxu0 0
  %475 = vmatpush2.bf16.msra.mxu0 0
  %476 = vmatprep.mubr.bf16.mxu0 0
  %477 = vmatmul.mubr.bf16.gmra.mxu0 %v433
  %v478 = vpop.f32.mrf.mxu0
  %v479 = vadd.f32 0.0, %v478
  %v480 = vpop.f32.mrf.mxu0
  %v481 = vpop.f32.mrf.mxu0
  %v482 = vadd.f32 0.0, %v481
  %v483 = vpop.f32.mrf.mxu0
  %484 = vmatprep.mubr.bf16.mxu0 0
  %485 = vmatmul.mubr.bf16.gmra.mxu0 %v436
  %v486 = vpop.f32.mrf.mxu0
  %v487 = vadd.f32 0.0, %v486
  %v488 = vpop.f32.mrf.mxu0
  %v489 = vpop.f32.mrf.mxu0
  %v490 = vadd.f32 0.0, %v489
  %v491 = vpop.f32.mrf.mxu0
  %492 = vmatprep.mubr.bf16.mxu0 0
  %493 = vmatmul.mubr.bf16.gmra.mxu0 %v439
  %v494 = vpop.f32.mrf.mxu0
  %v495 = vadd.f32 0.0, %v494
  %v496 = vpop.f32.mrf.mxu0
  %v497 = vpop.f32.mrf.mxu0
  %v498 = vadd.f32 0.0, %v497
  %v499 = vpop.f32.mrf.mxu0
  %500 = vmatprep.mubr.bf16.mxu0 0
  %501 = vmatmul.mubr.bf16.gmra.mxu0 %v442
  %v502 = vpop.f32.mrf.mxu0
  %v503 = vadd.f32 0.0, %v502
  %v504 = vpop.f32.mrf.mxu0
  %v505 = vpop.f32.mrf.mxu0
  %v506 = vadd.f32 0.0, %v505
  %v507 = vpop.f32.mrf.mxu0
  %508 = vdwg.mxu0
  %v509 = vadd.f32 %v397, %v479
  %v510 = vadd.f32 %v398, %v482
  %v511 = vadd.f32 %v399, %v487
  %v512 = vadd.f32 %v400, %v490
  %v513 = vadd.f32 %v401, %v495
  %v514 = vadd.f32 %v402, %v498
  %v515 = vadd.f32 %v403, %v503
  %v516 = vadd.f32 %v404, %v506
  %v517 = vmax.f32 %v509, 0.0
  %v518 = vmax.f32 %v510, 0.0
  %v519 = vmax.f32 %v511, 0.0
  %v520 = vmax.f32 %v512, 0.0
  %v521 = vmax.f32 %v513, 0.0
  %v522 = vmax.f32 %v514, 0.0
  %v523 = vmax.f32 %v515, 0.0
  %v524 = vmax.f32 %v516, 0.0
  %v525 = vpack.c.bf16 %v518, %v517
  %v526 = vpack.c.bf16 %v520, %v519
  %v527 = vpack.c.bf16 %v522, %v521
  %v528 = vpack.c.bf16 %v524, %v523
  %v529 = vld [vmem:[%s3] sm:$0xf]
  %v530 = vld [vmem:[%s3 + $0x4] sm:$0xf]
  %v531 = vld [vmem:[%s3 + $0x8] sm:$0xf]
  %v532 = vld [vmem:[%s3 + $0xc] sm:$0xf]
  %v533 = vld [vmem:[%s4] sm:$0x1]
  %v535 = vlaneseq
  %v536 = vshrl.u32 %v535, 7
  %v537 = vsub.s32 0, %v536
  %v538 = vrot.slane %v533, %v537
  %v544 = vunpack.c.l.b16 %v529
  %v545 = vunpack.c.l.b16 %v530
  %v546 = vunpack.c.l.b16 %v531
  %v547 = vunpack.c.l.b16 %v532
  %v548 = vpack.c.b16 %v545, %v544
  %v549 = vpack.c.b16 %v547, %v546
  %vm552 = vcmask 261120
  %v554 = vsel %vm552, %v525, 0
  %v557 = vsel %vm552, %v526, 0
  %v560 = vsel %vm552, %v527, 0
  %v563 = vsel %vm552, %v528, 0
  %565 = vmatprep.subr.bf16.mxu0 0
  %566 = vmatpush1.bf16.msra.mxu0 0
  %567 = vmatprep.subr.bf16.mxu0 0
  %568 = vmatpush1.bf16.msra.mxu0 0
  %569 = vmatprep.subr.bf16.mxu0 0
  %570 = vmatpush1.bf16.msra.mxu0 0
  %571 = vmatprep.subr.bf16.mxu0 0
  %572 = vmatpush1.bf16.msra.mxu0 0
  %573 = vmatprep.subr.bf16.mxu0 0
  %574 = vmatpush1.bf16.msra.mxu0 0
  %575 = vmatprep.subr.bf16.mxu0 0
  %576 = vmatpush1.bf16.msra.mxu0 0
  %577 = vmatprep.subr.bf16.mxu0 0
  %578 = vmatpush1.bf16.msra.mxu0 %v549
  %579 = vmatprep.subr.bf16.mxu0 0
  %580 = vmatpush1.bf16.msra.mxu0 %v548
  %581 = vmatprep.subr.bf16.mxu0 0
  %582 = vmatpush2.bf16.msra.mxu0 0
  %583 = vmatprep.subr.bf16.mxu0 0
  %584 = vmatpush2.bf16.msra.mxu0 0
  %585 = vmatprep.subr.bf16.mxu0 0
  %586 = vmatpush2.bf16.msra.mxu0 0
  %587 = vmatprep.subr.bf16.mxu0 0
  %588 = vmatpush2.bf16.msra.mxu0 0
  %589 = vmatprep.subr.bf16.mxu0 0
  %590 = vmatpush2.bf16.msra.mxu0 0
  %591 = vmatprep.subr.bf16.mxu0 0
  %592 = vmatpush2.bf16.msra.mxu0 0
  %593 = vmatprep.subr.bf16.mxu0 0
  %594 = vmatpush2.bf16.msra.mxu0 0
  %595 = vmatprep.subr.bf16.mxu0 0
  %596 = vmatpush2.bf16.msra.mxu0 0
  %597 = vmatprep.mubr.bf16.mxu0 0
  %598 = vmatmul.mubr.bf16.gmra.mxu0 %v554
  %v599 = vpop.f32.mrf.mxu0
  %v600 = vadd.f32 %v538, %v599
  %v601 = vpop.f32.mrf.mxu0
  %v602 = vpop.f32.mrf.mxu0
  %v603 = vadd.f32 %v538, %v602
  %v604 = vpop.f32.mrf.mxu0
  %605 = vmatprep.mubr.bf16.mxu0 0
  %606 = vmatmul.mubr.bf16.gmra.mxu0 %v557
  %v607 = vpop.f32.mrf.mxu0
  %v608 = vadd.f32 %v538, %v607
  %v609 = vpop.f32.mrf.mxu0
  %v610 = vpop.f32.mrf.mxu0
  %v611 = vadd.f32 %v538, %v610
  %v612 = vpop.f32.mrf.mxu0
  %613 = vmatprep.mubr.bf16.mxu0 0
  %614 = vmatmul.mubr.bf16.gmra.mxu0 %v560
  %v615 = vpop.f32.mrf.mxu0
  %v616 = vadd.f32 %v538, %v615
  %v617 = vpop.f32.mrf.mxu0
  %v618 = vpop.f32.mrf.mxu0
  %v619 = vadd.f32 %v538, %v618
  %v620 = vpop.f32.mrf.mxu0
  %621 = vmatprep.mubr.bf16.mxu0 0
  %622 = vmatmul.mubr.bf16.gmra.mxu0 %v563
  %v623 = vpop.f32.mrf.mxu0
  %v624 = vadd.f32 %v538, %v623
  %v625 = vpop.f32.mrf.mxu0
  %v626 = vpop.f32.mrf.mxu0
  %v627 = vadd.f32 %v538, %v626
  %v628 = vpop.f32.mrf.mxu0
  %629 = vdwg.mxu0
  %v630 = vmax.f32 %v600, 0.0
  %v631 = vmax.f32 %v603, 0.0
  %v632 = vmax.f32 %v608, 0.0
  %v633 = vmax.f32 %v611, 0.0
  %v634 = vmax.f32 %v616, 0.0
  %v635 = vmax.f32 %v619, 0.0
  %v636 = vmax.f32 %v624, 0.0
  %v637 = vmax.f32 %v627, 0.0
  %v638 = vpack.c.bf16 %v631, %v630
  %v639 = vpack.c.bf16 %v633, %v632
  %v640 = vpack.c.bf16 %v635, %v634
  %v641 = vpack.c.bf16 %v637, %v636
  %v642 = vld [vmem:[%s5] sm:$0xf]
  %v643 = vld [vmem:[%s5 + $0x4] sm:$0xf]
  %v644 = vld [vmem:[%s5 + $0x8] sm:$0xf]
  %v645 = vld [vmem:[%s5 + $0xc] sm:$0xf]
  %v646 = vld [vmem:[%s6] sm:$0x1]
  %v648 = vlaneseq
  %v649 = vshrl.u32 %v648, 7
  %v650 = vsub.s32 0, %v649
  %v651 = vrot.slane %v646, %v650
  %v657 = vunpack.c.l.b16 %v642
  %v658 = vunpack.c.l.b16 %v643
  %v659 = vunpack.c.l.b16 %v644
  %v660 = vunpack.c.l.b16 %v645
  %v661 = vpack.c.b16 %v658, %v657
  %v662 = vpack.c.b16 %v660, %v659
  %v666 = vsel %vm552, %v638, 0
  %v669 = vsel %vm552, %v639, 0
  %v672 = vsel %vm552, %v640, 0
  %v675 = vsel %vm552, %v641, 0
  %677 = vmatprep.subr.bf16.mxu0 0
  %678 = vmatpush1.bf16.msra.mxu0 0
  %679 = vmatprep.subr.bf16.mxu0 0
  %680 = vmatpush1.bf16.msra.mxu0 0
  %681 = vmatprep.subr.bf16.mxu0 0
  %682 = vmatpush1.bf16.msra.mxu0 0
  %683 = vmatprep.subr.bf16.mxu0 0
  %684 = vmatpush1.bf16.msra.mxu0 0
  %685 = vmatprep.subr.bf16.mxu0 0
  %686 = vmatpush1.bf16.msra.mxu0 0
  %687 = vmatprep.subr.bf16.mxu0 0
  %688 = vmatpush1.bf16.msra.mxu0 0
  %689 = vmatprep.subr.bf16.mxu0 0
  %690 = vmatpush1.bf16.msra.mxu0 %v662
  %691 = vmatprep.subr.bf16.mxu0 0
  %692 = vmatpush1.bf16.msra.mxu0 %v661
  %693 = vmatprep.subr.bf16.mxu0 0
  %694 = vmatpush2.bf16.msra.mxu0 0
  %695 = vmatprep.subr.bf16.mxu0 0
  %696 = vmatpush2.bf16.msra.mxu0 0
  %697 = vmatprep.subr.bf16.mxu0 0
  %698 = vmatpush2.bf16.msra.mxu0 0
  %699 = vmatprep.subr.bf16.mxu0 0
  %700 = vmatpush2.bf16.msra.mxu0 0
  %701 = vmatprep.subr.bf16.mxu0 0
  %702 = vmatpush2.bf16.msra.mxu0 0
  %703 = vmatprep.subr.bf16.mxu0 0
  %704 = vmatpush2.bf16.msra.mxu0 0
  %705 = vmatprep.subr.bf16.mxu0 0
  %706 = vmatpush2.bf16.msra.mxu0 0
  %707 = vmatprep.subr.bf16.mxu0 0
  %708 = vmatpush2.bf16.msra.mxu0 0
  %709 = vmatprep.mubr.bf16.mxu0 0
  %710 = vmatmul.mubr.bf16.gmra.mxu0 %v666
  %v711 = vpop.f32.mrf.mxu0
  %v712 = vadd.f32 %v651, %v711
  %v713 = vpop.f32.mrf.mxu0
  %v714 = vpop.f32.mrf.mxu0
  %v715 = vadd.f32 %v651, %v714
  %v716 = vpop.f32.mrf.mxu0
  %717 = vmatprep.mubr.bf16.mxu0 0
  %718 = vmatmul.mubr.bf16.gmra.mxu0 %v669
  %v719 = vpop.f32.mrf.mxu0
  %v720 = vadd.f32 %v651, %v719
  %v721 = vpop.f32.mrf.mxu0
  %v722 = vpop.f32.mrf.mxu0
  %v723 = vadd.f32 %v651, %v722
  %v724 = vpop.f32.mrf.mxu0
  %725 = vmatprep.mubr.bf16.mxu0 0
  %726 = vmatmul.mubr.bf16.gmra.mxu0 %v672
  %v727 = vpop.f32.mrf.mxu0
  %v728 = vadd.f32 %v651, %v727
  %v729 = vpop.f32.mrf.mxu0
  %v730 = vpop.f32.mrf.mxu0
  %v731 = vadd.f32 %v651, %v730
  %v732 = vpop.f32.mrf.mxu0
  %733 = vmatprep.mubr.bf16.mxu0 0
  %734 = vmatmul.mubr.bf16.gmra.mxu0 %v675
  %v735 = vpop.f32.mrf.mxu0
  %v736 = vadd.f32 %v651, %v735
  %v737 = vpop.f32.mrf.mxu0
  %v738 = vpop.f32.mrf.mxu0
  %v739 = vadd.f32 %v651, %v738
  %v740 = vpop.f32.mrf.mxu0
  %741 = vdwg.mxu0
  %v742 = vsel %vm71, %v712, -inf
  %743 = vmax.xlane.f32.xlu0 %v742
  %v744 = vpop.xlane.xlu0 %743
  %v745 = vsel %vm71, %v715, -inf
  %746 = vmax.xlane.f32.xlu0 %v745
  %v747 = vpop.xlane.xlu0 %746
  %v748 = vsel %vm71, %v720, -inf
  %749 = vmax.xlane.f32.xlu0 %v748
  %v750 = vpop.xlane.xlu0 %749
  %v751 = vsel %vm71, %v723, -inf
  %752 = vmax.xlane.f32.xlu0 %v751
  %v753 = vpop.xlane.xlu0 %752
  %v754 = vsel %vm71, %v728, -inf
  %755 = vmax.xlane.f32.xlu0 %v754
  %v756 = vpop.xlane.xlu0 %755
  %v757 = vsel %vm71, %v731, -inf
  %758 = vmax.xlane.f32.xlu0 %v757
  %v759 = vpop.xlane.xlu0 %758
  %v760 = vsel %vm71, %v736, -inf
  %761 = vmax.xlane.f32.xlu0 %v760
  %v762 = vpop.xlane.xlu0 %761
  %v763 = vsel %vm71, %v739, -inf
  %764 = vmax.xlane.f32.xlu0 %v763
  %v765 = vpop.xlane.xlu0 %764
  %v766 = vsub.f32 %v712, %v744
  %v767 = vsub.f32 %v715, %v747
  %v768 = vsub.f32 %v720, %v750
  %v769 = vsub.f32 %v723, %v753
  %v770 = vsub.f32 %v728, %v756
  %v771 = vsub.f32 %v731, %v759
  %v772 = vsub.f32 %v736, %v762
  %v773 = vsub.f32 %v739, %v765
  %v774 = vmul.f32 %v766, 1.442695
  %v775 = vpow.pop %v774
  %v776 = vmul.f32 %v767, 1.442695
  %v777 = vpow.pop %v776
  %v778 = vmul.f32 %v768, 1.442695
  %v779 = vpow.pop %v778
  %v780 = vmul.f32 %v769, 1.442695
  %v781 = vpow.pop %v780
  %v782 = vmul.f32 %v770, 1.442695
  %v783 = vpow.pop %v782
  %v784 = vmul.f32 %v771, 1.442695
  %v785 = vpow.pop %v784
  %v786 = vmul.f32 %v772, 1.442695
  %v787 = vpow.pop %v786
  %v788 = vmul.f32 %v773, 1.442695
  %v789 = vpow.pop %v788
  %v790 = vsel %vm71, %v775, 0.0
  %791 = vadd.xlane.f32.xlu0 %v790
  %v792 = vpop.xlane.xlu0 %791
  %v793 = vsel %vm71, %v777, 0.0
  %794 = vadd.xlane.f32.xlu0 %v793
  %v795 = vpop.xlane.xlu0 %794
  %v796 = vsel %vm71, %v779, 0.0
  %797 = vadd.xlane.f32.xlu0 %v796
  %v798 = vpop.xlane.xlu0 %797
  %v799 = vsel %vm71, %v781, 0.0
  %800 = vadd.xlane.f32.xlu0 %v799
  %v801 = vpop.xlane.xlu0 %800
  %v802 = vsel %vm71, %v783, 0.0
  %803 = vadd.xlane.f32.xlu0 %v802
  %v804 = vpop.xlane.xlu0 %803
  %v805 = vsel %vm71, %v785, 0.0
  %806 = vadd.xlane.f32.xlu0 %v805
  %v807 = vpop.xlane.xlu0 %806
  %v808 = vsel %vm71, %v787, 0.0
  %809 = vadd.xlane.f32.xlu0 %v808
  %v810 = vpop.xlane.xlu0 %809
  %v811 = vsel %vm71, %v789, 0.0
  %812 = vadd.xlane.f32.xlu0 %v811
  %v813 = vpop.xlane.xlu0 %812
  %v814 = vlog2.pop %v792
  %v815 = vmul.f32 %v814, 0.6931472
  %v816 = vlog2.pop %v795
  %v817 = vmul.f32 %v816, 0.6931472
  %v818 = vlog2.pop %v798
  %v819 = vmul.f32 %v818, 0.6931472
  %v820 = vlog2.pop %v801
  %v821 = vmul.f32 %v820, 0.6931472
  %v822 = vlog2.pop %v804
  %v823 = vmul.f32 %v822, 0.6931472
  %v824 = vlog2.pop %v807
  %v825 = vmul.f32 %v824, 0.6931472
  %v826 = vlog2.pop %v810
  %v827 = vmul.f32 %v826, 0.6931472
  %v828 = vlog2.pop %v813
  %v829 = vmul.f32 %v828, 0.6931472
  %v830 = vadd.f32 %v744, %v815
  %v831 = vadd.f32 %v747, %v817
  %v832 = vadd.f32 %v750, %v819
  %v833 = vadd.f32 %v753, %v821
  %v834 = vadd.f32 %v756, %v823
  %v835 = vadd.f32 %v759, %v825
  %v836 = vadd.f32 %v762, %v827
  %v837 = vadd.f32 %v765, %v829
  %v838 = vsub.f32 %v712, %v830
  %v839 = vsub.f32 %v715, %v831
  %v840 = vsub.f32 %v720, %v832
  %v841 = vsub.f32 %v723, %v833
  %v842 = vsub.f32 %v728, %v834
  %v843 = vsub.f32 %v731, %v835
  %v844 = vsub.f32 %v736, %v836
  %v845 = vsub.f32 %v739, %v837
  %846 = vst.msk [vmem:[%s7] sm:$0xff] %vm71, %v838
  %847 = vst.msk [vmem:[%s7 + $0x8] sm:$0xff] %vm71, %v839
  %848 = vst.msk [vmem:[%s7 + $0x10] sm:$0xff] %vm71, %v840
  %849 = vst.msk [vmem:[%s7 + $0x18] sm:$0xff] %vm71, %v841
  %850 = vst.msk [vmem:[%s7 + $0x20] sm:$0xff] %vm71, %v842
  %851 = vst.msk [vmem:[%s7 + $0x28] sm:$0xff] %vm71, %v843
  %852 = vst.msk [vmem:[%s7 + $0x30] sm:$0xff] %vm71, %v844
  %853 = vst.msk [vmem:[%s7 + $0x38] sm:$0xff] %vm71, %v845
  // Predicated region
  $region30: #{predictor_forward.5} parent=0 // pred_check
    _
  $region31: #{predictor_forward.5} parent=0 // pred_check_branch
    %855 = sbr.rel (0) target = $region33
  $region32: #{predictor_forward.5} parent=0 // pred_region
    _
  $region33: #{predictor_forward.5} parent=0 // pred_fallthru
    _
  // Predicated region
  $region34: #{predictor_forward.5} parent=0 // pred_check
    _
  $region35: #{predictor_forward.5} parent=0 // pred_check_branch
    %857 = sbr.rel (0) target = $region37
  $region36: #{predictor_forward.5} parent=0 // pred_region
    _
  $region37: #{predictor_forward.5} parent=0 // pred_fallthru
    _

// kernel: predictor_forward.4
$region0: #{predictor_forward.4}
  #allocation0 [shape = 'u32[]', space=smem, size = 0x4, offset = 0x4, fixed_abs, tag = 'smem constant byte address 0x4 - core index']
  #allocation1 [shape = 'u32[144,128]{1,0:T(1,128)}', space=vmem, size = 0x12000, scoped, tag = 'internal scratch']
  #allocation2 [shape = 'f32[2,32]{1,0:T(2,128)}', space=vmem, size = 0x400, scoped, tag = 'scratch operand']
  #allocation3 [shape = 'f32[16,96]{1,0:T(8,128)}', space=vmem, size = 0x2000, scoped, tag = 'scratch operand']
  #allocation4 [shape = 'f32[16,32]{1,0:T(8,128)}', space=vmem, size = 0x2000, scoped, tag = 'scratch operand']
  %s0 = inlined_call_operand.vmem [shape: bf16[16,4], index: 0, kind: input, shape index: {}]
  %s1 = inlined_call_operand.vmem [shape: f32[16,32], index: 1, kind: input, shape index: {}]
  %s2 = inlined_call_operand.vmem [shape: f32[2,32], index: 2, kind: input, shape index: {}]
  %s3 = inlined_call_operand.vmem [shape: bf16[4,32], index: 3, kind: input, shape index: {}]
  %s4 = inlined_call_operand.vmem [shape: f32[1,32], index: 4, kind: input, shape index: {}]
  %s5 = inlined_call_operand.vmem [shape: bf16[32,96], index: 5, kind: input, shape index: {}]
  %s6 = inlined_call_operand.vmem [shape: f32[1,96], index: 6, kind: input, shape index: {}]
  %s7 = inlined_call_operand.vmem [shape: f32[32,96], index: 7, kind: input, shape index: {}]
  %s8 = inlined_call_operand.vmem [shape: f32[1,32], index: 8, kind: input, shape index: {}]
  %s9 = inlined_call_operand.vmem [shape: bf16[32,128], index: 9, kind: input, shape index: {}]
  %s10 = inlined_call_operand.vmem [shape: f32[1,128], index: 10, kind: input, shape index: {}]
  %s11 = inlined_call_operand.vmem [shape: f32[16,128], index: 11, kind: output, shape index: {0}]
  %s12 = inlined_call_operand.hbm [shape: f32[2,32], index: 12, kind: output, shape index: {1}]
  %13 = xla_tuple %s11, %s12
  %s14 = sld [smem:[#allocation0]]
  $region66: #{predictor_forward.4} parent=0
    _
  %s16 = ssub.s32 1, %s14
  %s17 = scalar_select 0, %s16, %s14
  $region1: #{predictor_forward.4} parent=0
    #allocation5 [shape = 'u8[1024]{0}', space=vmem, size = 0x400, scoped, tag = 'output window, operand 1, single buffered']
    #allocation6 [shape = 's32[1]{0}', space=sflag, size = 0x4, scoped, tag = 'scoped memory for predictor_forward.4']
    %18 = vsyncpa [#allocation6], 0
    // Predicated region
    $region2: #{predictor_forward.4} parent=1 // pred_check
      _
    $region3: #{predictor_forward.4} parent=1 // pred_check_branch
      %20 = sbr.rel (0) target = $region5
    $region4: #{predictor_forward.4} parent=1 // pred_region
      _
    $region5: #{predictor_forward.4} parent=1 // pred_fallthru
      _
    // Predicated region
    $region6: #{predictor_forward.4} parent=1 // pred_check
      _
    $region7: #{predictor_forward.4} parent=1 // pred_check_branch
      %22 = sbr.rel (0) target = $region9
    $region8: #{predictor_forward.4} parent=1 // pred_region
      _
    $region9: #{predictor_forward.4} parent=1 // pred_fallthru
      _
    // Predicated region
    $region10: #{predictor_forward.4} parent=1 // pred_check
      _
    $region11: #{predictor_forward.4} parent=1 // pred_check_branch
      %24 = sbr.rel (0) target = $region13
    $region12: #{predictor_forward.4} parent=1 // pred_region
      _
    $region13: #{predictor_forward.4} parent=1 // pred_fallthru
      _
    // Predicated region
    $region14: #{predictor_forward.4} parent=1 // pred_check
      _
    $region15: #{predictor_forward.4} parent=1 // pred_check_branch
      %26 = sbr.rel (0) target = $region17
    $region16: #{predictor_forward.4} parent=1 // pred_region
      _
    $region17: #{predictor_forward.4} parent=1 // pred_fallthru
      _
    // Predicated region
    $region18: #{predictor_forward.4} parent=1 // pred_check
      _
    $region19: #{predictor_forward.4} parent=1 // pred_check_branch
      %28 = sbr.rel (0) target = $region21
    $region20: #{predictor_forward.4} parent=1 // pred_region
      _
    $region21: #{predictor_forward.4} parent=1 // pred_fallthru
      _
    // Predicated region
    $region22: #{predictor_forward.4} parent=1 // pred_check
      _
    $region23: #{predictor_forward.4} parent=1 // pred_check_branch
      %30 = sbr.rel (0) target = $region25
    $region24: #{predictor_forward.4} parent=1 // pred_region
      _
    $region25: #{predictor_forward.4} parent=1 // pred_fallthru
      _
    // Predicated region
    $region26: #{predictor_forward.4} parent=1 // pred_check
      _
    $region27: #{predictor_forward.4} parent=1 // pred_check_branch
      %32 = sbr.rel (0) target = $region29
    $region28: #{predictor_forward.4} parent=1 // pred_region
      _
    $region29: #{predictor_forward.4} parent=1 // pred_fallthru
      _
    // Predicated region
    $region30: #{predictor_forward.4} parent=1 // pred_check
      _
    $region31: #{predictor_forward.4} parent=1 // pred_check_branch
      %34 = sbr.rel (0) target = $region33
    $region32: #{predictor_forward.4} parent=1 // pred_region
      _
    $region33: #{predictor_forward.4} parent=1 // pred_fallthru
      _
    // Predicated region
    $region34: #{predictor_forward.4} parent=1 // pred_check
      _
    $region35: #{predictor_forward.4} parent=1 // pred_check_branch
      %36 = sbr.rel (0) target = $region37
    $region36: #{predictor_forward.4} parent=1 // pred_region
      _
    $region37: #{predictor_forward.4} parent=1 // pred_fallthru
      _
    // Predicated region
    $region38: #{predictor_forward.4} parent=1 // pred_check
      _
    $region39: #{predictor_forward.4} parent=1 // pred_check_branch
      %38 = sbr.rel (0) target = $region41
    $region40: #{predictor_forward.4} parent=1 // pred_region
      _
    $region41: #{predictor_forward.4} parent=1 // pred_fallthru
      _
    // Predicated region
    $region42: #{predictor_forward.4} parent=1 // pred_check
      _
    $region43: #{predictor_forward.4} parent=1 // pred_check_branch
      %40 = sbr.rel (0) target = $region45
    $region44: #{predictor_forward.4} parent=1 // pred_region
      _
    $region45: #{predictor_forward.4} parent=1 // pred_fallthru
      _
    %p42 = scmp.eq.s32.totalorder 0, 0
    // Predicated region
    $region46: #{predictor_forward.4} parent=1 // pred_check
      %p43 = pneg %p42
    $region47: #{predictor_forward.4} parent=1 // pred_check_branch
      %45 = sbr.rel (%p43) target = $region49
    $region48: #{predictor_forward.4} parent=1 // pred_region
      %v46 = vld [vmem:[%s2] sm:$0x3]
      %vm47 = vcmask 254976
      %48 = vst.msk [vmem:[#allocation2] sm:$0x3] %vm47, %v46
    $region49: #{predictor_forward.4} parent=1 // pred_fallthru
      _
    %v49 = vld [vmem:[%s0] sm:$0xf]
    %v50 = vld [vmem:[%s0 + $0x4] sm:$0xf]
    %v51 = vld [vmem:[%s3] sm:$0x3]
    %v52 = vld [vmem:[%s4] sm:$0x1]
    %v54 = vlaneseq
    %v55 = vshrl.u32 %v54, 7
    %v56 = vsub.s32 0, %v55
    %v57 = vrot.slane %v52, %v56
    %v61 = vunpack.c.l.b16 %v49
    %v62 = vunpack.c.l.b16 %v50
    %v63 = vpack.c.b16 %v62, %v61
    %vm64 = vcmask 31744
    %v66 = vsel %vm64, %v63, 0
    %vm68 = vcmask 1041408
    %v70 = vsel %vm68, %v51, 0
    %72 = vmatprep.subr.bf16.mxu0 0
    %73 = vmatpush1.bf16.msra.mxu0 0
    %74 = vmatprep.subr.bf16.mxu0 0
    %75 = vmatpush1.bf16.msra.mxu0 0
    %76 = vmatprep.subr.bf16.mxu0 0
    %77 = vmatpush1.bf16.msra.mxu0 0
    %78 = vmatprep.subr.bf16.mxu0 0
    %79 = vmatpush1.bf16.msra.mxu0 0
    %80 = vmatprep.subr.bf16.mxu0 0
    %81 = vmatpush1.bf16.msra.mxu0 0
    %82 = vmatprep.subr.bf16.mxu0 0
    %83 = vmatpush1.bf16.msra.mxu0 0
    %84 = vmatprep.subr.bf16.mxu0 0
    %85 = vmatpush1.bf16.msra.mxu0 0
    %86 = vmatprep.subr.bf16.mxu0 0
    %87 = vmatpush1.bf16.msra.mxu0 %v70
    %88 = vmatprep.subr.bf16.mxu0 0
    %89 = vmatpush2.bf16.msra.mxu0 0
    %90 = vmatprep.subr.bf16.mxu0 0
    %91 = vmatpush2.bf16.msra.mxu0 0
    %92 = vmatprep.subr.bf16.mxu0 0
    %93 = vmatpush2.bf16.msra.mxu0 0
    %94 = vmatprep.subr.bf16.mxu0 0
    %95 = vmatpush2.bf16.msra.mxu0 0
    %96 = vmatprep.subr.bf16.mxu0 0
    %97 = vmatpush2.bf16.msra.mxu0 0
    %98 = vmatprep.subr.bf16.mxu0 0
    %99 = vmatpush2.bf16.msra.mxu0 0
    %100 = vmatprep.subr.bf16.mxu0 0
    %101 = vmatpush2.bf16.msra.mxu0 0
    %102 = vmatprep.subr.bf16.mxu0 0
    %103 = vmatpush2.bf16.msra.mxu0 0
    %104 = vmatprep.mubr.bf16.mxu0 0
    %105 = vmatmul.mubr.bf16.gmra.mxu0 %v66
    %v106 = vpop.f32.mrf.mxu0
    %v107 = vadd.f32 %v57, %v106
    %v108 = vpop.f32.mrf.mxu0
    %v109 = vpop.f32.mrf.mxu0
    %v110 = vadd.f32 %v57, %v109
    %v111 = vpop.f32.mrf.mxu0
    %112 = vdwg.mxu0
    %v113 = vld [vmem:[%s1] sm:$0xff]
    %v114 = vld [vmem:[%s1 + $0x8] sm:$0xff]
    %v115 = vadd.f32 %v107, %v113
    %v116 = vadd.f32 %v110, %v114
    %v117 = vpack.c.bf16 %v116, %v115
    %v118 = vld [vmem:[%s5] sm:$0xf]
    %v119 = vld [vmem:[%s5 + $0x4] sm:$0xf]
    %v120 = vld [vmem:[%s5 + $0x8] sm:$0xf]
    %v121 = vld [vmem:[%s5 + $0xc] sm:$0xf]
    %v122 = vld [vmem:[%s6] sm:$0x1]
    %v124 = vlaneseq
    %v125 = vshrl.u32 %v124, 7
    %v126 = vsub.s32 0, %v125
    %v127 = vrot.slane %v122, %v126
    %v133 = vunpack.c.l.b16 %v118
    %v134 = vunpack.c.l.b16 %v119
    %v135 = vunpack.c.l.b16 %v120
    %v136 = vunpack.c.l.b16 %v121
    %v137 = vpack.c.b16 %v134, %v133
    %v138 = vpack.c.b16 %v136, %v135
    %vm141 = vcmask 261120
    %v143 = vsel %vm141, %v117, 0
    %145 = vmatprep.subr.bf16.mxu0 0
    %146 = vmatpush1.bf16.msra.mxu0 0
    %147 = vmatprep.subr.bf16.mxu0 0
    %148 = vmatpush1.bf16.msra.mxu0 0
    %149 = vmatprep.subr.bf16.mxu0 0
    %150 = vmatpush1.bf16.msra.mxu0 0
    %151 = vmatprep.subr.bf16.mxu0 0
    %152 = vmatpush1.bf16.msra.mxu0 0
    %153 = vmatprep.subr.bf16.mxu0 0
    %154 = vmatpush1.bf16.msra.mxu0 0
    %155 = vmatprep.subr.bf16.mxu0 0
    %156 = vmatpush1.bf16.msra.mxu0 0
    %157 = vmatprep.subr.bf16.mxu0 0
    %158 = vmatpush1.bf16.msra.mxu0 %v138
    %159 = vmatprep.subr.bf16.mxu0 0
    %160 = vmatpush1.bf16.msra.mxu0 %v137
    %161 = vmatprep.subr.bf16.mxu0 0
    %162 = vmatpush2.bf16.msra.mxu0 0
    %163 = vmatprep.subr.bf16.mxu0 0
    %164 = vmatpush2.bf16.msra.mxu0 0
    %165 = vmatprep.subr.bf16.mxu0 0
    %166 = vmatpush2.bf16.msra.mxu0 0
    %167 = vmatprep.subr.bf16.mxu0 0
    %168 = vmatpush2.bf16.msra.mxu0 0
    %169 = vmatprep.subr.bf16.mxu0 0
    %170 = vmatpush2.bf16.msra.mxu0 0
    %171 = vmatprep.subr.bf16.mxu0 0
    %172 = vmatpush2.bf16.msra.mxu0 0
    %173 = vmatprep.subr.bf16.mxu0 0
    %174 = vmatpush2.bf16.msra.mxu0 0
    %175 = vmatprep.subr.bf16.mxu0 0
    %176 = vmatpush2.bf16.msra.mxu0 0
    %177 = vmatprep.mubr.bf16.mxu0 0
    %178 = vmatmul.mubr.bf16.gmra.mxu0 %v143
    %v179 = vpop.f32.mrf.mxu0
    %v180 = vadd.f32 %v127, %v179
    %v181 = vpop.f32.mrf.mxu0
    %v182 = vpop.f32.mrf.mxu0
    %v183 = vadd.f32 %v127, %v182
    %v184 = vpop.f32.mrf.mxu0
    %185 = vdwg.mxu0
    %vm186 = vcmask 785408
    %187 = vst.msk [vmem:[#allocation3] sm:$0xff] %vm186, %v180
    %188 = vst.msk [vmem:[#allocation3 + $0x8] sm:$0xff] %vm186, %v183
    %v189 = vld [vmem:[%s7] sm:$0xff]
    %v190 = vld [vmem:[%s7 + $0x8] sm:$0xff]
    %v191 = vld [vmem:[%s7 + $0x10] sm:$0xff]
    %v192 = vld [vmem:[%s7 + $0x18] sm:$0xff]
    %v193 = vld [vmem:[%s8] sm:$0x1]
    %v195 = vlaneseq
    %v196 = vshrl.u32 %v195, 7
    %v197 = vsub.s32 0, %v196
    %v198 = vrot.slane %v193, %v197
    %v199 = vld [vmem:[#allocation2] sm:$0x3]
    %v200 = vld [vmem:[#allocation3] sm:$0x3]
    %v202 = vsel %vm141, %v199, 0
    %204 = vmatprep.subr.mxu0 0.0
    %205 = vmatpush1.msra.mxu0 0.0
    %206 = vmatprep.subr.mxu0 0.0
    %207 = vmatpush1.msra.mxu0 0.0
    %208 = vmatprep.subr.mxu0 0.0
    %209 = vmatpush1.msra.mxu0 0.0
    %210 = vmatprep.subr.mxu0 0.0
    %211 = vmatpush1.msra.mxu0 0.0
    %212 = vmatprep.subr.mxu0 0.0
    %213 = vmatpush1.msra.mxu0 0.0
    %214 = vmatprep.subr.mxu0 0.0
    %215 = vmatpush1.msra.mxu0 0.0
    %216 = vmatprep.subr.mxu0 0.0
    %217 = vmatpush1.msra.mxu0 0.0
    %218 = vmatprep.subr.mxu0 0.0
    %219 = vmatpush1.msra.mxu0 0.0
    %220 = vmatprep.subr.mxu0 0.0
    %221 = vmatpush1.msra.mxu0 0.0
    %222 = vmatprep.subr.mxu0 0.0
    %223 = vmatpush1.msra.mxu0 0.0
    %224 = vmatprep.subr.mxu0 0.0
    %225 = vmatpush1.msra.mxu0 0.0
    %226 = vmatprep.subr.mxu0 0.0
    %227 = vmatpush1.msra.mxu0 0.0
    %228 = vmatprep.subr.mxu0 0.0
    %229 = vmatpush1.msra.mxu0 %v192
    %230 = vmatprep.subr.mxu0 0.0
    %231 = vmatpush1.msra.mxu0 %v191
    %232 = vmatprep.subr.mxu0 0.0
    %233 = vmatpush1.msra.mxu0 %v190
    %234 = vmatprep.subr.mxu0 0.0
    %235 = vmatpush1.msra.mxu0 %v189
    %236 = vmatprep.subr.mxu0 0.0
    %237 = vmatpush2.msra.mxu0 0.0
    %238 = vmatprep.subr.mxu0 0.0
    %239 = vmatpush2.msra.mxu0 0.0
    %240 = vmatprep.subr.mxu0 0.0
    %241 = vmatpush2.msra.mxu0 0.0
    %242 = vmatprep.subr.mxu0 0.0
    %243 = vmatpush2.msra.mxu0 0.0
    %244 = vmatprep.subr.mxu0 0.0
    %245 = vmatpush2.msra.mxu0 0.0
    %246 = vmatprep.subr.mxu0 0.0
    %247 = vmatpush2.msra.mxu0 0.0
    %248 = vmatprep.subr.mxu0 0.0
    %249 = vmatpush2.msra.mxu0 0.0
    %250 = vmatprep.subr.mxu0 0.0
    %251 = vmatpush2.msra.mxu0 0.0
    %252 = vmatprep.subr.mxu0 0.0
    %253 = vmatpush2.msra.mxu0 0.0
    %254 = vmatprep.subr.mxu0 0.0
    %255 = vmatpush2.msra.mxu0 0.0
    %256 = vmatprep.subr.mxu0 0.0
    %257 = vmatpush2.msra.mxu0 0.0
    %258 = vmatprep.subr.mxu0 0.0
    %259 = vmatpush2.msra.mxu0 0.0
    %260 = vmatprep.subr.mxu0 0.0
    %261 = vmatpush2.msra.mxu0 0.0
    %262 = vmatprep.subr.mxu0 0.0
    %263 = vmatpush2.msra.mxu0 0.0
    %264 = vmatprep.subr.mxu0 0.0
    %265 = vmatpush2.msra.mxu0 0.0
    %266 = vmatprep.subr.mxu0 0.0
    %267 = vmatpush2.msra.mxu0 0.0
    %268 = vmatprep.mubr.f32.mxu0 0.0
    %269 = vmatmul.mubr.f32.gmra.mxu0 %v202
    %v270 = vpop.f32.mrf.mxu0
    %v271 = vadd.f32 0.0, %v270
    %v272 = vpop.f32.mrf.mxu0
    %273 = vdwg.mxu0
    %v274 = vadd.f32 %v200, %v271
    %v275 = vxor.u32 %v274, 2147483648
    %v276 = vmul.f32 %v275, 1.442695
    %v277 = vpow.pop %v276
    %v278 = vadd.f32 %v277, 1.0
    %v279 = vrcp.pop %v278
    %v280 = vmul.f32 1.0, %v279
    %281 = vrot.lane.b32.xlu0 %v198, 64
    %v282 = vpop.permute.xlu0 %281
    %v284 = vadd.f32 %v271, %v282
    %286 = vrot.lane.b32.xlu0 %v284, 64
    %v287 = vpop.permute.xlu0 %286
    %v289 = vmul.f32 %v280, %v287
    %291 = vrot.lane.b32.xlu0 %v289, 64
    %v292 = vpop.permute.xlu0 %291
    %v294 = vadd.f32 %v200, %v292
    %v295 = vtanh.pop %v294
    %v296 = vsub.f32 1.0, %v280
    %298 = vrot.lane.b32.xlu0 %v295, 96
    %v299 = vpop.permute.xlu0 %298
    %v301 = vmul.f32 %v296, %v299
    %302 = vrot.lane.b32.xlu0 %v199, 32
    %v303 = vpop.permute.xlu0 %302
    %v305 = vmul.f32 %v280, %v303
    %v306 = vadd.f32 %v301, %v305
    %308 = vrot.lane.b32.xlu0 %v306, 96
    %v309 = vpop.permute.xlu0 %308
    %vm311 = vcmask 254976
    %312 = vst.msk [vmem:[#allocation4] sm:$0x3] %vm311, %v309
    %v313 = vld [vmem:[#allocation3 + $0x2] sm:$0x3]
    %v314 = vsel %vm141, %v309, 0
    %316 = vmatprep.subr.mxu0 0.0
    %317 = vmatpush1.msra.mxu0 0.0
    %318 = vmatprep.subr.mxu0 0.0
    %319 = vmatpush1.msra.mxu0 0.0
    %320 = vmatprep.subr.mxu0 0.0
    %321 = vmatpush1.msra.mxu0 0.0
    %322 = vmatprep.subr.mxu0 0.0
    %323 = vmatpush1.msra.mxu0 0.0
    %324 = vmatprep.subr.mxu0 0.0
    %325 = vmatpush1.msra.mxu0 0.0
    %326 = vmatprep.subr.mxu0 0.0
    %327 = vmatpush1.msra.mxu0 0.0
    %328 = vmatprep.subr.mxu0 0.0
    %329 = vmatpush1.msra.mxu0 0.0
    %330 = vmatprep.subr.mxu0 0.0
    %331 = vmatpush1.msra.mxu0 0.0
    %332 = vmatprep.subr.mxu0 0.0
    %333 = vmatpush1.msra.mxu0 0.0
    %334 = vmatprep.subr.mxu0 0.0
    %335 = vmatpush1.msra.mxu0 0.0
    %336 = vmatprep.subr.mxu0 0.0
    %337 = vmatpush1.msra.mxu0 0.0
    %338 = vmatprep.subr.mxu0 0.0
    %339 = vmatpush1.msra.mxu0 0.0
    %340 = vmatprep.subr.mxu0 0.0
    %341 = vmatpush1.msra.mxu0 %v192
    %342 = vmatprep.subr.mxu0 0.0
    %343 = vmatpush1.msra.mxu0 %v191
    %344 = vmatprep.subr.mxu0 0.0
    %345 = vmatpush1.msra.mxu0 %v190
    %346 = vmatprep.subr.mxu0 0.0
    %347 = vmatpush1.msra.mxu0 %v189
    %348 = vmatprep.subr.mxu0 0.0
    %349 = vmatpush2.msra.mxu0 0.0
    %350 = vmatprep.subr.mxu0 0.0
    %351 = vmatpush2.msra.mxu0 0.0
    %352 = vmatprep.subr.mxu0 0.0
    %353 = vmatpush2.msra.mxu0 0.0
    %354 = vmatprep.subr.mxu0 0.0
    %355 = vmatpush2.msra.mxu0 0.0
    %356 = vmatprep.subr.mxu0 0.0
    %357 = vmatpush2.msra.mxu0 0.0
    %358 = vmatprep.subr.mxu0 0.0
    %359 = vmatpush2.msra.mxu0 0.0
    %360 = vmatprep.subr.mxu0 0.0
    %361 = vmatpush2.msra.mxu0 0.0
    %362 = vmatprep.subr.mxu0 0.0
    %363 = vmatpush2.msra.mxu0 0.0
    %364 = vmatprep.subr.mxu0 0.0
    %365 = vmatpush2.msra.mxu0 0.0
    %366 = vmatprep.subr.mxu0 0.0
    %367 = vmatpush2.msra.mxu0 0.0
    %368 = vmatprep.subr.mxu0 0.0
    %369 = vmatpush2.msra.mxu0 0.0
    %370 = vmatprep.subr.mxu0 0.0
    %371 = vmatpush2.msra.mxu0 0.0
    %372 = vmatprep.subr.mxu0 0.0
    %373 = vmatpush2.msra.mxu0 0.0
    %374 = vmatprep.subr.mxu0 0.0
    %375 = vmatpush2.msra.mxu0 0.0
    %376 = vmatprep.subr.mxu0 0.0
    %377 = vmatpush2.msra.mxu0 0.0
    %378 = vmatprep.subr.mxu0 0.0
    %379 = vmatpush2.msra.mxu0 0.0
    %380 = vmatprep.mubr.f32.mxu0 0.0
    %381 = vmatmul.mubr.f32.gmra.mxu0 %v314
    %v382 = vpop.f32.mrf.mxu0
    %v383 = vadd.f32 0.0, %v382
    %v384 = vpop.f32.mrf.mxu0
    %385 = vdwg.mxu0
    %v386 = vadd.f32 %v313, %v383
    %v387 = vxor.u32 %v386, 2147483648
    %v388 = vmul.f32 %v387, 1.442695
    %v389 = vpow.pop %v388
    %v390 = vadd.f32 %v389, 1.0
    %v391 = vrcp.pop %v390
    %v392 = vmul.f32 1.0, %v391
    %v393 = vadd.f32 %v383, %v282
    %395 = vrot.lane.b32.xlu0 %v393, 64
    %v396 = vpop.permute.xlu0 %395
    %v398 = vmul.f32 %v392, %v396
    %400 = vrot.lane.b32.xlu0 %v398, 64
    %v401 = vpop.permute.xlu0 %400
    %v403 = vadd.f32 %v313, %v401
    %v404 = vtanh.pop %v403
    %v405 = vsub.f32 1.0, %v392
    %407 = vrot.lane.b32.xlu0 %v404, 96
    %v408 = vpop.permute.xlu0 %407
    %v410 = vmul.f32 %v405, %v408
    %v411 = vmul.f32 %v392, %v306
    %v412 = vadd.f32 %v410, %v411
    %414 = vrot.lane.b32.xlu0 %v412, 96
    %v415 = vpop.permute.xlu0 %414
    %417 = vst.msk [vmem:[#allocation4 + $0x2] sm:$0x3] %vm311, %v415
    %v418 = vld [vmem:[#allocation3 + $0x4] sm:$0x3]
    %v419 = vsel %vm141, %v415, 0
    %421 = vmatprep.subr.mxu0 0.0
    %422 = vmatpush1.msra.mxu0 0.0
    %423 = vmatprep.subr.mxu0 0.0
    %424 = vmatpush1.msra.mxu0 0.0
    %425 = vmatprep.subr.mxu0 0.0
    %426 = vmatpush1.msra.mxu0 0.0
    %427 = vmatprep.subr.mxu0 0.0
    %428 = vmatpush1.msra.mxu0 0.0
    %429 = vmatprep.subr.mxu0 0.0
    %430 = vmatpush1.msra.mxu0 0.0
    %431 = vmatprep.subr.mxu0 0.0
    %432 = vmatpush1.msra.mxu0 0.0
    %433 = vmatprep.subr.mxu0 0.0
    %434 = vmatpush1.msra.mxu0 0.0
    %435 = vmatprep.subr.mxu0 0.0
    %436 = vmatpush1.msra.mxu0 0.0
    %437 = vmatprep.subr.mxu0 0.0
    %438 = vmatpush1.msra.mxu0 0.0
    %439 = vmatprep.subr.mxu0 0.0
    %440 = vmatpush1.msra.mxu0 0.0
    %441 = vmatprep.subr.mxu0 0.0
    %442 = vmatpush1.msra.mxu0 0.0
    %443 = vmatprep.subr.mxu0 0.0
    %444 = vmatpush1.msra.mxu0 0.0
    %445 = vmatprep.subr.mxu0 0.0
    %446 = vmatpush1.msra.mxu0 %v192
    %447 = vmatprep.subr.mxu0 0.0
    %448 = vmatpush1.msra.mxu0 %v191
    %449 = vmatprep.subr.mxu0 0.0
    %450 = vmatpush1.msra.mxu0 %v190
    %451 = vmatprep.subr.mxu0 0.0
    %452 = vmatpush1.msra.mxu0 %v189
    %453 = vmatprep.subr.mxu0 0.0
    %454 = vmatpush2.msra.mxu0 0.0
    %455 = vmatprep.subr.mxu0 0.0
    %456 = vmatpush2.msra.mxu0 0.0
    %457 = vmatprep.subr.mxu0 0.0
    %458 = vmatpush2.msra.mxu0 0.0
    %459 = vmatprep.subr.mxu0 0.0
    %460 = vmatpush2.msra.mxu0 0.0
    %461 = vmatprep.subr.mxu0 0.0
    %462 = vmatpush2.msra.mxu0 0.0
    %463 = vmatprep.subr.mxu0 0.0
    %464 = vmatpush2.msra.mxu0 0.0
    %465 = vmatprep.subr.mxu0 0.0
    %466 = vmatpush2.msra.mxu0 0.0
    %467 = vmatprep.subr.mxu0 0.0
    %468 = vmatpush2.msra.mxu0 0.0
    %469 = vmatprep.subr.mxu0 0.0
    %470 = vmatpush2.msra.mxu0 0.0
    %471 = vmatprep.subr.mxu0 0.0
    %472 = vmatpush2.msra.mxu0 0.0
    %473 = vmatprep.subr.mxu0 0.0
    %474 = vmatpush2.msra.mxu0 0.0
    %475 = vmatprep.subr.mxu0 0.0
    %476 = vmatpush2.msra.mxu0 0.0
    %477 = vmatprep.subr.mxu0 0.0
    %478 = vmatpush2.msra.mxu0 0.0
    %479 = vmatprep.subr.mxu0 0.0
    %480 = vmatpush2.msra.mxu0 0.0
    %481 = vmatprep.subr.mxu0 0.0
    %482 = vmatpush2.msra.mxu0 0.0
    %483 = vmatprep.subr.mxu0 0.0
    %484 = vmatpush2.msra.mxu0 0.0
    %485 = vmatprep.mubr.f32.mxu0 0.0
    %486 = vmatmul.mubr.f32.gmra.mxu0 %v419
    %v487 = vpop.f32.mrf.mxu0
    %v488 = vadd.f32 0.0, %v487
    %v489 = vpop.f32.mrf.mxu0
    %490 = vdwg.mxu0
    %v491 = vadd.f32 %v418, %v488
    %v492 = vxor.u32 %v491, 2147483648
    %v493 = vmul.f32 %v492, 1.442695
    %v494 = vpow.pop %v493
    %v495 = vadd.f32 %v494, 1.0
    %v496 = vrcp.pop %v495
    %v497 = vmul.f32 1.0, %v496
    %v498 = vadd.f32 %v488, %v282
    %500 = vrot.lane.b32.xlu0 %v498, 64
    %v501 = vpop.permute.xlu0 %500
    %v503 = vmul.f32 %v497, %v501
    %505 = vrot.lane.b32.xlu0 %v503, 64
    %v506 = vpop.permute.xlu0 %505
    %v508 = vadd.f32 %v418, %v506
    %v509 = vtanh.pop %v508
    %v510 = vsub.f32 1.0, %v497
    %512 = vrot.lane.b32.xlu0 %v509, 96
    %v513 = vpop.permute.xlu0 %512
    %v515 = vmul.f32 %v510, %v513
    %v516 = vmul.f32 %v497, %v412
    %v517 = vadd.f32 %v515, %v516
    %519 = vrot.lane.b32.xlu0 %v517, 96
    %v520 = vpop.permute.xlu0 %519
    %522 = vst.msk [vmem:[#allocation4 + $0x4] sm:$0x3] %vm311, %v520
    %v523 = vld [vmem:[#allocation3 + $0x6] sm:$0x3]
    %v524 = vsel %vm141, %v520, 0
    %526 = vmatprep.subr.mxu0 0.0
    %527 = vmatpush1.msra.mxu0 0.0
    %528 = vmatprep.subr.mxu0 0.0
    %529 = vmatpush1.msra.mxu0 0.0
    %530 = vmatprep.subr.mxu0 0.0
    %531 = vmatpush1.msra.mxu0 0.0
    %532 = vmatprep.subr.mxu0 0.0
    %533 = vmatpush1.msra.mxu0 0.0
    %534 = vmatprep.subr.mxu0 0.0
    %535 = vmatpush1.msra.mxu0 0.0
    %536 = vmatprep.subr.mxu0 0.0
    %537 = vmatpush1.msra.mxu0 0.0
    %538 = vmatprep.subr.mxu0 0.0
    %539 = vmatpush1.msra.mxu0 0.0
    %540 = vmatprep.subr.mxu0 0.0
    %541 = vmatpush1.msra.mxu0 0.0
    %542 = vmatprep.subr.mxu0 0.0
    %543 = vmatpush1.msra.mxu0 0.0
    %544 = vmatprep.subr.mxu0 0.0
    %545 = vmatpush1.msra.mxu0 0.0
    %546 = vmatprep.subr.mxu0 0.0
    %547 = vmatpush1.msra.mxu0 0.0
    %548 = vmatprep.subr.mxu0 0.0
    %549 = vmatpush1.msra.mxu0 0.0
    %550 = vmatprep.subr.mxu0 0.0
    %551 = vmatpush1.msra.mxu0 %v192
    %552 = vmatprep.subr.mxu0 0.0
    %553 = vmatpush1.msra.mxu0 %v191
    %554 = vmatprep.subr.mxu0 0.0
    %555 = vmatpush1.msra.mxu0 %v190
    %556 = vmatprep.subr.mxu0 0.0
    %557 = vmatpush1.msra.mxu0 %v189
    %558 = vmatprep.subr.mxu0 0.0
    %559 = vmatpush2.msra.mxu0 0.0
    %560 = vmatprep.subr.mxu0 0.0
    %561 = vmatpush2.msra.mxu0 0.0
    %562 = vmatprep.subr.mxu0 0.0
    %563 = vmatpush2.msra.mxu0 0.0
    %564 = vmatprep.subr.mxu0 0.0
    %565 = vmatpush2.msra.mxu0 0.0
    %566 = vmatprep.subr.mxu0 0.0
    %567 = vmatpush2.msra.mxu0 0.0
    %568 = vmatprep.subr.mxu0 0.0
    %569 = vmatpush2.msra.mxu0 0.0
    %570 = vmatprep.subr.mxu0 0.0
    %571 = vmatpush2.msra.mxu0 0.0
    %572 = vmatprep.subr.mxu0 0.0
    %573 = vmatpush2.msra.mxu0 0.0
    %574 = vmatprep.subr.mxu0 0.0
    %575 = vmatpush2.msra.mxu0 0.0
    %576 = vmatprep.subr.mxu0 0.0
    %577 = vmatpush2.msra.mxu0 0.0
    %578 = vmatprep.subr.mxu0 0.0
    %579 = vmatpush2.msra.mxu0 0.0
    %580 = vmatprep.subr.mxu0 0.0
    %581 = vmatpush2.msra.mxu0 0.0
    %582 = vmatprep.subr.mxu0 0.0
    %583 = vmatpush2.msra.mxu0 0.0
    %584 = vmatprep.subr.mxu0 0.0
    %585 = vmatpush2.msra.mxu0 0.0
    %586 = vmatprep.subr.mxu0 0.0
    %587 = vmatpush2.msra.mxu0 0.0
    %588 = vmatprep.subr.mxu0 0.0
    %589 = vmatpush2.msra.mxu0 0.0
    %590 = vmatprep.mubr.f32.mxu0 0.0
    %591 = vmatmul.mubr.f32.gmra.mxu0 %v524
    %v592 = vpop.f32.mrf.mxu0
    %v593 = vadd.f32 0.0, %v592
    %v594 = vpop.f32.mrf.mxu0
    %595 = vdwg.mxu0
    %v596 = vadd.f32 %v523, %v593
    %v597 = vxor.u32 %v596, 2147483648
    %v598 = vmul.f32 %v597, 1.442695
    %v599 = vpow.pop %v598
    %v600 = vadd.f32 %v599, 1.0
    %v601 = vrcp.pop %v600
    %v602 = vmul.f32 1.0, %v601
    %v603 = vadd.f32 %v593, %v282
    %605 = vrot.lane.b32.xlu0 %v603, 64
    %v606 = vpop.permute.xlu0 %605
    %v608 = vmul.f32 %v602, %v606
    %610 = vrot.lane.b32.xlu0 %v608, 64
    %v611 = vpop.permute.xlu0 %610
    %v613 = vadd.f32 %v523, %v611
    %v614 = vtanh.pop %v613
    %v615 = vsub.f32 1.0, %v602
    %617 = vrot.lane.b32.xlu0 %v614, 96
    %v618 = vpop.permute.xlu0 %617
    %v620 = vmul.f32 %v615, %v618
    %v621 = vmul.f32 %v602, %v517
    %v622 = vadd.f32 %v620, %v621
    %624 = vrot.lane.b32.xlu0 %v622, 96
    %v625 = vpop.permute.xlu0 %624
    %627 = vst.msk [vmem:[#allocation4 + $0x6] sm:$0x3] %vm311, %v625
    %v628 = vld [vmem:[#allocation3 + $0x8] sm:$0x3]
    %v629 = vsel %vm141, %v625, 0
    %631 = vmatprep.subr.mxu0 0.0
    %632 = vmatpush1.msra.mxu0 0.0
    %633 = vmatprep.subr.mxu0 0.0
    %634 = vmatpush1.msra.mxu0 0.0
    %635 = vmatprep.subr.mxu0 0.0
    %636 = vmatpush1.msra.mxu0 0.0
    %637 = vmatprep.subr.mxu0 0.0
    %638 = vmatpush1.msra.mxu0 0.0
    %639 = vmatprep.subr.mxu0 0.0
    %640 = vmatpush1.msra.mxu0 0.0
    %641 = vmatprep.subr.mxu0 0.0
    %642 = vmatpush1.msra.mxu0 0.0
    %643 = vmatprep.subr.mxu0 0.0
    %644 = vmatpush1.msra.mxu0 0.0
    %645 = vmatprep.subr.mxu0 0.0
    %646 = vmatpush1.msra.mxu0 0.0
    %647 = vmatprep.subr.mxu0 0.0
    %648 = vmatpush1.msra.mxu0 0.0
    %649 = vmatprep.subr.mxu0 0.0
    %650 = vmatpush1.msra.mxu0 0.0
    %651 = vmatprep.subr.mxu0 0.0
    %652 = vmatpush1.msra.mxu0 0.0
    %653 = vmatprep.subr.mxu0 0.0
    %654 = vmatpush1.msra.mxu0 0.0
    %655 = vmatprep.subr.mxu0 0.0
    %656 = vmatpush1.msra.mxu0 %v192
    %657 = vmatprep.subr.mxu0 0.0
    %658 = vmatpush1.msra.mxu0 %v191
    %659 = vmatprep.subr.mxu0 0.0
    %660 = vmatpush1.msra.mxu0 %v190
    %661 = vmatprep.subr.mxu0 0.0
    %662 = vmatpush1.msra.mxu0 %v189
    %663 = vmatprep.subr.mxu0 0.0
    %664 = vmatpush2.msra.mxu0 0.0
    %665 = vmatprep.subr.mxu0 0.0
    %666 = vmatpush2.msra.mxu0 0.0
    %667 = vmatprep.subr.mxu0 0.0
    %668 = vmatpush2.msra.mxu0 0.0
    %669 = vmatprep.subr.mxu0 0.0
    %670 = vmatpush2.msra.mxu0 0.0
    %671 = vmatprep.subr.mxu0 0.0
    %672 = vmatpush2.msra.mxu0 0.0
    %673 = vmatprep.subr.mxu0 0.0
    %674 = vmatpush2.msra.mxu0 0.0
    %675 = vmatprep.subr.mxu0 0.0
    %676 = vmatpush2.msra.mxu0 0.0
    %677 = vmatprep.subr.mxu0 0.0
    %678 = vmatpush2.msra.mxu0 0.0
    %679 = vmatprep.subr.mxu0 0.0
    %680 = vmatpush2.msra.mxu0 0.0
    %681 = vmatprep.subr.mxu0 0.0
    %682 = vmatpush2.msra.mxu0 0.0
    %683 = vmatprep.subr.mxu0 0.0
    %684 = vmatpush2.msra.mxu0 0.0
    %685 = vmatprep.subr.mxu0 0.0
    %686 = vmatpush2.msra.mxu0 0.0
    %687 = vmatprep.subr.mxu0 0.0
    %688 = vmatpush2.msra.mxu0 0.0
    %689 = vmatprep.subr.mxu0 0.0
    %690 = vmatpush2.msra.mxu0 0.0
    %691 = vmatprep.subr.mxu0 0.0
    %692 = vmatpush2.msra.mxu0 0.0
    %693 = vmatprep.subr.mxu0 0.0
    %694 = vmatpush2.msra.mxu0 0.0
    %695 = vmatprep.mubr.f32.mxu0 0.0
    %696 = vmatmul.mubr.f32.gmra.mxu0 %v629
    %v697 = vpop.f32.mrf.mxu0
    %v698 = vadd.f32 0.0, %v697
    %v699 = vpop.f32.mrf.mxu0
    %700 = vdwg.mxu0
    %v701 = vadd.f32 %v628, %v698
    %v702 = vxor.u32 %v701, 2147483648
    %v703 = vmul.f32 %v702, 1.442695
    %v704 = vpow.pop %v703
    %v705 = vadd.f32 %v704, 1.0
    %v706 = vrcp.pop %v705
    %v707 = vmul.f32 1.0, %v706
    %v708 = vadd.f32 %v698, %v282
    %710 = vrot.lane.b32.xlu0 %v708, 64
    %v711 = vpop.permute.xlu0 %710
    %v713 = vmul.f32 %v707, %v711
    %715 = vrot.lane.b32.xlu0 %v713, 64
    %v716 = vpop.permute.xlu0 %715
    %v718 = vadd.f32 %v628, %v716
    %v719 = vtanh.pop %v718
    %v720 = vsub.f32 1.0, %v707
    %722 = vrot.lane.b32.xlu0 %v719, 96
    %v723 = vpop.permute.xlu0 %722
    %v725 = vmul.f32 %v720, %v723
    %v726 = vmul.f32 %v707, %v622
    %v727 = vadd.f32 %v725, %v726
    %729 = vrot.lane.b32.xlu0 %v727, 96
    %v730 = vpop.permute.xlu0 %729
    %732 = vst.msk [vmem:[#allocation4 + $0x8] sm:$0x3] %vm311, %v730
    %v733 = vld [vmem:[#allocation3 + $0xa] sm:$0x3]
    %v734 = vsel %vm141, %v730, 0
    %736 = vmatprep.subr.mxu0 0.0
    %737 = vmatpush1.msra.mxu0 0.0
    %738 = vmatprep.subr.mxu0 0.0
    %739 = vmatpush1.msra.mxu0 0.0
    %740 = vmatprep.subr.mxu0 0.0
    %741 = vmatpush1.msra.mxu0 0.0
    %742 = vmatprep.subr.mxu0 0.0
    %743 = vmatpush1.msra.mxu0 0.0
    %744 = vmatprep.subr.mxu0 0.0
    %745 = vmatpush1.msra.mxu0 0.0
    %746 = vmatprep.subr.mxu0 0.0
    %747 = vmatpush1.msra.mxu0 0.0
    %748 = vmatprep.subr.mxu0 0.0
    %749 = vmatpush1.msra.mxu0 0.0
    %750 = vmatprep.subr.mxu0 0.0
    %751 = vmatpush1.msra.mxu0 0.0
    %752 = vmatprep.subr.mxu0 0.0
    %753 = vmatpush1.msra.mxu0 0.0
    %754 = vmatprep.subr.mxu0 0.0
    %755 = vmatpush1.msra.mxu0 0.0
    %756 = vmatprep.subr.mxu0 0.0
    %757 = vmatpush1.msra.mxu0 0.0
    %758 = vmatprep.subr.mxu0 0.0
    %759 = vmatpush1.msra.mxu0 0.0
    %760 = vmatprep.subr.mxu0 0.0
    %761 = vmatpush1.msra.mxu0 %v192
    %762 = vmatprep.subr.mxu0 0.0
    %763 = vmatpush1.msra.mxu0 %v191
    %764 = vmatprep.subr.mxu0 0.0
    %765 = vmatpush1.msra.mxu0 %v190
    %766 = vmatprep.subr.mxu0 0.0
    %767 = vmatpush1.msra.mxu0 %v189
    %768 = vmatprep.subr.mxu0 0.0
    %769 = vmatpush2.msra.mxu0 0.0
    %770 = vmatprep.subr.mxu0 0.0
    %771 = vmatpush2.msra.mxu0 0.0
    %772 = vmatprep.subr.mxu0 0.0
    %773 = vmatpush2.msra.mxu0 0.0
    %774 = vmatprep.subr.mxu0 0.0
    %775 = vmatpush2.msra.mxu0 0.0
    %776 = vmatprep.subr.mxu0 0.0
    %777 = vmatpush2.msra.mxu0 0.0
    %778 = vmatprep.subr.mxu0 0.0
    %779 = vmatpush2.msra.mxu0 0.0
    %780 = vmatprep.subr.mxu0 0.0
    %781 = vmatpush2.msra.mxu0 0.0
    %782 = vmatprep.subr.mxu0 0.0
    %783 = vmatpush2.msra.mxu0 0.0
    %784 = vmatprep.subr.mxu0 0.0
    %785 = vmatpush2.msra.mxu0 0.0
    %786 = vmatprep.subr.mxu0 0.0
    %787 = vmatpush2.msra.mxu0 0.0
    %788 = vmatprep.subr.mxu0 0.0
    %789 = vmatpush2.msra.mxu0 0.0
    %790 = vmatprep.subr.mxu0 0.0
    %791 = vmatpush2.msra.mxu0 0.0
    %792 = vmatprep.subr.mxu0 0.0
    %793 = vmatpush2.msra.mxu0 0.0
    %794 = vmatprep.subr.mxu0 0.0
    %795 = vmatpush2.msra.mxu0 0.0
    %796 = vmatprep.subr.mxu0 0.0
    %797 = vmatpush2.msra.mxu0 0.0
    %798 = vmatprep.subr.mxu0 0.0
    %799 = vmatpush2.msra.mxu0 0.0
    %800 = vmatprep.mubr.f32.mxu0 0.0
    %801 = vmatmul.mubr.f32.gmra.mxu0 %v734
    %v802 = vpop.f32.mrf.mxu0
    %v803 = vadd.f32 0.0, %v802
    %v804 = vpop.f32.mrf.mxu0
    %805 = vdwg.mxu0
    %v806 = vadd.f32 %v733, %v803
    %v807 = vxor.u32 %v806, 2147483648
    %v808 = vmul.f32 %v807, 1.442695
    %v809 = vpow.pop %v808
    %v810 = vadd.f32 %v809, 1.0
    %v811 = vrcp.pop %v810
    %v812 = vmul.f32 1.0, %v811
    %v813 = vadd.f32 %v803, %v282
    %815 = vrot.lane.b32.xlu0 %v813, 64
    %v816 = vpop.permute.xlu0 %815
    %v818 = vmul.f32 %v812, %v816
    %820 = vrot.lane.b32.xlu0 %v818, 64
    %v821 = vpop.permute.xlu0 %820
    %v823 = vadd.f32 %v733, %v821
    %v824 = vtanh.pop %v823
    %v825 = vsub.f32 1.0, %v812
    %827 = vrot.lane.b32.xlu0 %v824, 96
    %v828 = vpop.permute.xlu0 %827
    %v830 = vmul.f32 %v825, %v828
    %v831 = vmul.f32 %v812, %v727
    %v832 = vadd.f32 %v830, %v831
    %834 = vrot.lane.b32.xlu0 %v832, 96
    %v835 = vpop.permute.xlu0 %834
    %837 = vst.msk [vmem:[#allocation4 + $0xa] sm:$0x3] %vm311, %v835
    %v838 = vld [vmem:[#allocation3 + $0xc] sm:$0x3]
    %v839 = vsel %vm141, %v835, 0
    %841 = vmatprep.subr.mxu0 0.0
    %842 = vmatpush1.msra.mxu0 0.0
    %843 = vmatprep.subr.mxu0 0.0
    %844 = vmatpush1.msra.mxu0 0.0
    %845 = vmatprep.subr.mxu0 0.0
    %846 = vmatpush1.msra.mxu0 0.0
    %847 = vmatprep.subr.mxu0 0.0
    %848 = vmatpush1.msra.mxu0 0.0
    %849 = vmatprep.subr.mxu0 0.0
    %850 = vmatpush1.msra.mxu0 0.0
    %851 = vmatprep.subr.mxu0 0.0
    %852 = vmatpush1.msra.mxu0 0.0
    %853 = vmatprep.subr.mxu0 0.0
    %854 = vmatpush1.msra.mxu0 0.0
    %855 = vmatprep.subr.mxu0 0.0
    %856 = vmatpush1.msra.mxu0 0.0
    %857 = vmatprep.subr.mxu0 0.0
    %858 = vmatpush1.msra.mxu0 0.0
    %859 = vmatprep.subr.mxu0 0.0
    %860 = vmatpush1.msra.mxu0 0.0
    %861 = vmatprep.subr.mxu0 0.0
    %862 = vmatpush1.msra.mxu0 0.0
    %863 = vmatprep.subr.mxu0 0.0
    %864 = vmatpush1.msra.mxu0 0.0
    %865 = vmatprep.subr.mxu0 0.0
    %866 = vmatpush1.msra.mxu0 %v192
    %867 = vmatprep.subr.mxu0 0.0
    %868 = vmatpush1.msra.mxu0 %v191
    %869 = vmatprep.subr.mxu0 0.0
    %870 = vmatpush1.msra.mxu0 %v190
    %871 = vmatprep.subr.mxu0 0.0
    %872 = vmatpush1.msra.mxu0 %v189
    %873 = vmatprep.subr.mxu0 0.0
    %874 = vmatpush2.msra.mxu0 0.0
    %875 = vmatprep.subr.mxu0 0.0
    %876 = vmatpush2.msra.mxu0 0.0
    %877 = vmatprep.subr.mxu0 0.0
    %878 = vmatpush2.msra.mxu0 0.0
    %879 = vmatprep.subr.mxu0 0.0
    %880 = vmatpush2.msra.mxu0 0.0
    %881 = vmatprep.subr.mxu0 0.0
    %882 = vmatpush2.msra.mxu0 0.0
    %883 = vmatprep.subr.mxu0 0.0
    %884 = vmatpush2.msra.mxu0 0.0
    %885 = vmatprep.subr.mxu0 0.0
    %886 = vmatpush2.msra.mxu0 0.0
    %887 = vmatprep.subr.mxu0 0.0
    %888 = vmatpush2.msra.mxu0 0.0
    %889 = vmatprep.subr.mxu0 0.0
    %890 = vmatpush2.msra.mxu0 0.0
    %891 = vmatprep.subr.mxu0 0.0
    %892 = vmatpush2.msra.mxu0 0.0
    %893 = vmatprep.subr.mxu0 0.0
    %894 = vmatpush2.msra.mxu0 0.0
    %895 = vmatprep.subr.mxu0 0.0
    %896 = vmatpush2.msra.mxu0 0.0
    %897 = vmatprep.subr.mxu0 0.0
    %898 = vmatpush2.msra.mxu0 0.0
    %899 = vmatprep.subr.mxu0 0.0
    %900 = vmatpush2.msra.mxu0 0.0
    %901 = vmatprep.subr.mxu0 0.0
    %902 = vmatpush2.msra.mxu0 0.0
    %903 = vmatprep.subr.mxu0 0.0
    %904 = vmatpush2.msra.mxu0 0.0
    %905 = vmatprep.mubr.f32.mxu0 0.0
    %906 = vmatmul.mubr.f32.gmra.mxu0 %v839
    %v907 = vpop.f32.mrf.mxu0
    %v908 = vadd.f32 0.0, %v907
    %v909 = vpop.f32.mrf.mxu0
    %910 = vdwg.mxu0
    %v911 = vadd.f32 %v838, %v908
    %v912 = vxor.u32 %v911, 2147483648
    %v913 = vmul.f32 %v912, 1.442695
    %v914 = vpow.pop %v913
    %v915 = vadd.f32 %v914, 1.0
    %v916 = vrcp.pop %v915
    %v917 = vmul.f32 1.0, %v916
    %v918 = vadd.f32 %v908, %v282
    %920 = vrot.lane.b32.xlu0 %v918, 64
    %v921 = vpop.permute.xlu0 %920
    %v923 = vmul.f32 %v917, %v921
    %925 = vrot.lane.b32.xlu0 %v923, 64
    %v926 = vpop.permute.xlu0 %925
    %v928 = vadd.f32 %v838, %v926
    %v929 = vtanh.pop %v928
    %v930 = vsub.f32 1.0, %v917
    %932 = vrot.lane.b32.xlu0 %v929, 96
    %v933 = vpop.permute.xlu0 %932
    %v935 = vmul.f32 %v930, %v933
    %v936 = vmul.f32 %v917, %v832
    %v937 = vadd.f32 %v935, %v936
    %939 = vrot.lane.b32.xlu0 %v937, 96
    %v940 = vpop.permute.xlu0 %939
    %942 = vst.msk [vmem:[#allocation4 + $0xc] sm:$0x3] %vm311, %v940
    %v943 = vld [vmem:[#allocation3 + $0xe] sm:$0x3]
    %v944 = vsel %vm141, %v940, 0
    %946 = vmatprep.subr.mxu0 0.0
    %947 = vmatpush1.msra.mxu0 0.0
    %948 = vmatprep.subr.mxu0 0.0
    %949 = vmatpush1.msra.mxu0 0.0
    %950 = vmatprep.subr.mxu0 0.0
    %951 = vmatpush1.msra.mxu0 0.0
    %952 = vmatprep.subr.mxu0 0.0
    %953 = vmatpush1.msra.mxu0 0.0
    %954 = vmatprep.subr.mxu0 0.0
    %955 = vmatpush1.msra.mxu0 0.0
    %956 = vmatprep.subr.mxu0 0.0
    %957 = vmatpush1.msra.mxu0 0.0
    %958 = vmatprep.subr.mxu0 0.0
    %959 = vmatpush1.msra.mxu0 0.0
    %960 = vmatprep.subr.mxu0 0.0
    %961 = vmatpush1.msra.mxu0 0.0
    %962 = vmatprep.subr.mxu0 0.0
    %963 = vmatpush1.msra.mxu0 0.0
    %964 = vmatprep.subr.mxu0 0.0
    %965 = vmatpush1.msra.mxu0 0.0
    %966 = vmatprep.subr.mxu0 0.0
    %967 = vmatpush1.msra.mxu0 0.0
    %968 = vmatprep.subr.mxu0 0.0
    %969 = vmatpush1.msra.mxu0 0.0
    %970 = vmatprep.subr.mxu0 0.0
    %971 = vmatpush1.msra.mxu0 %v192
    %972 = vmatprep.subr.mxu0 0.0
    %973 = vmatpush1.msra.mxu0 %v191
    %974 = vmatprep.subr.mxu0 0.0
    %975 = vmatpush1.msra.mxu0 %v190
    %976 = vmatprep.subr.mxu0 0.0
    %977 = vmatpush1.msra.mxu0 %v189
    %978 = vmatprep.subr.mxu0 0.0
    %979 = vmatpush2.msra.mxu0 0.0
    %980 = vmatprep.subr.mxu0 0.0
    %981 = vmatpush2.msra.mxu0 0.0
    %982 = vmatprep.subr.mxu0 0.0
    %983 = vmatpush2.msra.mxu0 0.0
    %984 = vmatprep.subr.mxu0 0.0
    %985 = vmatpush2.msra.mxu0 0.0
    %986 = vmatprep.subr.mxu0 0.0
    %987 = vmatpush2.msra.mxu0 0.0
    %988 = vmatprep.subr.mxu0 0.0
    %989 = vmatpush2.msra.mxu0 0.0
    %990 = vmatprep.subr.mxu0 0.0
    %991 = vmatpush2.msra.mxu0 0.0
    %992 = vmatprep.subr.mxu0 0.0
    %993 = vmatpush2.msra.mxu0 0.0
    %994 = vmatprep.subr.mxu0 0.0
    %995 = vmatpush2.msra.mxu0 0.0
    %996 = vmatprep.subr.mxu0 0.0
    %997 = vmatpush2.msra.mxu0 0.0
    %998 = vmatprep.subr.mxu0 0.0
    %999 = vmatpush2.msra.mxu0 0.0
    %1000 = vmatprep.subr.mxu0 0.0
    %1001 = vmatpush2.msra.mxu0 0.0
    %1002 = vmatprep.subr.mxu0 0.0
    %1003 = vmatpush2.msra.mxu0 0.0
    %1004 = vmatprep.subr.mxu0 0.0
    %1005 = vmatpush2.msra.mxu0 0.0
    %1006 = vmatprep.subr.mxu0 0.0
    %1007 = vmatpush2.msra.mxu0 0.0
    %1008 = vmatprep.subr.mxu0 0.0
    %1009 = vmatpush2.msra.mxu0 0.0
    %1010 = vmatprep.mubr.f32.mxu0 0.0
    %1011 = vmatmul.mubr.f32.gmra.mxu0 %v944
    %v1012 = vpop.f32.mrf.mxu0
    %v1013 = vadd.f32 0.0, %v1012
    %v1014 = vpop.f32.mrf.mxu0
    %1015 = vdwg.mxu0
    %v1016 = vadd.f32 %v943, %v1013
    %v1017 = vxor.u32 %v1016, 2147483648
    %v1018 = vmul.f32 %v1017, 1.442695
    %v1019 = vpow.pop %v1018
    %v1020 = vadd.f32 %v1019, 1.0
    %v1021 = vrcp.pop %v1020
    %v1022 = vmul.f32 1.0, %v1021
    %v1023 = vadd.f32 %v1013, %v282
    %1025 = vrot.lane.b32.xlu0 %v1023, 64
    %v1026 = vpop.permute.xlu0 %1025
    %v1028 = vmul.f32 %v1022, %v1026
    %1030 = vrot.lane.b32.xlu0 %v1028, 64
    %v1031 = vpop.permute.xlu0 %1030
    %v1033 = vadd.f32 %v943, %v1031
    %v1034 = vtanh.pop %v1033
    %v1035 = vsub.f32 1.0, %v1022
    %1037 = vrot.lane.b32.xlu0 %v1034, 96
    %v1038 = vpop.permute.xlu0 %1037
    %v1040 = vmul.f32 %v1035, %v1038
    %v1041 = vmul.f32 %v1022, %v937
    %v1042 = vadd.f32 %v1040, %v1041
    %1044 = vrot.lane.b32.xlu0 %v1042, 96
    %v1045 = vpop.permute.xlu0 %1044
    %1047 = vst.msk [vmem:[#allocation4 + $0xe] sm:$0x3] %vm311, %v1045
    %1048 = vst.msk [vmem:[#allocation2] sm:$0x3] %vm311, %v1045
    %1049 = vst.msk [vmem:[#allocation5] sm:$0x3] %vm311, %v1045
    %v1050 = vld [vmem:[#allocation4] sm:$0xff]
    %v1051 = vld [vmem:[#allocation4 + $0x8] sm:$0xff]
    %v1052 = vpack.c.bf16 %v1051, %v1050
    %v1053 = vld [vmem:[%s9] sm:$0xf]
    %v1054 = vld [vmem:[%s9 + $0x4] sm:$0xf]
    %v1055 = vld [vmem:[%s9 + $0x8] sm:$0xf]
    %v1056 = vld [vmem:[%s9 + $0xc] sm:$0xf]
    %v1057 = vld [vmem:[%s10] sm:$0x1]
    %v1059 = vlaneseq
    %v1060 = vshrl.u32 %v1059, 7
    %v1061 = vsub.s32 0, %v1060
    %v1062 = vrot.slane %v1057, %v1061
    %v1068 = vunpack.c.l.b16 %v1053
    %v1069 = vunpack.c.l.b16 %v1054
    %v1070 = vunpack.c.l.b16 %v1055
    %v1071 = vunpack.c.l.b16 %v1056
    %v1072 = vpack.c.b16 %v1069, %v1068
    %v1073 = vpack.c.b16 %v1071, %v1070
    %v1077 = vsel %vm141, %v1052, 0
    %1079 = vmatprep.subr.bf16.mxu0 0
    %1080 = vmatpush1.bf16.msra.mxu0 0
    %1081 = vmatprep.subr.bf16.mxu0 0
    %1082 = vmatpush1.bf16.msra.mxu0 0
    %1083 = vmatprep.subr.bf16.mxu0 0
    %1084 = vmatpush1.bf16.msra.mxu0 0
    %1085 = vmatprep.subr.bf16.mxu0 0
    %1086 = vmatpush1.bf16.msra.mxu0 0
    %1087 = vmatprep.subr.bf16.mxu0 0
    %1088 = vmatpush1.bf16.msra.mxu0 0
    %1089 = vmatprep.subr.bf16.mxu0 0
    %1090 = vmatpush1.bf16.msra.mxu0 0
    %1091 = vmatprep.subr.bf16.mxu0 0
    %1092 = vmatpush1.bf16.msra.mxu0 %v1073
    %1093 = vmatprep.subr.bf16.mxu0 0
    %1094 = vmatpush1.bf16.msra.mxu0 %v1072
    %1095 = vmatprep.subr.bf16.mxu0 0
    %1096 = vmatpush2.bf16.msra.mxu0 0
    %1097 = vmatprep.subr.bf16.mxu0 0
    %1098 = vmatpush2.bf16.msra.mxu0 0
    %1099 = vmatprep.subr.bf16.mxu0 0
    %1100 = vmatpush2.bf16.msra.mxu0 0
    %1101 = vmatprep.subr.bf16.mxu0 0
    %1102 = vmatpush2.bf16.msra.mxu0 0
    %1103 = vmatprep.subr.bf16.mxu0 0
    %1104 = vmatpush2.bf16.msra.mxu0 0
    %1105 = vmatprep.subr.bf16.mxu0 0
    %1106 = vmatpush2.bf16.msra.mxu0 0
    %1107 = vmatprep.subr.bf16.mxu0 0
    %1108 = vmatpush2.bf16.msra.mxu0 0
    %1109 = vmatprep.subr.bf16.mxu0 0
    %1110 = vmatpush2.bf16.msra.mxu0 0
    %1111 = vmatprep.mubr.bf16.mxu0 0
    %1112 = vmatmul.mubr.bf16.gmra.mxu0 %v1077
    %v1113 = vpop.f32.mrf.mxu0
    %v1114 = vadd.f32 %v1062, %v1113
    %v1115 = vpop.f32.mrf.mxu0
    %v1116 = vpop.f32.mrf.mxu0
    %v1117 = vadd.f32 %v1062, %v1116
    %v1118 = vpop.f32.mrf.mxu0
    %1119 = vdwg.mxu0
    %1120 = vst [vmem:[%s11] sm:$0xff] %v1114
    %1121 = vst [vmem:[%s11 + $0x8] sm:$0xff] %v1117
    // Predicated region
    $region50: #{predictor_forward.4} parent=1 // pred_check
      _
    $region51: #{predictor_forward.4} parent=1 // pred_check_branch
      %1123 = sbr.rel (0) target = $region53
    $region52: #{predictor_forward.4} parent=1 // pred_region
      _
    $region53: #{predictor_forward.4} parent=1 // pred_fallthru
      _
    // Predicated region
    $region54: #{predictor_forward.4} parent=1 // pred_check
      _
    $region55: #{predictor_forward.4} parent=1 // pred_check_branch
      %1125 = sbr.rel (0) target = $region57
    $region56: #{predictor_forward.4} parent=1 // pred_region
      %s1127 = ssub.s32 32, 32
      %1128 = vsyncadd [#allocation6], %s1127
      %s1130 = sshll.u32 [#allocation5], 4
      %s1131 = int_to_ptr.vmem [resolvable:$true] %s1130
      %1133 = dma.vmem_to_hbm [thread:$0]  %s1131, 32, %s12, [#allocation6]
    $region57: #{predictor_forward.4} parent=1 // pred_fallthru
      _
    // Predicated region
    $region58: #{predictor_forward.4} parent=1 // pred_check
      _
    $region59: #{predictor_forward.4} parent=1 // pred_check_branch
      %1135 = sbr.rel (0) target = $region61
    $region60: #{predictor_forward.4} parent=1 // pred_region
      _
    $region61: #{predictor_forward.4} parent=1 // pred_fallthru
      _
    // Predicated region
    $region62: #{predictor_forward.4} parent=1 // pred_check
      _
    $region63: #{predictor_forward.4} parent=1 // pred_check_branch
      %1137 = sbr.rel (0) target = $region65
    $region64: #{predictor_forward.4} parent=1 // pred_region
      %1138 = dma.done [#allocation6], 32
    $region65: #{predictor_forward.4} parent=1 // pred_fallthru
      _
    %1139 = vsyncpa [#allocation6], 1

</llo_original>
